<compile_context>
chip_gen: v6e
topology: v6e:2x2x1
jax: 0.10.0
libtpu: 0.0.40
codegen_flags: <defaults>
</compile_context>

<pallas_src>
import math

import jax
import jax.numpy as jnp
from jax import lax
from jax.experimental import pallas as pl
from jax.experimental.pallas import tpu as pltpu

# ---------------- model hyper-parameters ------------------------------------
VOCAB = 50            # input_dim
VOCAB_PAD = 64        # padded vocab rows for the one-hot gather matmul
D_MODEL = 32          # model_dim
N_HEADS = 4
N_LAYERS = 2
D_FF = 2048           # nn.TransformerEncoderLayer default dim_feedforward
HEAD_DIM = D_MODEL // N_HEADS
FF_CHUNK = 512
N_FF_CHUNKS = D_FF // FF_CHUNK
LN_EPS = 1e-5
SQRT_D = math.sqrt(D_MODEL)
ATT_SCALE = 1.0 / math.sqrt(HEAD_DIM)

B = 2                 # batch
S = 8                 # seq_len
BS = B * S            # flattened (batch*seq) "M" dimension


# ---------------- fused Pallas kernel (grid = encoder layers) ----------------
def fused_kernel(ids_ref,                       # (BS, 1) i32
                 emb_ref, pe_ref,               # (VOCAB_PAD, D) f32, (BS, D) f32
                 bias_ref, pool_ref,            # (BS, BS) f32,  (B, BS) f32
                 wqkv_ref, bqkv_ref,            # (3, D, D) bf16, (3, 1, D) f32   [layer l]
                 wo_ref, bo_ref,                # (D, D) bf16,    (1, D) f32
                 w1_ref, b1_ref,                # (D, D_FF) bf16, (1, D_FF) f32
                 w2_ref, b2_ref,                # (D, D_FF) bf16 (lane-dense), (1, D) f32
                 g1_ref, be1_ref, g2_ref, be2_ref,   # (1, D) f32
                 fcw_ref, fcb_ref,              # (D, 1) f32, (1, 1) f32
                 o_ref,                         # (B, 1) f32
                 x_slab):                       # VMEM scratch (BS, D) f32, carried across layers
    l = pl.program_id(0)

    # ---- prologue (first grid step): embedding gather as one one-hot matmul,
    #      sqrt(d_model) scale, and the positional-encoding slab --------------
    @pl.when(l == 0)
    def _():
        iota = lax.broadcasted_iota(jnp.int32, (BS, VOCAB_PAD), 1)
        onehot = (iota == ids_ref[...]).astype(jnp.float32)            # (BS, VOCAB_PAD)
        x_slab[...] = (jnp.dot(onehot, emb_ref[...],
                               preferred_element_type=jnp.float32) * SQRT_D
                       + pe_ref[...])

    x = x_slab[...]                                                    # (BS, D) f32
    bias = bias_ref[...]                                               # block-diag 0 / -1e30
    xb = x.astype(jnp.bfloat16)

    # ---- self-attention: Q/K/V fused across heads (lane-dense (D,D) matmuls)
    q = jnp.dot(xb, wqkv_ref[0], preferred_element_type=jnp.float32) + bqkv_ref[0]
    k = jnp.dot(xb, wqkv_ref[1], preferred_element_type=jnp.float32) + bqkv_ref[1]
    v = jnp.dot(xb, wqkv_ref[2], preferred_element_type=jnp.float32) + bqkv_ref[2]

    # Per-head scores/context via per-head column masks (no lane sub-slicing,
    # numerically exact: masked columns contribute exact zeros).  Each head's
    # context lands directly in its final columns of `ctx`, so the output
    # projection is a single (BS,D)@(D,D) matmul.
    col = lax.broadcasted_iota(jnp.int32, (1, D_MODEL), 1)
    ctx = jnp.zeros((BS, D_MODEL), jnp.float32)
    for h in range(N_HEADS):
        m = jnp.where((col >= h * HEAD_DIM) & (col < (h + 1) * HEAD_DIM), 1.0, 0.0)
        s = lax.dot_general(q * m, k, (((1,), (1,)), ((), ())),
                            preferred_element_type=jnp.float32) * ATT_SCALE + bias
        s = s - jnp.max(s, axis=-1, keepdims=True)
        p = jnp.exp(s)
        p = p / jnp.sum(p, axis=-1, keepdims=True)                     # exact softmax
        ctx = ctx + jnp.dot(p, v * m, preferred_element_type=jnp.float32)

    attn = jnp.dot(ctx.astype(jnp.bfloat16), wo_ref[...],
                   preferred_element_type=jnp.float32) + bo_ref[...]

    # ---- residual + LayerNorm 1 (post-norm) ---------------------------------
    x1 = x + attn
    mu1 = jnp.mean(x1, axis=-1, keepdims=True)
    var1 = jnp.mean((x1 - mu1) ** 2, axis=-1, keepdims=True)
    x1n = (x1 - mu1) * lax.rsqrt(var1 + LN_EPS) * g1_ref[...] + be1_ref[...]

    # ---- feed-forward, chunked over D_FF (caps the live f32 intermediate) ----
    x1nb = x1n.astype(jnp.bfloat16)
    ff = jnp.zeros((BS, D_MODEL), jnp.float32)
    for c in range(N_FF_CHUNKS):
        c0 = c * FF_CHUNK
        hc = jnp.dot(x1nb, w1_ref[:, pl.ds(c0, FF_CHUNK)],
                     preferred_element_type=jnp.float32) + b1_ref[:, pl.ds(c0, FF_CHUNK)]
        hc = jnp.maximum(hc, 0.0).astype(jnp.bfloat16)
        # w2 is stored lane-dense (D, D_FF); contract the lane axes (A @ B^T).
        ff = ff + lax.dot_general(hc, w2_ref[:, pl.ds(c0, FF_CHUNK)],
                                  (((1,), (1,)), ((), ())),
                                  preferred_element_type=jnp.float32)
    ff = ff + b2_ref[...]

    # ---- residual + LayerNorm 2 ----------------------------------------------
    x2 = x1n + ff
    mu2 = jnp.mean(x2, axis=-1, keepdims=True)
    var2 = jnp.mean((x2 - mu2) ** 2, axis=-1, keepdims=True)
    x_out = (x2 - mu2) * lax.rsqrt(var2 + LN_EPS) * g2_ref[...] + be2_ref[...]
    x_slab[...] = x_out                                                # carry to next layer

    # ---- epilogue (last grid step): mean-pool over seq + fc_out --------------
    @pl.when(l == pl.num_programs(0) - 1)
    def _():
        pooled = jnp.dot(pool_ref[...], x_out, preferred_element_type=jnp.float32)   # (B, D)
        o_ref[...] = jnp.dot(pooled, fcw_ref[...],
                             preferred_element_type=jnp.float32) + fcb_ref[...]      # (B, 1)


# ---------------- wrapper -----------------------------------------------------
def _const_spec(shape):
    nd = len(shape)
    return pl.BlockSpec(shape, lambda l, _nd=nd: (0,) * _nd)


def _layer_spec(shape):
    nd = len(shape)
    return pl.BlockSpec((None,) + tuple(shape[1:]),
                        lambda l, _nd=nd: (l,) + (0,) * (_nd - 1))


def fused_forward(src, params):
    flat = params["flat"]
    ids2d = src.reshape(BS, 1).astype(jnp.int32)

    const_head = flat[:4]      # emb, pe_slab, attn_bias, pool
    per_layer = flat[4:16]     # wqkv, bqkv, wo, bo, w1, b1, w2, b2, g1, be1, g2, be2
    const_tail = flat[16:]     # fc_w, fc_b

    in_specs = ([pl.BlockSpec((BS, 1), lambda l: (0, 0))]
                + [_const_spec(a.shape) for a in const_head]
                + [_layer_spec(a.shape) for a in per_layer]
                + [_const_spec(a.shape) for a in const_tail])

    # advisory cost estimate (FFN dominated)
    flops = (2 * BS * VOCAB_PAD * D_MODEL
             + N_LAYERS * (3 * 2 * BS * D_MODEL * D_MODEL
                           + N_HEADS * 2 * 2 * BS * BS * D_MODEL
                           + 2 * BS * D_MODEL * D_MODEL
                           + 4 * BS * D_MODEL * D_FF)
             + 2 * B * BS * D_MODEL + 2 * B * D_MODEL)
    transcendentals = N_LAYERS * (N_HEADS * BS * BS + 2 * BS)
    bytes_accessed = int(sum(a.size * a.dtype.itemsize for a in flat)
                         + ids2d.size * 4 + B * 4)

    out = pl.pallas_call(
        fused_kernel,
        out_shape=jax.ShapeDtypeStruct((B, 1), jnp.float32),
        grid_spec=pltpu.PrefetchScalarGridSpec(
            num_scalar_prefetch=0,
            grid=(N_LAYERS,),
            in_specs=in_specs,
            out_specs=pl.BlockSpec((B, 1), lambda l: (0, 0)),
            scratch_shapes=[pltpu.VMEM((BS, D_MODEL), jnp.float32)],
        ),
        compiler_params=pltpu.CompilerParams(
            dimension_semantics=("arbitrary",)),
        cost_estimate=pl.CostEstimate(flops=int(flops),
                                      transcendentals=int(transcendentals),
                                      bytes_accessed=bytes_accessed),
    )(ids2d, *flat)
    return jnp.squeeze(out, axis=-1)                                   # (B,)


@jax.jit
def transformer_encoder_forward(src, params):
    return fused_forward(src, params)


# ---------------- parameter construction (deterministic) ---------------------
def init_params(key):
    def nrm(k, shape, scale=0.02):
        return scale * jax.random.normal(k, shape, dtype=jnp.float32)

    keys = jax.random.split(key, 2 + N_LAYERS)

    # embedding table; padding_idx=0 row and vocab-padding rows are zero
    emb = nrm(keys[0], (VOCAB, D_MODEL)).at[0].set(0.0)
    emb_pad = jnp.zeros((VOCAB_PAD, D_MODEL), jnp.float32).at[:VOCAB].set(emb)

    wqkv_l, bqkv_l, wo_l, bo_l = [], [], [], []
    w1_l, b1_l, w2_l, b2_l = [], [], [], []
    g1_l, be1_l, g2_l, be2_l = [], [], [], []

    for li in range(N_LAYERS):
        lk = jax.random.split(keys[1 + li], 8)
        in_proj_w = nrm(lk[0], (3 * D_MODEL, D_MODEL))   # PyTorch layout (3D, D)
        in_proj_b = nrm(lk[1], (3 * D_MODEL,))
        wo = nrm(lk[2], (D_MODEL, D_MODEL))
        bo = nrm(lk[3], (D_MODEL,))
        w1 = nrm(lk[4], (D_FF, D_MODEL))
        b1 = nrm(lk[5], (D_FF,))
        w2 = nrm(lk[6], (D_MODEL, D_FF))
        b2 = nrm(lk[7], (D_MODEL,))

        wq, wk, wv = jnp.split(in_proj_w, 3, axis=0)
        bq, bk, bv = jnp.split(in_proj_b, 3, axis=0)
        # fused-across-heads projection weights, pre-transposed for x @ W
        wqkv_l.append(jnp.stack([wq.T, wk.T, wv.T]).astype(jnp.bfloat16))   # (3, D, D)
        bqkv_l.append(jnp.stack([bq.reshape(1, D_MODEL),
                                 bk.reshape(1, D_MODEL),
                                 bv.reshape(1, D_MODEL)]))                  # (3, 1, D)
        wo_l.append(wo.T.astype(jnp.bfloat16))                              # (D, D)
        bo_l.append(bo.reshape(1, D_MODEL))
        w1_l.append(w1.T.astype(jnp.bfloat16))                              # (D, D_FF)
        b1_l.append(b1.reshape(1, D_FF))
        w2_l.append(w2.astype(jnp.bfloat16))     # lane-dense (D, D_FF); used as A @ W2^T
        b2_l.append(b2.reshape(1, D_MODEL))
        g1_l.append(jnp.ones((1, D_MODEL), jnp.float32))
        be1_l.append(jnp.zeros((1, D_MODEL), jnp.float32))
        g2_l.append(jnp.ones((1, D_MODEL), jnp.float32))
        be2_l.append(jnp.zeros((1, D_MODEL), jnp.float32))

    fck = jax.random.split(keys[1 + N_LAYERS], 2)
    fc_w = nrm(fck[0], (1, D_MODEL))                     # Linear(model_dim, 1)
    fc_b = nrm(fck[1], (1,))

    # positional encoding; reproduce the reference module's quirk:
    # pe[:x.size(0)] with batch_first inputs indexes by *batch* and broadcasts
    # over the sequence axis -> flattened row r = b*S + s receives pe[b].
    max_len = 64
    position = jnp.arange(max_len, dtype=jnp.float32)[:, None]
    div_term = jnp.exp(jnp.arange(0, D_MODEL, 2, dtype=jnp.float32)
                       * (-math.log(10000.0) / D_MODEL))
    pe = jnp.zeros((max_len, D_MODEL), jnp.float32)
    pe = pe.at[:, 0::2].set(jnp.sin(position * div_term))
    pe = pe.at[:, 1::2].set(jnp.cos(position * div_term))
    pe_slab = jnp.repeat(pe[:B], S, axis=0)              # (B*S, D)

    # block-diagonal additive attention bias over the flattened (B*S) rows
    rb = jnp.arange(BS) // S
    attn_bias = jnp.where(rb[:, None] == rb[None, :], 0.0, -1e30).astype(jnp.float32)
    # mean-pool selection matrix (B, B*S)
    pool = jnp.where(jnp.arange(B)[:, None] == rb[None, :], 1.0 / S, 0.0).astype(jnp.float32)

    flat = [
        emb_pad, pe_slab, attn_bias, pool,
        jnp.stack(wqkv_l), jnp.stack(bqkv_l), jnp.stack(wo_l), jnp.stack(bo_l),
        jnp.stack(w1_l), jnp.stack(b1_l), jnp.stack(w2_l), jnp.stack(b2_l),
        jnp.stack(g1_l), jnp.stack(be1_l), jnp.stack(g2_l), jnp.stack(be2_l),
        fc_w.T, fc_b.reshape(1, 1),
    ]
    return dict(flat=flat)


if __name__ == "__main__":
    key = jax.random.PRNGKey(0)
    pkey, dkey = jax.random.split(key)
    params = init_params(pkey)
    src = jax.random.randint(dkey, (B, S), 0, VOCAB, dtype=jnp.int32)

    out = transformer_encoder_forward(src, params)
    out = jax.block_until_ready(out)
    assert out.shape == (B,), out.shape
    assert bool(jnp.all(jnp.isfinite(out)))
    print("KERNEL_OK")
</pallas_src>

<mosaic_0001>
module attributes {stable_mosaic.version = 11 : i64} {
  func.func @fused_kernel(%arg0: i32, %arg1: memref<16x1xi32, #tpu.memory_space<vmem>>, %arg2: memref<64x32xf32, #tpu.memory_space<vmem>>, %arg3: memref<16x32xf32, #tpu.memory_space<vmem>>, %arg4: memref<16x16xf32, #tpu.memory_space<vmem>>, %arg5: memref<2x16xf32, #tpu.memory_space<vmem>>, %arg6: memref<1x3x32x32xbf16, #tpu.memory_space<vmem>>, %arg7: memref<1x3x1x32xf32, #tpu.memory_space<vmem>>, %arg8: memref<1x32x32xbf16, #tpu.memory_space<vmem>>, %arg9: memref<1x1x32xf32, #tpu.memory_space<vmem>>, %arg10: memref<1x32x2048xbf16, #tpu.memory_space<vmem>>, %arg11: memref<1x1x2048xf32, #tpu.memory_space<vmem>>, %arg12: memref<1x32x2048xbf16, #tpu.memory_space<vmem>>, %arg13: memref<1x1x32xf32, #tpu.memory_space<vmem>>, %arg14: memref<1x1x32xf32, #tpu.memory_space<vmem>>, %arg15: memref<1x1x32xf32, #tpu.memory_space<vmem>>, %arg16: memref<1x1x32xf32, #tpu.memory_space<vmem>>, %arg17: memref<1x1x32xf32, #tpu.memory_space<vmem>>, %arg18: memref<32x1xf32, #tpu.memory_space<vmem>>, %arg19: memref<1x1xf32, #tpu.memory_space<vmem>>, %arg20: memref<2x1xf32, #tpu.memory_space<vmem>>, %arg21: memref<16x32xf32, #tpu.memory_space<vmem>>) attributes {dimension_semantics = [#tpu.dimension_semantics<arbitrary>], iteration_bounds = array<i64: 2>, scalar_prefetch = 0 : i64, scratch_operands = 1 : i64, tpu.core_type = #tpu.core_type<tc>, window_params = [{pipeline_mode = #tpu.pipeline_mode<synchronous>, transform_indices = @transform_0, window_bounds = array<i64: 16, 1>}, {pipeline_mode = #tpu.pipeline_mode<synchronous>, transform_indices = @transform_1, window_bounds = array<i64: 64, 32>}, {pipeline_mode = #tpu.pipeline_mode<synchronous>, transform_indices = @transform_2, window_bounds = array<i64: 16, 32>}, {pipeline_mode = #tpu.pipeline_mode<synchronous>, transform_indices = @transform_3, window_bounds = array<i64: 16, 16>}, {pipeline_mode = #tpu.pipeline_mode<synchronous>, transform_indices = @transform_4, window_bounds = array<i64: 2, 16>}, {transform_indices = @transform_5, window_bounds = array<i64: 1, 3, 32, 32>}, {transform_indices = @transform_6, window_bounds = array<i64: 1, 3, 1, 32>}, {transform_indices = @transform_7, window_bounds = array<i64: 1, 32, 32>}, {transform_indices = @transform_8, window_bounds = array<i64: 1, 1, 32>}, {transform_indices = @transform_9, window_bounds = array<i64: 1, 32, 2048>}, {transform_indices = @transform_10, window_bounds = array<i64: 1, 1, 2048>}, {transform_indices = @transform_11, window_bounds = array<i64: 1, 32, 2048>}, {transform_indices = @transform_12, window_bounds = array<i64: 1, 1, 32>}, {transform_indices = @transform_13, window_bounds = array<i64: 1, 1, 32>}, {transform_indices = @transform_14, window_bounds = array<i64: 1, 1, 32>}, {transform_indices = @transform_15, window_bounds = array<i64: 1, 1, 32>}, {transform_indices = @transform_16, window_bounds = array<i64: 1, 1, 32>}, {pipeline_mode = #tpu.pipeline_mode<synchronous>, transform_indices = @transform_17, window_bounds = array<i64: 32, 1>}, {pipeline_mode = #tpu.pipeline_mode<synchronous>, transform_indices = @transform_18, window_bounds = array<i64: 1, 1>}, {pipeline_mode = #tpu.pipeline_mode<synchronous>, transform_indices = @transform_19, window_bounds = array<i64: 2, 1>}]} {
    %c0_i32 = arith.constant 0 : i32
    %0 = arith.cmpi eq, %arg0, %c0_i32 : i32
    %1 = arith.extui %0 : i1 to i32
    %c0_i32_0 = arith.constant 0 : i32
    %2 = arith.cmpi ne, %1, %c0_i32_0 : i32
    scf.if %2 {
      %265 = tpu.iota {dimensions = array<i32: 1>} : vector<16x64xi32>
      %c0_142 = arith.constant 0 : index
      %c0_143 = arith.constant 0 : index
      %266 = vector.load %arg1[%c0_142, %c0_143] : memref<16x1xi32, #tpu.memory_space<vmem>>, vector<16x1xi32>
      %267 = vector.broadcast %266 : vector<16x1xi32> to vector<16x64xi32>
      %268 = arith.cmpi eq, %265, %267 : vector<16x64xi32>
      %269 = arith.extui %268 : vector<16x64xi1> to vector<16x64xi32>
      %270 = arith.sitofp %269 : vector<16x64xi32> to vector<16x64xf32>
      %c0_144 = arith.constant 0 : index
      %c0_145 = arith.constant 0 : index
      %271 = vector.load %arg2[%c0_144, %c0_145] : memref<64x32xf32, #tpu.memory_space<vmem>>, vector<64x32xf32>
      %cst_146 = arith.constant dense<0.000000e+00> : vector<16x32xf32>
      %272 = tpu.matmul %270, %271, %cst_146 {dimension_numbers = #tpu.dot_dimension_numbers<[1], [0], [0], [1], [0, 0, 1, 1], [], []>} : vector<16x64xf32>, vector<64x32xf32>, vector<16x32xf32> -> vector<16x32xf32>
      %cst_147 = arith.constant 5.65685415 : f32
      %273 = vector.broadcast %cst_147 : f32 to vector<16x32xf32>
      %274 = arith.mulf %272, %273 : vector<16x32xf32>
      %c0_148 = arith.constant 0 : index
      %c0_149 = arith.constant 0 : index
      %275 = vector.load %arg3[%c0_148, %c0_149] : memref<16x32xf32, #tpu.memory_space<vmem>>, vector<16x32xf32>
      %276 = arith.addf %274, %275 : vector<16x32xf32>
      %c0_150 = arith.constant 0 : index
      %c0_151 = arith.constant 0 : index
      %277 = vector.load %arg21[%c0_150, %c0_151] : memref<16x32xf32, #tpu.memory_space<vmem>>, vector<16x32xf32>
      tpu.vector_store %arg21[%c0_150, %c0_151], %276 {strides = array<i32>} : memref<16x32xf32, #tpu.memory_space<vmem>>, vector<16x32xf32>,
    } else {
    }
    %c0 = arith.constant 0 : index
    %c0_1 = arith.constant 0 : index
    %3 = vector.load %arg21[%c0, %c0_1] : memref<16x32xf32, #tpu.memory_space<vmem>>, vector<16x32xf32>
    %c0_2 = arith.constant 0 : index
    %c0_3 = arith.constant 0 : index
    %4 = vector.load %arg4[%c0_2, %c0_3] : memref<16x16xf32, #tpu.memory_space<vmem>>, vector<16x16xf32>
    %5 = arith.truncf %3 : vector<16x32xf32> to vector<16x32xbf16>
    %c0_4 = arith.constant 0 : index
    %c0_5 = arith.constant 0 : index
    %c0_6 = arith.constant 0 : index
    %c0_7 = arith.constant 0 : index
    %6 = vector.load %arg6[%c0_4, %c0_5, %c0_6, %c0_7] : memref<1x3x32x32xbf16, #tpu.memory_space<vmem>>, vector<1x1x32x32xbf16>
    %7 = vector.shape_cast %6 : vector<1x1x32x32xbf16> to vector<32x32xbf16>
    %cst = arith.constant dense<0.000000e+00> : vector<16x32xf32>
    %8 = tpu.matmul %5, %7, %cst {dimension_numbers = #tpu.dot_dimension_numbers<[1], [0], [0], [1], [0, 0, 1, 1], [], []>} : vector<16x32xbf16>, vector<32x32xbf16>, vector<16x32xf32> -> vector<16x32xf32>
    %c0_8 = arith.constant 0 : index
    %c0_9 = arith.constant 0 : index
    %c0_10 = arith.constant 0 : index
    %c0_11 = arith.constant 0 : index
    %9 = vector.load %arg7[%c0_8, %c0_9, %c0_10, %c0_11] : memref<1x3x1x32xf32, #tpu.memory_space<vmem>>, vector<1x1x1x32xf32>
    %10 = vector.shape_cast %9 : vector<1x1x1x32xf32> to vector<1x32xf32>
    %11 = vector.broadcast %10 : vector<1x32xf32> to vector<16x32xf32>
    %12 = arith.addf %8, %11 : vector<16x32xf32>
    %c0_12 = arith.constant 0 : index
    %c1 = arith.constant 1 : index
    %c0_13 = arith.constant 0 : index
    %c0_14 = arith.constant 0 : index
    %13 = vector.load %arg6[%c0_12, %c1, %c0_13, %c0_14] : memref<1x3x32x32xbf16, #tpu.memory_space<vmem>>, vector<1x1x32x32xbf16>
    %14 = vector.shape_cast %13 : vector<1x1x32x32xbf16> to vector<32x32xbf16>
    %cst_15 = arith.constant dense<0.000000e+00> : vector<16x32xf32>
    %15 = tpu.matmul %5, %14, %cst_15 {dimension_numbers = #tpu.dot_dimension_numbers<[1], [0], [0], [1], [0, 0, 1, 1], [], []>} : vector<16x32xbf16>, vector<32x32xbf16>, vector<16x32xf32> -> vector<16x32xf32>
    %c0_16 = arith.constant 0 : index
    %c1_17 = arith.constant 1 : index
    %c0_18 = arith.constant 0 : index
    %c0_19 = arith.constant 0 : index
    %16 = vector.load %arg7[%c0_16, %c1_17, %c0_18, %c0_19] : memref<1x3x1x32xf32, #tpu.memory_space<vmem>>, vector<1x1x1x32xf32>
    %17 = vector.shape_cast %16 : vector<1x1x1x32xf32> to vector<1x32xf32>
    %18 = vector.broadcast %17 : vector<1x32xf32> to vector<16x32xf32>
    %19 = arith.addf %15, %18 : vector<16x32xf32>
    %c0_20 = arith.constant 0 : index
    %c2 = arith.constant 2 : index
    %c0_21 = arith.constant 0 : index
    %c0_22 = arith.constant 0 : index
    %20 = vector.load %arg6[%c0_20, %c2, %c0_21, %c0_22] : memref<1x3x32x32xbf16, #tpu.memory_space<vmem>>, vector<1x1x32x32xbf16>
    %21 = vector.shape_cast %20 : vector<1x1x32x32xbf16> to vector<32x32xbf16>
    %cst_23 = arith.constant dense<0.000000e+00> : vector<16x32xf32>
    %22 = tpu.matmul %5, %21, %cst_23 {dimension_numbers = #tpu.dot_dimension_numbers<[1], [0], [0], [1], [0, 0, 1, 1], [], []>} : vector<16x32xbf16>, vector<32x32xbf16>, vector<16x32xf32> -> vector<16x32xf32>
    %c0_24 = arith.constant 0 : index
    %c2_25 = arith.constant 2 : index
    %c0_26 = arith.constant 0 : index
    %c0_27 = arith.constant 0 : index
    %23 = vector.load %arg7[%c0_24, %c2_25, %c0_26, %c0_27] : memref<1x3x1x32xf32, #tpu.memory_space<vmem>>, vector<1x1x1x32xf32>
    %24 = vector.shape_cast %23 : vector<1x1x1x32xf32> to vector<1x32xf32>
    %25 = vector.broadcast %24 : vector<1x32xf32> to vector<16x32xf32>
    %26 = arith.addf %22, %25 : vector<16x32xf32>
    %27 = tpu.iota {dimensions = array<i32: 1>} : vector<1x32xi32>
    %cst_28 = arith.constant 0.000000e+00 : f32
    %28 = vector.broadcast %cst_28 : f32 to vector<16x32xf32>
    %c0_i32_29 = arith.constant 0 : i32
    %29 = vector.broadcast %c0_i32_29 : i32 to vector<1x32xi32>
    %30 = arith.cmpi sge, %27, %29 : vector<1x32xi32>
    %c8_i32 = arith.constant 8 : i32
    %31 = vector.broadcast %c8_i32 : i32 to vector<1x32xi32>
    %32 = arith.cmpi slt, %27, %31 : vector<1x32xi32>
    %33 = arith.andi %30, %32 : vector<1x32xi1>
    %cst_30 = arith.constant 1.000000e+00 : f32
    %cst_31 = arith.constant 0.000000e+00 : f32
    %34 = vector.broadcast %cst_30 : f32 to vector<1x32xf32>
    %35 = vector.broadcast %cst_31 : f32 to vector<1x32xf32>
    %36 = arith.select %33, %34, %35 : vector<1x32xi1>, vector<1x32xf32>
    %37 = vector.broadcast %36 : vector<1x32xf32> to vector<16x32xf32>
    %38 = arith.mulf %12, %37 : vector<16x32xf32>
    %cst_32 = arith.constant dense<0.000000e+00> : vector<16x16xf32>
    %39 = tpu.matmul %38, %19, %cst_32 {dimension_numbers = #tpu.dot_dimension_numbers<[1], [1], [0], [0], [0, 0, 1, 0], [], []>} : vector<16x32xf32>, vector<16x32xf32>, vector<16x16xf32> -> vector<16x16xf32>
    %cst_33 = arith.constant 0.353553385 : f32
    %40 = vector.broadcast %cst_33 : f32 to vector<16x16xf32>
    %41 = arith.mulf %39, %40 : vector<16x16xf32>
    %42 = arith.addf %41, %4 : vector<16x16xf32>
    %cst_34 = arith.constant dense<0xFF800000> : vector<16xf32>
    %43 = vector.multi_reduction <maximumf>, %42, %cst_34 [1] : vector<16x16xf32> to vector<16xf32>
    %44 = vector.shape_cast %43 : vector<16xf32> to vector<16x1xf32>
    %45 = vector.broadcast %44 : vector<16x1xf32> to vector<16x16xf32>
    %46 = arith.subf %42, %45 : vector<16x16xf32>
    %47 = math.exp %46 : vector<16x16xf32>
    %cst_35 = arith.constant dense<0.000000e+00> : vector<16xf32>
    %48 = vector.multi_reduction <add>, %47, %cst_35 [1] : vector<16x16xf32> to vector<16xf32>
    %49 = vector.shape_cast %48 : vector<16xf32> to vector<16x1xf32>
    %50 = vector.broadcast %49 : vector<16x1xf32> to vector<16x16xf32>
    %51 = arith.divf %47, %50 : vector<16x16xf32>
    %52 = vector.broadcast %36 : vector<1x32xf32> to vector<16x32xf32>
    %53 = arith.mulf %26, %52 : vector<16x32xf32>
    %cst_36 = arith.constant dense<0.000000e+00> : vector<16x32xf32>
    %54 = tpu.matmul %51, %53, %cst_36 {dimension_numbers = #tpu.dot_dimension_numbers<[1], [0], [0], [1], [0, 0, 1, 1], [], []>} : vector<16x16xf32>, vector<16x32xf32>, vector<16x32xf32> -> vector<16x32xf32>
    %55 = arith.addf %28, %54 : vector<16x32xf32>
    %c8_i32_37 = arith.constant 8 : i32
    %56 = vector.broadcast %c8_i32_37 : i32 to vector<1x32xi32>
    %57 = arith.cmpi sge, %27, %56 : vector<1x32xi32>
    %c16_i32 = arith.constant 16 : i32
    %58 = vector.broadcast %c16_i32 : i32 to vector<1x32xi32>
    %59 = arith.cmpi slt, %27, %58 : vector<1x32xi32>
    %60 = arith.andi %57, %59 : vector<1x32xi1>
    %cst_38 = arith.constant 1.000000e+00 : f32
    %cst_39 = arith.constant 0.000000e+00 : f32
    %61 = vector.broadcast %cst_38 : f32 to vector<1x32xf32>
    %62 = vector.broadcast %cst_39 : f32 to vector<1x32xf32>
    %63 = arith.select %60, %61, %62 : vector<1x32xi1>, vector<1x32xf32>
    %64 = vector.broadcast %63 : vector<1x32xf32> to vector<16x32xf32>
    %65 = arith.mulf %12, %64 : vector<16x32xf32>
    %cst_40 = arith.constant dense<0.000000e+00> : vector<16x16xf32>
    %66 = tpu.matmul %65, %19, %cst_40 {dimension_numbers = #tpu.dot_dimension_numbers<[1], [1], [0], [0], [0, 0, 1, 0], [], []>} : vector<16x32xf32>, vector<16x32xf32>, vector<16x16xf32> -> vector<16x16xf32>
    %cst_41 = arith.constant 0.353553385 : f32
    %67 = vector.broadcast %cst_41 : f32 to vector<16x16xf32>
    %68 = arith.mulf %66, %67 : vector<16x16xf32>
    %69 = arith.addf %68, %4 : vector<16x16xf32>
    %cst_42 = arith.constant dense<0xFF800000> : vector<16xf32>
    %70 = vector.multi_reduction <maximumf>, %69, %cst_42 [1] : vector<16x16xf32> to vector<16xf32>
    %71 = vector.shape_cast %70 : vector<16xf32> to vector<16x1xf32>
    %72 = vector.broadcast %71 : vector<16x1xf32> to vector<16x16xf32>
    %73 = arith.subf %69, %72 : vector<16x16xf32>
    %74 = math.exp %73 : vector<16x16xf32>
    %cst_43 = arith.constant dense<0.000000e+00> : vector<16xf32>
    %75 = vector.multi_reduction <add>, %74, %cst_43 [1] : vector<16x16xf32> to vector<16xf32>
    %76 = vector.shape_cast %75 : vector<16xf32> to vector<16x1xf32>
    %77 = vector.broadcast %76 : vector<16x1xf32> to vector<16x16xf32>
    %78 = arith.divf %74, %77 : vector<16x16xf32>
    %79 = vector.broadcast %63 : vector<1x32xf32> to vector<16x32xf32>
    %80 = arith.mulf %26, %79 : vector<16x32xf32>
    %cst_44 = arith.constant dense<0.000000e+00> : vector<16x32xf32>
    %81 = tpu.matmul %78, %80, %cst_44 {dimension_numbers = #tpu.dot_dimension_numbers<[1], [0], [0], [1], [0, 0, 1, 1], [], []>} : vector<16x16xf32>, vector<16x32xf32>, vector<16x32xf32> -> vector<16x32xf32>
    %82 = arith.addf %55, %81 : vector<16x32xf32>
    %c16_i32_45 = arith.constant 16 : i32
    %83 = vector.broadcast %c16_i32_45 : i32 to vector<1x32xi32>
    %84 = arith.cmpi sge, %27, %83 : vector<1x32xi32>
    %c24_i32 = arith.constant 24 : i32
    %85 = vector.broadcast %c24_i32 : i32 to vector<1x32xi32>
    %86 = arith.cmpi slt, %27, %85 : vector<1x32xi32>
    %87 = arith.andi %84, %86 : vector<1x32xi1>
    %cst_46 = arith.constant 1.000000e+00 : f32
    %cst_47 = arith.constant 0.000000e+00 : f32
    %88 = vector.broadcast %cst_46 : f32 to vector<1x32xf32>
    %89 = vector.broadcast %cst_47 : f32 to vector<1x32xf32>
    %90 = arith.select %87, %88, %89 : vector<1x32xi1>, vector<1x32xf32>
    %91 = vector.broadcast %90 : vector<1x32xf32> to vector<16x32xf32>
    %92 = arith.mulf %12, %91 : vector<16x32xf32>
    %cst_48 = arith.constant dense<0.000000e+00> : vector<16x16xf32>
    %93 = tpu.matmul %92, %19, %cst_48 {dimension_numbers = #tpu.dot_dimension_numbers<[1], [1], [0], [0], [0, 0, 1, 0], [], []>} : vector<16x32xf32>, vector<16x32xf32>, vector<16x16xf32> -> vector<16x16xf32>
    %cst_49 = arith.constant 0.353553385 : f32
    %94 = vector.broadcast %cst_49 : f32 to vector<16x16xf32>
    %95 = arith.mulf %93, %94 : vector<16x16xf32>
    %96 = arith.addf %95, %4 : vector<16x16xf32>
    %cst_50 = arith.constant dense<0xFF800000> : vector<16xf32>
    %97 = vector.multi_reduction <maximumf>, %96, %cst_50 [1] : vector<16x16xf32> to vector<16xf32>
    %98 = vector.shape_cast %97 : vector<16xf32> to vector<16x1xf32>
    %99 = vector.broadcast %98 : vector<16x1xf32> to vector<16x16xf32>
    %100 = arith.subf %96, %99 : vector<16x16xf32>
    %101 = math.exp %100 : vector<16x16xf32>
    %cst_51 = arith.constant dense<0.000000e+00> : vector<16xf32>
    %102 = vector.multi_reduction <add>, %101, %cst_51 [1] : vector<16x16xf32> to vector<16xf32>
    %103 = vector.shape_cast %102 : vector<16xf32> to vector<16x1xf32>
    %104 = vector.broadcast %103 : vector<16x1xf32> to vector<16x16xf32>
    %105 = arith.divf %101, %104 : vector<16x16xf32>
    %106 = vector.broadcast %90 : vector<1x32xf32> to vector<16x32xf32>
    %107 = arith.mulf %26, %106 : vector<16x32xf32>
    %cst_52 = arith.constant dense<0.000000e+00> : vector<16x32xf32>
    %108 = tpu.matmul %105, %107, %cst_52 {dimension_numbers = #tpu.dot_dimension_numbers<[1], [0], [0], [1], [0, 0, 1, 1], [], []>} : vector<16x16xf32>, vector<16x32xf32>, vector<16x32xf32> -> vector<16x32xf32>
    %109 = arith.addf %82, %108 : vector<16x32xf32>
    %c24_i32_53 = arith.constant 24 : i32
    %110 = vector.broadcast %c24_i32_53 : i32 to vector<1x32xi32>
    %111 = arith.cmpi sge, %27, %110 : vector<1x32xi32>
    %c32_i32 = arith.constant 32 : i32
    %112 = vector.broadcast %c32_i32 : i32 to vector<1x32xi32>
    %113 = arith.cmpi slt, %27, %112 : vector<1x32xi32>
    %114 = arith.andi %111, %113 : vector<1x32xi1>
    %cst_54 = arith.constant 1.000000e+00 : f32
    %cst_55 = arith.constant 0.000000e+00 : f32
    %115 = vector.broadcast %cst_54 : f32 to vector<1x32xf32>
    %116 = vector.broadcast %cst_55 : f32 to vector<1x32xf32>
    %117 = arith.select %114, %115, %116 : vector<1x32xi1>, vector<1x32xf32>
    %118 = vector.broadcast %117 : vector<1x32xf32> to vector<16x32xf32>
    %119 = arith.mulf %12, %118 : vector<16x32xf32>
    %cst_56 = arith.constant dense<0.000000e+00> : vector<16x16xf32>
    %120 = tpu.matmul %119, %19, %cst_56 {dimension_numbers = #tpu.dot_dimension_numbers<[1], [1], [0], [0], [0, 0, 1, 0], [], []>} : vector<16x32xf32>, vector<16x32xf32>, vector<16x16xf32> -> vector<16x16xf32>
    %cst_57 = arith.constant 0.353553385 : f32
    %121 = vector.broadcast %cst_57 : f32 to vector<16x16xf32>
    %122 = arith.mulf %120, %121 : vector<16x16xf32>
    %123 = arith.addf %122, %4 : vector<16x16xf32>
    %cst_58 = arith.constant dense<0xFF800000> : vector<16xf32>
    %124 = vector.multi_reduction <maximumf>, %123, %cst_58 [1] : vector<16x16xf32> to vector<16xf32>
    %125 = vector.shape_cast %124 : vector<16xf32> to vector<16x1xf32>
    %126 = vector.broadcast %125 : vector<16x1xf32> to vector<16x16xf32>
    %127 = arith.subf %123, %126 : vector<16x16xf32>
    %128 = math.exp %127 : vector<16x16xf32>
    %cst_59 = arith.constant dense<0.000000e+00> : vector<16xf32>
    %129 = vector.multi_reduction <add>, %128, %cst_59 [1] : vector<16x16xf32> to vector<16xf32>
    %130 = vector.shape_cast %129 : vector<16xf32> to vector<16x1xf32>
    %131 = vector.broadcast %130 : vector<16x1xf32> to vector<16x16xf32>
    %132 = arith.divf %128, %131 : vector<16x16xf32>
    %133 = vector.broadcast %117 : vector<1x32xf32> to vector<16x32xf32>
    %134 = arith.mulf %26, %133 : vector<16x32xf32>
    %cst_60 = arith.constant dense<0.000000e+00> : vector<16x32xf32>
    %135 = tpu.matmul %132, %134, %cst_60 {dimension_numbers = #tpu.dot_dimension_numbers<[1], [0], [0], [1], [0, 0, 1, 1], [], []>} : vector<16x16xf32>, vector<16x32xf32>, vector<16x32xf32> -> vector<16x32xf32>
    %136 = arith.addf %109, %135 : vector<16x32xf32>
    %137 = arith.truncf %136 : vector<16x32xf32> to vector<16x32xbf16>
    %c0_61 = arith.constant 0 : index
    %c0_62 = arith.constant 0 : index
    %c0_63 = arith.constant 0 : index
    %138 = vector.load %arg8[%c0_61, %c0_62, %c0_63] : memref<1x32x32xbf16, #tpu.memory_space<vmem>>, vector<1x32x32xbf16>
    %139 = vector.shape_cast %138 : vector<1x32x32xbf16> to vector<32x32xbf16>
    %cst_64 = arith.constant dense<0.000000e+00> : vector<16x32xf32>
    %140 = tpu.matmul %137, %139, %cst_64 {dimension_numbers = #tpu.dot_dimension_numbers<[1], [0], [0], [1], [0, 0, 1, 1], [], []>} : vector<16x32xbf16>, vector<32x32xbf16>, vector<16x32xf32> -> vector<16x32xf32>
    %c0_65 = arith.constant 0 : index
    %c0_66 = arith.constant 0 : index
    %c0_67 = arith.constant 0 : index
    %141 = vector.load %arg9[%c0_65, %c0_66, %c0_67] : memref<1x1x32xf32, #tpu.memory_space<vmem>>, vector<1x1x32xf32>
    %142 = vector.shape_cast %141 : vector<1x1x32xf32> to vector<1x32xf32>
    %143 = vector.broadcast %142 : vector<1x32xf32> to vector<16x32xf32>
    %144 = arith.addf %140, %143 : vector<16x32xf32>
    %145 = arith.addf %3, %144 : vector<16x32xf32>
    %cst_68 = arith.constant dense<0.000000e+00> : vector<16xf32>
    %146 = vector.multi_reduction <add>, %145, %cst_68 [1] : vector<16x32xf32> to vector<16xf32>
    %147 = vector.shape_cast %146 : vector<16xf32> to vector<16x1xf32>
    %cst_69 = arith.constant 3.200000e+01 : f32
    %148 = vector.broadcast %cst_69 : f32 to vector<16x1xf32>
    %149 = arith.divf %147, %148 : vector<16x1xf32>
    %150 = vector.broadcast %149 : vector<16x1xf32> to vector<16x32xf32>
    %151 = arith.subf %145, %150 : vector<16x32xf32>
    %152 = arith.mulf %151, %151 : vector<16x32xf32>
    %cst_70 = arith.constant dense<0.000000e+00> : vector<16xf32>
    %153 = vector.multi_reduction <add>, %152, %cst_70 [1] : vector<16x32xf32> to vector<16xf32>
    %154 = vector.shape_cast %153 : vector<16xf32> to vector<16x1xf32>
    %cst_71 = arith.constant 3.200000e+01 : f32
    %155 = vector.broadcast %cst_71 : f32 to vector<16x1xf32>
    %156 = arith.divf %154, %155 : vector<16x1xf32>
    %157 = vector.broadcast %149 : vector<16x1xf32> to vector<16x32xf32>
    %158 = arith.subf %145, %157 : vector<16x32xf32>
    %cst_72 = arith.constant 9.99999974E-6 : f32
    %159 = vector.broadcast %cst_72 : f32 to vector<16x1xf32>
    %160 = arith.addf %156, %159 : vector<16x1xf32>
    %161 = math.rsqrt %160 : vector<16x1xf32>
    %162 = vector.broadcast %161 : vector<16x1xf32> to vector<16x32xf32>
    %163 = arith.mulf %158, %162 : vector<16x32xf32>
    %c0_73 = arith.constant 0 : index
    %c0_74 = arith.constant 0 : index
    %c0_75 = arith.constant 0 : index
    %164 = vector.load %arg14[%c0_73, %c0_74, %c0_75] : memref<1x1x32xf32, #tpu.memory_space<vmem>>, vector<1x1x32xf32>
    %165 = vector.shape_cast %164 : vector<1x1x32xf32> to vector<1x32xf32>
    %166 = vector.broadcast %165 : vector<1x32xf32> to vector<16x32xf32>
    %167 = arith.mulf %163, %166 : vector<16x32xf32>
    %c0_76 = arith.constant 0 : index
    %c0_77 = arith.constant 0 : index
    %c0_78 = arith.constant 0 : index
    %168 = vector.load %arg15[%c0_76, %c0_77, %c0_78] : memref<1x1x32xf32, #tpu.memory_space<vmem>>, vector<1x1x32xf32>
    %169 = vector.shape_cast %168 : vector<1x1x32xf32> to vector<1x32xf32>
    %170 = vector.broadcast %169 : vector<1x32xf32> to vector<16x32xf32>
    %171 = arith.addf %167, %170 : vector<16x32xf32>
    %172 = arith.truncf %171 : vector<16x32xf32> to vector<16x32xbf16>
    %cst_79 = arith.constant 0.000000e+00 : f32
    %173 = vector.broadcast %cst_79 : f32 to vector<16x32xf32>
    %c0_80 = arith.constant 0 : index
    %c0_81 = arith.constant 0 : index
    %c0_82 = arith.constant 0 : index
    %174 = vector.load %arg10[%c0_80, %c0_81, %c0_82] : memref<1x32x2048xbf16, #tpu.memory_space<vmem>>, vector<1x32x512xbf16>
    %175 = vector.shape_cast %174 : vector<1x32x512xbf16> to vector<32x512xbf16>
    %cst_83 = arith.constant dense<0.000000e+00> : vector<16x512xf32>
    %176 = tpu.matmul %172, %175, %cst_83 {dimension_numbers = #tpu.dot_dimension_numbers<[1], [0], [0], [1], [0, 0, 1, 1], [], []>} : vector<16x32xbf16>, vector<32x512xbf16>, vector<16x512xf32> -> vector<16x512xf32>
    %c0_84 = arith.constant 0 : index
    %c0_85 = arith.constant 0 : index
    %c0_86 = arith.constant 0 : index
    %177 = vector.load %arg11[%c0_84, %c0_85, %c0_86] : memref<1x1x2048xf32, #tpu.memory_space<vmem>>, vector<1x1x512xf32>
    %178 = vector.shape_cast %177 : vector<1x1x512xf32> to vector<1x512xf32>
    %179 = vector.broadcast %178 : vector<1x512xf32> to vector<16x512xf32>
    %180 = arith.addf %176, %179 : vector<16x512xf32>
    %cst_87 = arith.constant 0.000000e+00 : f32
    %181 = vector.broadcast %cst_87 : f32 to vector<16x512xf32>
    %182 = arith.maximumf %180, %181 : vector<16x512xf32>
    %183 = arith.truncf %182 : vector<16x512xf32> to vector<16x512xbf16>
    %c0_88 = arith.constant 0 : index
    %c0_89 = arith.constant 0 : index
    %c0_90 = arith.constant 0 : index
    %184 = vector.load %arg12[%c0_88, %c0_89, %c0_90] : memref<1x32x2048xbf16, #tpu.memory_space<vmem>>, vector<1x32x512xbf16>
    %185 = vector.shape_cast %184 : vector<1x32x512xbf16> to vector<32x512xbf16>
    %cst_91 = arith.constant dense<0.000000e+00> : vector<16x32xf32>
    %186 = tpu.matmul %183, %185, %cst_91 {dimension_numbers = #tpu.dot_dimension_numbers<[1], [1], [0], [0], [0, 0, 1, 0], [], []>} : vector<16x512xbf16>, vector<32x512xbf16>, vector<16x32xf32> -> vector<16x32xf32>
    %187 = arith.addf %173, %186 : vector<16x32xf32>
    %c0_92 = arith.constant 0 : index
    %c0_93 = arith.constant 0 : index
    %c512 = arith.constant 512 : index
    %188 = vector.load %arg10[%c0_92, %c0_93, %c512] : memref<1x32x2048xbf16, #tpu.memory_space<vmem>>, vector<1x32x512xbf16>
    %189 = vector.shape_cast %188 : vector<1x32x512xbf16> to vector<32x512xbf16>
    %cst_94 = arith.constant dense<0.000000e+00> : vector<16x512xf32>
    %190 = tpu.matmul %172, %189, %cst_94 {dimension_numbers = #tpu.dot_dimension_numbers<[1], [0], [0], [1], [0, 0, 1, 1], [], []>} : vector<16x32xbf16>, vector<32x512xbf16>, vector<16x512xf32> -> vector<16x512xf32>
    %c0_95 = arith.constant 0 : index
    %c0_96 = arith.constant 0 : index
    %c512_97 = arith.constant 512 : index
    %191 = vector.load %arg11[%c0_95, %c0_96, %c512_97] : memref<1x1x2048xf32, #tpu.memory_space<vmem>>, vector<1x1x512xf32>
    %192 = vector.shape_cast %191 : vector<1x1x512xf32> to vector<1x512xf32>
    %193 = vector.broadcast %192 : vector<1x512xf32> to vector<16x512xf32>
    %194 = arith.addf %190, %193 : vector<16x512xf32>
    %cst_98 = arith.constant 0.000000e+00 : f32
    %195 = vector.broadcast %cst_98 : f32 to vector<16x512xf32>
    %196 = arith.maximumf %194, %195 : vector<16x512xf32>
    %197 = arith.truncf %196 : vector<16x512xf32> to vector<16x512xbf16>
    %c0_99 = arith.constant 0 : index
    %c0_100 = arith.constant 0 : index
    %c512_101 = arith.constant 512 : index
    %198 = vector.load %arg12[%c0_99, %c0_100, %c512_101] : memref<1x32x2048xbf16, #tpu.memory_space<vmem>>, vector<1x32x512xbf16>
    %199 = vector.shape_cast %198 : vector<1x32x512xbf16> to vector<32x512xbf16>
    %cst_102 = arith.constant dense<0.000000e+00> : vector<16x32xf32>
    %200 = tpu.matmul %197, %199, %cst_102 {dimension_numbers = #tpu.dot_dimension_numbers<[1], [1], [0], [0], [0, 0, 1, 0], [], []>} : vector<16x512xbf16>, vector<32x512xbf16>, vector<16x32xf32> -> vector<16x32xf32>
    %201 = arith.addf %187, %200 : vector<16x32xf32>
    %c0_103 = arith.constant 0 : index
    %c0_104 = arith.constant 0 : index
    %c1024 = arith.constant 1024 : index
    %202 = vector.load %arg10[%c0_103, %c0_104, %c1024] : memref<1x32x2048xbf16, #tpu.memory_space<vmem>>, vector<1x32x512xbf16>
    %203 = vector.shape_cast %202 : vector<1x32x512xbf16> to vector<32x512xbf16>
    %cst_105 = arith.constant dense<0.000000e+00> : vector<16x512xf32>
    %204 = tpu.matmul %172, %203, %cst_105 {dimension_numbers = #tpu.dot_dimension_numbers<[1], [0], [0], [1], [0, 0, 1, 1], [], []>} : vector<16x32xbf16>, vector<32x512xbf16>, vector<16x512xf32> -> vector<16x512xf32>
    %c0_106 = arith.constant 0 : index
    %c0_107 = arith.constant 0 : index
    %c1024_108 = arith.constant 1024 : index
    %205 = vector.load %arg11[%c0_106, %c0_107, %c1024_108] : memref<1x1x2048xf32, #tpu.memory_space<vmem>>, vector<1x1x512xf32>
    %206 = vector.shape_cast %205 : vector<1x1x512xf32> to vector<1x512xf32>
    %207 = vector.broadcast %206 : vector<1x512xf32> to vector<16x512xf32>
    %208 = arith.addf %204, %207 : vector<16x512xf32>
    %cst_109 = arith.constant 0.000000e+00 : f32
    %209 = vector.broadcast %cst_109 : f32 to vector<16x512xf32>
    %210 = arith.maximumf %208, %209 : vector<16x512xf32>
    %211 = arith.truncf %210 : vector<16x512xf32> to vector<16x512xbf16>
    %c0_110 = arith.constant 0 : index
    %c0_111 = arith.constant 0 : index
    %c1024_112 = arith.constant 1024 : index
    %212 = vector.load %arg12[%c0_110, %c0_111, %c1024_112] : memref<1x32x2048xbf16, #tpu.memory_space<vmem>>, vector<1x32x512xbf16>
    %213 = vector.shape_cast %212 : vector<1x32x512xbf16> to vector<32x512xbf16>
    %cst_113 = arith.constant dense<0.000000e+00> : vector<16x32xf32>
    %214 = tpu.matmul %211, %213, %cst_113 {dimension_numbers = #tpu.dot_dimension_numbers<[1], [1], [0], [0], [0, 0, 1, 0], [], []>} : vector<16x512xbf16>, vector<32x512xbf16>, vector<16x32xf32> -> vector<16x32xf32>
    %215 = arith.addf %201, %214 : vector<16x32xf32>
    %c0_114 = arith.constant 0 : index
    %c0_115 = arith.constant 0 : index
    %c1536 = arith.constant 1536 : index
    %216 = vector.load %arg10[%c0_114, %c0_115, %c1536] : memref<1x32x2048xbf16, #tpu.memory_space<vmem>>, vector<1x32x512xbf16>
    %217 = vector.shape_cast %216 : vector<1x32x512xbf16> to vector<32x512xbf16>
    %cst_116 = arith.constant dense<0.000000e+00> : vector<16x512xf32>
    %218 = tpu.matmul %172, %217, %cst_116 {dimension_numbers = #tpu.dot_dimension_numbers<[1], [0], [0], [1], [0, 0, 1, 1], [], []>} : vector<16x32xbf16>, vector<32x512xbf16>, vector<16x512xf32> -> vector<16x512xf32>
    %c0_117 = arith.constant 0 : index
    %c0_118 = arith.constant 0 : index
    %c1536_119 = arith.constant 1536 : index
    %219 = vector.load %arg11[%c0_117, %c0_118, %c1536_119] : memref<1x1x2048xf32, #tpu.memory_space<vmem>>, vector<1x1x512xf32>
    %220 = vector.shape_cast %219 : vector<1x1x512xf32> to vector<1x512xf32>
    %221 = vector.broadcast %220 : vector<1x512xf32> to vector<16x512xf32>
    %222 = arith.addf %218, %221 : vector<16x512xf32>
    %cst_120 = arith.constant 0.000000e+00 : f32
    %223 = vector.broadcast %cst_120 : f32 to vector<16x512xf32>
    %224 = arith.maximumf %222, %223 : vector<16x512xf32>
    %225 = arith.truncf %224 : vector<16x512xf32> to vector<16x512xbf16>
    %c0_121 = arith.constant 0 : index
    %c0_122 = arith.constant 0 : index
    %c1536_123 = arith.constant 1536 : index
    %226 = vector.load %arg12[%c0_121, %c0_122, %c1536_123] : memref<1x32x2048xbf16, #tpu.memory_space<vmem>>, vector<1x32x512xbf16>
    %227 = vector.shape_cast %226 : vector<1x32x512xbf16> to vector<32x512xbf16>
    %cst_124 = arith.constant dense<0.000000e+00> : vector<16x32xf32>
    %228 = tpu.matmul %225, %227, %cst_124 {dimension_numbers = #tpu.dot_dimension_numbers<[1], [1], [0], [0], [0, 0, 1, 0], [], []>} : vector<16x512xbf16>, vector<32x512xbf16>, vector<16x32xf32> -> vector<16x32xf32>
    %229 = arith.addf %215, %228 : vector<16x32xf32>
    %c0_125 = arith.constant 0 : index
    %c0_126 = arith.constant 0 : index
    %c0_127 = arith.constant 0 : index
    %230 = vector.load %arg13[%c0_125, %c0_126, %c0_127] : memref<1x1x32xf32, #tpu.memory_space<vmem>>, vector<1x1x32xf32>
    %231 = vector.shape_cast %230 : vector<1x1x32xf32> to vector<1x32xf32>
    %232 = vector.broadcast %231 : vector<1x32xf32> to vector<16x32xf32>
    %233 = arith.addf %229, %232 : vector<16x32xf32>
    %234 = arith.addf %171, %233 : vector<16x32xf32>
    %cst_128 = arith.constant dense<0.000000e+00> : vector<16xf32>
    %235 = vector.multi_reduction <add>, %234, %cst_128 [1] : vector<16x32xf32> to vector<16xf32>
    %236 = vector.shape_cast %235 : vector<16xf32> to vector<16x1xf32>
    %cst_129 = arith.constant 3.200000e+01 : f32
    %237 = vector.broadcast %cst_129 : f32 to vector<16x1xf32>
    %238 = arith.divf %236, %237 : vector<16x1xf32>
    %239 = vector.broadcast %238 : vector<16x1xf32> to vector<16x32xf32>
    %240 = arith.subf %234, %239 : vector<16x32xf32>
    %241 = arith.mulf %240, %240 : vector<16x32xf32>
    %cst_130 = arith.constant dense<0.000000e+00> : vector<16xf32>
    %242 = vector.multi_reduction <add>, %241, %cst_130 [1] : vector<16x32xf32> to vector<16xf32>
    %243 = vector.shape_cast %242 : vector<16xf32> to vector<16x1xf32>
    %cst_131 = arith.constant 3.200000e+01 : f32
    %244 = vector.broadcast %cst_131 : f32 to vector<16x1xf32>
    %245 = arith.divf %243, %244 : vector<16x1xf32>
    %246 = vector.broadcast %238 : vector<16x1xf32> to vector<16x32xf32>
    %247 = arith.subf %234, %246 : vector<16x32xf32>
    %cst_132 = arith.constant 9.99999974E-6 : f32
    %248 = vector.broadcast %cst_132 : f32 to vector<16x1xf32>
    %249 = arith.addf %245, %248 : vector<16x1xf32>
    %250 = math.rsqrt %249 : vector<16x1xf32>
    %251 = vector.broadcast %250 : vector<16x1xf32> to vector<16x32xf32>
    %252 = arith.mulf %247, %251 : vector<16x32xf32>
    %c0_133 = arith.constant 0 : index
    %c0_134 = arith.constant 0 : index
    %c0_135 = arith.constant 0 : index
    %253 = vector.load %arg16[%c0_133, %c0_134, %c0_135] : memref<1x1x32xf32, #tpu.memory_space<vmem>>, vector<1x1x32xf32>
    %254 = vector.shape_cast %253 : vector<1x1x32xf32> to vector<1x32xf32>
    %255 = vector.broadcast %254 : vector<1x32xf32> to vector<16x32xf32>
    %256 = arith.mulf %252, %255 : vector<16x32xf32>
    %c0_136 = arith.constant 0 : index
    %c0_137 = arith.constant 0 : index
    %c0_138 = arith.constant 0 : index
    %257 = vector.load %arg17[%c0_136, %c0_137, %c0_138] : memref<1x1x32xf32, #tpu.memory_space<vmem>>, vector<1x1x32xf32>
    %258 = vector.shape_cast %257 : vector<1x1x32xf32> to vector<1x32xf32>
    %259 = vector.broadcast %258 : vector<1x32xf32> to vector<16x32xf32>
    %260 = arith.addf %256, %259 : vector<16x32xf32>
    %c0_139 = arith.constant 0 : index
    %c0_140 = arith.constant 0 : index
    %261 = vector.load %arg21[%c0_139, %c0_140] : memref<16x32xf32, #tpu.memory_space<vmem>>, vector<16x32xf32>
    tpu.vector_store %arg21[%c0_139, %c0_140], %260 {strides = array<i32>} : memref<16x32xf32, #tpu.memory_space<vmem>>, vector<16x32xf32>,
    %c1_i32 = arith.constant 1 : i32
    %262 = arith.cmpi eq, %arg0, %c1_i32 : i32
    %263 = arith.extui %262 : i1 to i32
    %c0_i32_141 = arith.constant 0 : i32
    %264 = arith.cmpi ne, %263, %c0_i32_141 : i32
    scf.if %264 {
      %c0_142 = arith.constant 0 : index
      %c0_143 = arith.constant 0 : index
      %265 = vector.load %arg5[%c0_142, %c0_143] : memref<2x16xf32, #tpu.memory_space<vmem>>, vector<2x16xf32>
      %cst_144 = arith.constant dense<0.000000e+00> : vector<2x32xf32>
      %266 = tpu.matmul %265, %260, %cst_144 {dimension_numbers = #tpu.dot_dimension_numbers<[1], [0], [0], [1], [0, 0, 1, 1], [], []>} : vector<2x16xf32>, vector<16x32xf32>, vector<2x32xf32> -> vector<2x32xf32>
      %c0_145 = arith.constant 0 : index
      %c0_146 = arith.constant 0 : index
      %267 = vector.load %arg18[%c0_145, %c0_146] : memref<32x1xf32, #tpu.memory_space<vmem>>, vector<32x1xf32>
      %cst_147 = arith.constant dense<0.000000e+00> : vector<2x1xf32>
      %268 = tpu.matmul %266, %267, %cst_147 {dimension_numbers = #tpu.dot_dimension_numbers<[1], [0], [0], [1], [0, 0, 1, 1], [], []>} : vector<2x32xf32>, vector<32x1xf32>, vector<2x1xf32> -> vector<2x1xf32>
      %c0_148 = arith.constant 0 : index
      %c0_149 = arith.constant 0 : index
      %269 = vector.load %arg19[%c0_148, %c0_149] : memref<1x1xf32, #tpu.memory_space<vmem>>, vector<1x1xf32>
      %270 = vector.broadcast %269 : vector<1x1xf32> to vector<2x1xf32>
      %271 = arith.addf %268, %270 : vector<2x1xf32>
      %c0_150 = arith.constant 0 : index
      %c0_151 = arith.constant 0 : index
      %272 = vector.load %arg20[%c0_150, %c0_151] : memref<2x1xf32, #tpu.memory_space<vmem>>, vector<2x1xf32>
      tpu.vector_store %arg20[%c0_150, %c0_151], %271 {strides = array<i32>} : memref<2x1xf32, #tpu.memory_space<vmem>>, vector<2x1xf32>,
    } else {
    }
    return
  }
  func.func @transform_0(%arg0: i32) -> (i32, i32) {
    %c0_i32 = arith.constant 0 : i32
    %c0_i32_0 = arith.constant 0 : i32
    %c0_i32_1 = arith.constant 0 : i32
    return %c0_i32, %c0_i32_0 : i32, i32
  }
  func.func @transform_1(%arg0: i32) -> (i32, i32) {
    %c0_i32 = arith.constant 0 : i32
    %c0_i32_0 = arith.constant 0 : i32
    %c0_i32_1 = arith.constant 0 : i32
    return %c0_i32, %c0_i32_0 : i32, i32
  }
  func.func @transform_2(%arg0: i32) -> (i32, i32) {
    %c0_i32 = arith.constant 0 : i32
    %c0_i32_0 = arith.constant 0 : i32
    %c0_i32_1 = arith.constant 0 : i32
    return %c0_i32, %c0_i32_0 : i32, i32
  }
  func.func @transform_3(%arg0: i32) -> (i32, i32) {
    %c0_i32 = arith.constant 0 : i32
    %c0_i32_0 = arith.constant 0 : i32
    %c0_i32_1 = arith.constant 0 : i32
    return %c0_i32, %c0_i32_0 : i32, i32
  }
  func.func @transform_4(%arg0: i32) -> (i32, i32) {
    %c0_i32 = arith.constant 0 : i32
    %c0_i32_0 = arith.constant 0 : i32
    %c0_i32_1 = arith.constant 0 : i32
    return %c0_i32, %c0_i32_0 : i32, i32
  }
  func.func @transform_5(%arg0: i32) -> (i32, i32, i32, i32) {
    %c0_i32 = arith.constant 0 : i32
    %c0_i32_0 = arith.constant 0 : i32
    %c0_i32_1 = arith.constant 0 : i32
    %c0_i32_2 = arith.constant 0 : i32
    return %arg0, %c0_i32, %c0_i32_0, %c0_i32_1 : i32, i32, i32, i32
  }
  func.func @transform_6(%arg0: i32) -> (i32, i32, i32, i32) {
    %c0_i32 = arith.constant 0 : i32
    %c0_i32_0 = arith.constant 0 : i32
    %c0_i32_1 = arith.constant 0 : i32
    %c0_i32_2 = arith.constant 0 : i32
    return %arg0, %c0_i32, %c0_i32_0, %c0_i32_1 : i32, i32, i32, i32
  }
  func.func @transform_7(%arg0: i32) -> (i32, i32, i32) {
    %c0_i32 = arith.constant 0 : i32
    %c0_i32_0 = arith.constant 0 : i32
    %c0_i32_1 = arith.constant 0 : i32
    return %arg0, %c0_i32, %c0_i32_0 : i32, i32, i32
  }
  func.func @transform_8(%arg0: i32) -> (i32, i32, i32) {
    %c0_i32 = arith.constant 0 : i32
    %c0_i32_0 = arith.constant 0 : i32
    %c0_i32_1 = arith.constant 0 : i32
    return %arg0, %c0_i32, %c0_i32_0 : i32, i32, i32
  }
  func.func @transform_9(%arg0: i32) -> (i32, i32, i32) {
    %c0_i32 = arith.constant 0 : i32
    %c0_i32_0 = arith.constant 0 : i32
    %c0_i32_1 = arith.constant 0 : i32
    return %arg0, %c0_i32, %c0_i32_0 : i32, i32, i32
  }
  func.func @transform_10(%arg0: i32) -> (i32, i32, i32) {
    %c0_i32 = arith.constant 0 : i32
    %c0_i32_0 = arith.constant 0 : i32
    %c0_i32_1 = arith.constant 0 : i32
    return %arg0, %c0_i32, %c0_i32_0 : i32, i32, i32
  }
  func.func @transform_11(%arg0: i32) -> (i32, i32, i32) {
    %c0_i32 = arith.constant 0 : i32
    %c0_i32_0 = arith.constant 0 : i32
    %c0_i32_1 = arith.constant 0 : i32
    return %arg0, %c0_i32, %c0_i32_0 : i32, i32, i32
  }
  func.func @transform_12(%arg0: i32) -> (i32, i32, i32) {
    %c0_i32 = arith.constant 0 : i32
    %c0_i32_0 = arith.constant 0 : i32
    %c0_i32_1 = arith.constant 0 : i32
    return %arg0, %c0_i32, %c0_i32_0 : i32, i32, i32
  }
  func.func @transform_13(%arg0: i32) -> (i32, i32, i32) {
    %c0_i32 = arith.constant 0 : i32
    %c0_i32_0 = arith.constant 0 : i32
    %c0_i32_1 = arith.constant 0 : i32
    return %arg0, %c0_i32, %c0_i32_0 : i32, i32, i32
  }
  func.func @transform_14(%arg0: i32) -> (i32, i32, i32) {
    %c0_i32 = arith.constant 0 : i32
    %c0_i32_0 = arith.constant 0 : i32
    %c0_i32_1 = arith.constant 0 : i32
    return %arg0, %c0_i32, %c0_i32_0 : i32, i32, i32
  }
  func.func @transform_15(%arg0: i32) -> (i32, i32, i32) {
    %c0_i32 = arith.constant 0 : i32
    %c0_i32_0 = arith.constant 0 : i32
    %c0_i32_1 = arith.constant 0 : i32
    return %arg0, %c0_i32, %c0_i32_0 : i32, i32, i32
  }
  func.func @transform_16(%arg0: i32) -> (i32, i32, i32) {
    %c0_i32 = arith.constant 0 : i32
    %c0_i32_0 = arith.constant 0 : i32
    %c0_i32_1 = arith.constant 0 : i32
    return %arg0, %c0_i32, %c0_i32_0 : i32, i32, i32
  }
  func.func @transform_17(%arg0: i32) -> (i32, i32) {
    %c0_i32 = arith.constant 0 : i32
    %c0_i32_0 = arith.constant 0 : i32
    %c0_i32_1 = arith.constant 0 : i32
    return %c0_i32, %c0_i32_0 : i32, i32
  }
  func.func @transform_18(%arg0: i32) -> (i32, i32) {
    %c0_i32 = arith.constant 0 : i32
    %c0_i32_0 = arith.constant 0 : i32
    %c0_i32_1 = arith.constant 0 : i32
    return %c0_i32, %c0_i32_0 : i32, i32
  }
  func.func @transform_19(%arg0: i32) -> (i32, i32) {
    %c0_i32 = arith.constant 0 : i32
    %c0_i32_0 = arith.constant 0 : i32
    %c0_i32_1 = arith.constant 0 : i32
    return %c0_i32, %c0_i32_0 : i32, i32
  }
}

</mosaic_0001>

<llo_original>
// kernel: transformer_encoder_forward.1
$region0: #{transformer_encoder_forward.1}
  #allocation0 [shape = 'u32[]', space=smem, size = 0x4, offset = 0x4, fixed_abs, tag = 'smem constant byte address 0x4 - core index']
  #allocation1 [shape = 'u32[144,128]{1,0:T(1,128)}', space=vmem, size = 0x12000, scoped, tag = 'internal scratch']
  #allocation2 [shape = 'f32[16,32]{1,0:T(8,128)}', space=vmem, size = 0x2000, scoped, tag = 'scratch operand']
  #allocation3 [shape = 'f32[1,1]{1,0:T(1,128)S(1)}', space=vmem, size = 0x200, scoped, tag = 'scoped memory for transformer_encoder_forward.1']
  %s0 = inlined_call_operand.vmem [shape: s32[16,1], index: 0, kind: input, shape index: {}]
  %s1 = inlined_call_operand.vmem [shape: f32[64,32], index: 1, kind: input, shape index: {}]
  %s2 = inlined_call_operand.hbm [shape: f32[16,32], index: 2, kind: input, shape index: {}]
  %s3 = inlined_call_operand.hbm [shape: f32[16,16], index: 3, kind: input, shape index: {}]
  %s4 = inlined_call_operand.hbm [shape: f32[2,16], index: 4, kind: input, shape index: {}]
  %s5 = inlined_call_operand.vmem [shape: bf16[2,3,32,32], index: 5, kind: input, shape index: {}]
  %s6 = inlined_call_operand.hbm [shape: f32[2,3,1,32], index: 6, kind: input, shape index: {}]
  %s7 = inlined_call_operand.vmem [shape: bf16[2,32,32], index: 7, kind: input, shape index: {}]
  %s8 = inlined_call_operand.vmem [shape: f32[2,1,32], index: 8, kind: input, shape index: {}]
  %s9 = inlined_call_operand.hbm [shape: bf16[2,32,2048], index: 9, kind: input, shape index: {}]
  %s10 = inlined_call_operand.vmem [shape: f32[2,1,2048], index: 10, kind: input, shape index: {}]
  %s11 = inlined_call_operand.hbm [shape: bf16[2,32,2048], index: 11, kind: input, shape index: {}]
  %s12 = inlined_call_operand.vmem [shape: f32[2,1,32], index: 12, kind: input, shape index: {}]
  %s13 = inlined_call_operand.vmem [shape: f32[2,1,32], index: 13, kind: input, shape index: {}]
  %s14 = inlined_call_operand.vmem [shape: f32[2,1,32], index: 14, kind: input, shape index: {}]
  %s15 = inlined_call_operand.vmem [shape: f32[2,1,32], index: 15, kind: input, shape index: {}]
  %s16 = inlined_call_operand.vmem [shape: f32[2,1,32], index: 16, kind: input, shape index: {}]
  %s17 = inlined_call_operand.vmem [shape: f32[32,1], index: 17, kind: input, shape index: {}]
  %s18 = inlined_call_operand.<no memory space> [shape: f32[1,1], index: 18, kind: input, shape index: {}]
  %s19 = inlined_call_operand.vmem [shape: f32[2,1], index: 19, kind: output, shape index: {}]
  %s20 = sld [smem:[#allocation0]]
  $region141: #{transformer_encoder_forward.1} parent=0
    _
  %s22 = ssub.s32 1, %s20
  %s23 = scalar_select 0, %s22, %s20
  %v24 = vstv %s18
  %25 = vst [vmem:[#allocation3] sm:$0x1] %v24
  $region1: #{transformer_encoder_forward.1} parent=0
    #allocation4 [shape = 'u8[8192]{0}', space=vmem, size = 0x2000, scoped, tag = 'input window, operand 2, single buffered']
    #allocation5 [shape = 's32[2]{0}', space=sflag, size = 0x8, scoped, tag = 'scoped memory for transformer_encoder_forward.1']
    #allocation6 [shape = 'u8[8192]{0}', space=vmem, size = 0x2000, scoped, tag = 'input window, operand 3, single buffered']
    #allocation7 [shape = 's32[1]{0}', space=sflag, size = 0x4, scoped, tag = 'scoped memory for transformer_encoder_forward.1']
    #allocation8 [shape = 'u8[1024]{0}', space=vmem, size = 0x400, scoped, tag = 'input window, operand 4, single buffered']
    #allocation9 [shape = 'u8[3072]{0}', space=vmem, size = 0xc00, scoped, tag = 'input window, operand 6']
    #allocation10 [shape = 's32[2]{0}', space=sflag, size = 0x8, scoped, tag = 'scoped memory for transformer_encoder_forward.1']
    #allocation11 [shape = 'u8[262144]{0}', space=vmem, size = 0x40000, scoped, tag = 'input window, operand 9']
    #allocation12 [shape = 'u8[262144]{0}', space=vmem, size = 0x40000, scoped, tag = 'input window, operand 11']
    #allocation13 [shape = 's32[2]{0}', space=sflag, size = 0x8, scoped, tag = 'scoped memory for transformer_encoder_forward.1']
    %26 = vsyncpa [#allocation5], 0
    %27 = vsyncpa [#allocation7], 0
    %28 = vsyncpa [#allocation10], 0
    %s29 = scalar_lea.sflag [#allocation10], 1
    %30 = vsyncpa %s29, 0
    %31 = vsyncpa [#allocation13], 0
    %s32 = scalar_lea.sflag [#allocation13], 1
    %33 = vsyncpa %s32, 0
    loop: start=0, step=1, limit=4
    $region2: #{transformer_encoder_forward.1} parent=1 // loop_pre_header
      _
    $region3: #{transformer_encoder_forward.1} parent=1 // loop_header
      %s35 = sphi 0, %s39
      %p36 = scmp.ge.s32.totalorder %s35, 4
      %s43 = sphi 0, %s43
      %s45 = sphi 0, %s43
      %s46 = sphi 0, %s45
      %s60 = sphi 0, %s46
      %s64 = sphi 0, %s64
      %s66 = sphi 0, %s64
      %s67 = sphi 0, %s66
      %s81 = sphi 0, %s67
      %s85 = sphi 0, %s85
      %s87 = sphi 0, %s85
      %s88 = sphi 0, %s87
      %s102 = sphi 0, %s88
      %s106 = sphi 0, %s106
      %s108 = sphi 0, %s106
      %s109 = sphi 0, %s108
      %s123 = sphi 0, %s109
      %s127 = sphi 0, %s127
      %s129 = sphi 0, %s127
      %s130 = sphi 0, %s129
      %s144 = sphi 0, %s130
      %s150 = sphi 0, %s152
      %s153 = sphi 0, %s150
      %s154 = sphi 0, %s153
      %s170 = sphi 0, %s154
      %s176 = sphi 0, %s178
      %s179 = sphi 0, %s176
      %s180 = sphi 0, %s179
      %s196 = sphi 0, %s180
      %s202 = sphi 0, %s204
      %s205 = sphi 0, %s202
      %s206 = sphi 0, %s205
      %s222 = sphi 0, %s206
      %s228 = sphi 0, %s230
      %s231 = sphi 0, %s228
      %s232 = sphi 0, %s231
      %s248 = sphi 0, %s232
      %s254 = sphi 0, %s256
      %s257 = sphi 0, %s254
      %s258 = sphi 0, %s257
      %s274 = sphi 0, %s258
      %s280 = sphi 0, %s282
      %s283 = sphi 0, %s280
      %s284 = sphi 0, %s283
      %s300 = sphi 0, %s284
      %s306 = sphi 0, %s308
      %s309 = sphi 0, %s306
      %s310 = sphi 0, %s309
      %s326 = sphi 0, %s310
      %s332 = sphi 0, %s334
      %s335 = sphi 0, %s332
      %s336 = sphi 0, %s335
      %s352 = sphi 0, %s336
      %s358 = sphi 0, %s360
      %s361 = sphi 0, %s358
      %s362 = sphi 0, %s361
      %s378 = sphi 0, %s362
      %s384 = sphi 0, %s386
      %s387 = sphi 0, %s384
      %s388 = sphi 0, %s387
      %s404 = sphi 0, %s388
      %s410 = sphi 0, %s412
      %s413 = sphi 0, %s410
      %s414 = sphi 0, %s413
      %s430 = sphi 0, %s414
      %s436 = sphi 0, %s438
      %s439 = sphi 0, %s436
      %s440 = sphi 0, %s439
      %s456 = sphi 0, %s440
      %s460 = sphi 0, %s460
      %s462 = sphi 0, %s460
      %s463 = sphi 0, %s462
      %s477 = sphi 0, %s463
      %s481 = sphi 0, %s481
      %s483 = sphi 0, %s481
      %s484 = sphi 0, %s483
      %s498 = sphi 0, %s484
      %s502 = sphi 0, %s502
      %s504 = sphi 0, %s502
      %s505 = sphi 0, %s504
      %s519 = sphi 0, %s505
    $region4: #{transformer_encoder_forward.1} parent=1 // loop_header_branch
      %38 = sbr.rel (%p36) target = $region8
    $region5: #{transformer_encoder_forward.1} parent=1 // loop_body
      %s40 = ssub.s32 %s35, 1
      %s41 = ssub.s32 %s35, 2
      %s42 = sadd.s32 %s35, 1
      %s44 = sadd.s32 %s43, 1
      %p47 = scmp.eq.s32.totalorder %s35, 1
      %p48 = scmp.ne.s32.totalorder %s43, %s45
      %p49 = scmp.eq.s32.totalorder %s35, 0
      %p50 = por %p48, %p49
      %p51 = scmp.ne.s32.totalorder %s43, %s45
      %p52 = scmp.eq.s32.totalorder %s40, 1
      %p53 = por %p51, %p52
      %p54 = scmp.ne.s32.totalorder %s45, %s46
      %p55 = scmp.eq.s32.totalorder %s40, 0
      %p56 = por %p54, %p55
      %p57 = scmp.ne.s32.totalorder %s45, %s46
      %p58 = scmp.eq.s32.totalorder %s41, 1
      %p59 = por %p57, %p58
      %p61 = scmp.ne.s32.totalorder %s46, %s60
      %p62 = scmp.eq.s32.totalorder %s41, 0
      %p63 = por %p61, %p62
      %s65 = sadd.s32 %s64, 1
      %p68 = scmp.eq.s32.totalorder %s35, 1
      %p69 = scmp.ne.s32.totalorder %s64, %s66
      %p70 = scmp.eq.s32.totalorder %s35, 0
      %p71 = por %p69, %p70
      %p72 = scmp.ne.s32.totalorder %s64, %s66
      %p73 = scmp.eq.s32.totalorder %s40, 1
      %p74 = por %p72, %p73
      %p75 = scmp.ne.s32.totalorder %s66, %s67
      %p76 = scmp.eq.s32.totalorder %s40, 0
      %p77 = por %p75, %p76
      %p78 = scmp.ne.s32.totalorder %s66, %s67
      %p79 = scmp.eq.s32.totalorder %s41, 1
      %p80 = por %p78, %p79
      %p82 = scmp.ne.s32.totalorder %s67, %s81
      %p83 = scmp.eq.s32.totalorder %s41, 0
      %p84 = por %p82, %p83
      %s86 = sadd.s32 %s85, 1
      %p89 = scmp.eq.s32.totalorder %s35, 1
      %p90 = scmp.ne.s32.totalorder %s85, %s87
      %p91 = scmp.eq.s32.totalorder %s35, 0
      %p92 = por %p90, %p91
      %p93 = scmp.ne.s32.totalorder %s85, %s87
      %p94 = scmp.eq.s32.totalorder %s40, 1
      %p95 = por %p93, %p94
      %p96 = scmp.ne.s32.totalorder %s87, %s88
      %p97 = scmp.eq.s32.totalorder %s40, 0
      %p98 = por %p96, %p97
      %p99 = scmp.ne.s32.totalorder %s87, %s88
      %p100 = scmp.eq.s32.totalorder %s41, 1
      %p101 = por %p99, %p100
      %p103 = scmp.ne.s32.totalorder %s88, %s102
      %p104 = scmp.eq.s32.totalorder %s41, 0
      %p105 = por %p103, %p104
      %s107 = sadd.s32 %s106, 1
      %p110 = scmp.eq.s32.totalorder %s35, 1
      %p111 = scmp.ne.s32.totalorder %s106, %s108
      %p112 = scmp.eq.s32.totalorder %s35, 0
      %p113 = por %p111, %p112
      %p114 = scmp.ne.s32.totalorder %s106, %s108
      %p115 = scmp.eq.s32.totalorder %s40, 1
      %p116 = por %p114, %p115
      %p117 = scmp.ne.s32.totalorder %s108, %s109
      %p118 = scmp.eq.s32.totalorder %s40, 0
      %p119 = por %p117, %p118
      %p120 = scmp.ne.s32.totalorder %s108, %s109
      %p121 = scmp.eq.s32.totalorder %s41, 1
      %p122 = por %p120, %p121
      %p124 = scmp.ne.s32.totalorder %s109, %s123
      %p125 = scmp.eq.s32.totalorder %s41, 0
      %p126 = por %p124, %p125
      %s128 = sadd.s32 %s127, 1
      %p131 = scmp.eq.s32.totalorder %s35, 1
      %p132 = scmp.ne.s32.totalorder %s127, %s129
      %p133 = scmp.eq.s32.totalorder %s35, 0
      %p134 = por %p132, %p133
      %p135 = scmp.ne.s32.totalorder %s127, %s129
      %p136 = scmp.eq.s32.totalorder %s40, 1
      %p137 = por %p135, %p136
      %p138 = scmp.ne.s32.totalorder %s129, %s130
      %p139 = scmp.eq.s32.totalorder %s40, 0
      %p140 = por %p138, %p139
      %p141 = scmp.ne.s32.totalorder %s129, %s130
      %p142 = scmp.eq.s32.totalorder %s41, 1
      %p143 = por %p141, %p142
      %p145 = scmp.ne.s32.totalorder %s130, %s144
      %p146 = scmp.eq.s32.totalorder %s41, 0
      %p147 = por %p145, %p146
      %s148 = ssub.s32 %s35, %s42
      %p149 = scmp.eq.s32.totalorder %s148, 0
      %s151 = sadd.s32 %s150, 1
      %s152 = scalar_select %p149, %s150, %s151
      %p155 = pneg %p149
      %p156 = scmp.eq.s32.totalorder %s35, 1
      %p157 = por %p155, %p156
      %p158 = scmp.ne.s32.totalorder %s150, %s153
      %p159 = scmp.eq.s32.totalorder %s35, 0
      %p160 = por %p158, %p159
      %p161 = scmp.ne.s32.totalorder %s150, %s153
      %p162 = scmp.eq.s32.totalorder %s40, 1
      %p163 = por %p161, %p162
      %p164 = scmp.ne.s32.totalorder %s153, %s154
      %p165 = scmp.eq.s32.totalorder %s40, 0
      %p166 = por %p164, %p165
      %p167 = scmp.ne.s32.totalorder %s153, %s154
      %p168 = scmp.eq.s32.totalorder %s41, 1
      %p169 = por %p167, %p168
      %p171 = scmp.ne.s32.totalorder %s154, %s170
      %p172 = scmp.eq.s32.totalorder %s41, 0
      %p173 = por %p171, %p172
      %s174 = ssub.s32 %s35, %s42
      %p175 = scmp.eq.s32.totalorder %s174, 0
      %s177 = sadd.s32 %s176, 1
      %s178 = scalar_select %p175, %s176, %s177
      %p181 = pneg %p175
      %p182 = scmp.eq.s32.totalorder %s35, 1
      %p183 = por %p181, %p182
      %p184 = scmp.ne.s32.totalorder %s176, %s179
      %p185 = scmp.eq.s32.totalorder %s35, 0
      %p186 = por %p184, %p185
      %p187 = scmp.ne.s32.totalorder %s176, %s179
      %p188 = scmp.eq.s32.totalorder %s40, 1
      %p189 = por %p187, %p188
      %p190 = scmp.ne.s32.totalorder %s179, %s180
      %p191 = scmp.eq.s32.totalorder %s40, 0
      %p192 = por %p190, %p191
      %p193 = scmp.ne.s32.totalorder %s179, %s180
      %p194 = scmp.eq.s32.totalorder %s41, 1
      %p195 = por %p193, %p194
      %p197 = scmp.ne.s32.totalorder %s180, %s196
      %p198 = scmp.eq.s32.totalorder %s41, 0
      %p199 = por %p197, %p198
      %s200 = ssub.s32 %s35, %s42
      %p201 = scmp.eq.s32.totalorder %s200, 0
      %s203 = sadd.s32 %s202, 1
      %s204 = scalar_select %p201, %s202, %s203
      %p207 = pneg %p201
      %p208 = scmp.eq.s32.totalorder %s35, 1
      %p209 = por %p207, %p208
      %p210 = scmp.ne.s32.totalorder %s202, %s205
      %p211 = scmp.eq.s32.totalorder %s35, 0
      %p212 = por %p210, %p211
      %p213 = scmp.ne.s32.totalorder %s202, %s205
      %p214 = scmp.eq.s32.totalorder %s40, 1
      %p215 = por %p213, %p214
      %p216 = scmp.ne.s32.totalorder %s205, %s206
      %p217 = scmp.eq.s32.totalorder %s40, 0
      %p218 = por %p216, %p217
      %p219 = scmp.ne.s32.totalorder %s205, %s206
      %p220 = scmp.eq.s32.totalorder %s41, 1
      %p221 = por %p219, %p220
      %p223 = scmp.ne.s32.totalorder %s206, %s222
      %p224 = scmp.eq.s32.totalorder %s41, 0
      %p225 = por %p223, %p224
      %s226 = ssub.s32 %s35, %s42
      %p227 = scmp.eq.s32.totalorder %s226, 0
      %s229 = sadd.s32 %s228, 1
      %s230 = scalar_select %p227, %s228, %s229
      %p233 = pneg %p227
      %p234 = scmp.eq.s32.totalorder %s35, 1
      %p235 = por %p233, %p234
      %p236 = scmp.ne.s32.totalorder %s228, %s231
      %p237 = scmp.eq.s32.totalorder %s35, 0
      %p238 = por %p236, %p237
      %p239 = scmp.ne.s32.totalorder %s228, %s231
      %p240 = scmp.eq.s32.totalorder %s40, 1
      %p241 = por %p239, %p240
      %p242 = scmp.ne.s32.totalorder %s231, %s232
      %p243 = scmp.eq.s32.totalorder %s40, 0
      %p244 = por %p242, %p243
      %p245 = scmp.ne.s32.totalorder %s231, %s232
      %p246 = scmp.eq.s32.totalorder %s41, 1
      %p247 = por %p245, %p246
      %p249 = scmp.ne.s32.totalorder %s232, %s248
      %p250 = scmp.eq.s32.totalorder %s41, 0
      %p251 = por %p249, %p250
      %s252 = ssub.s32 %s35, %s42
      %p253 = scmp.eq.s32.totalorder %s252, 0
      %s255 = sadd.s32 %s254, 1
      %s256 = scalar_select %p253, %s254, %s255
      %p259 = pneg %p253
      %p260 = scmp.eq.s32.totalorder %s35, 1
      %p261 = por %p259, %p260
      %p262 = scmp.ne.s32.totalorder %s254, %s257
      %p263 = scmp.eq.s32.totalorder %s35, 0
      %p264 = por %p262, %p263
      %p265 = scmp.ne.s32.totalorder %s254, %s257
      %p266 = scmp.eq.s32.totalorder %s40, 1
      %p267 = por %p265, %p266
      %p268 = scmp.ne.s32.totalorder %s257, %s258
      %p269 = scmp.eq.s32.totalorder %s40, 0
      %p270 = por %p268, %p269
      %p271 = scmp.ne.s32.totalorder %s257, %s258
      %p272 = scmp.eq.s32.totalorder %s41, 1
      %p273 = por %p271, %p272
      %p275 = scmp.ne.s32.totalorder %s258, %s274
      %p276 = scmp.eq.s32.totalorder %s41, 0
      %p277 = por %p275, %p276
      %s278 = ssub.s32 %s35, %s42
      %p279 = scmp.eq.s32.totalorder %s278, 0
      %s281 = sadd.s32 %s280, 1
      %s282 = scalar_select %p279, %s280, %s281
      %p285 = pneg %p279
      %p286 = scmp.eq.s32.totalorder %s35, 1
      %p287 = por %p285, %p286
      %p288 = scmp.ne.s32.totalorder %s280, %s283
      %p289 = scmp.eq.s32.totalorder %s35, 0
      %p290 = por %p288, %p289
      %p291 = scmp.ne.s32.totalorder %s280, %s283
      %p292 = scmp.eq.s32.totalorder %s40, 1
      %p293 = por %p291, %p292
      %p294 = scmp.ne.s32.totalorder %s283, %s284
      %p295 = scmp.eq.s32.totalorder %s40, 0
      %p296 = por %p294, %p295
      %p297 = scmp.ne.s32.totalorder %s283, %s284
      %p298 = scmp.eq.s32.totalorder %s41, 1
      %p299 = por %p297, %p298
      %p301 = scmp.ne.s32.totalorder %s284, %s300
      %p302 = scmp.eq.s32.totalorder %s41, 0
      %p303 = por %p301, %p302
      %s304 = ssub.s32 %s35, %s42
      %p305 = scmp.eq.s32.totalorder %s304, 0
      %s307 = sadd.s32 %s306, 1
      %s308 = scalar_select %p305, %s306, %s307
      %p311 = pneg %p305
      %p312 = scmp.eq.s32.totalorder %s35, 1
      %p313 = por %p311, %p312
      %p314 = scmp.ne.s32.totalorder %s306, %s309
      %p315 = scmp.eq.s32.totalorder %s35, 0
      %p316 = por %p314, %p315
      %p317 = scmp.ne.s32.totalorder %s306, %s309
      %p318 = scmp.eq.s32.totalorder %s40, 1
      %p319 = por %p317, %p318
      %p320 = scmp.ne.s32.totalorder %s309, %s310
      %p321 = scmp.eq.s32.totalorder %s40, 0
      %p322 = por %p320, %p321
      %p323 = scmp.ne.s32.totalorder %s309, %s310
      %p324 = scmp.eq.s32.totalorder %s41, 1
      %p325 = por %p323, %p324
      %p327 = scmp.ne.s32.totalorder %s310, %s326
      %p328 = scmp.eq.s32.totalorder %s41, 0
      %p329 = por %p327, %p328
      %s330 = ssub.s32 %s35, %s42
      %p331 = scmp.eq.s32.totalorder %s330, 0
      %s333 = sadd.s32 %s332, 1
      %s334 = scalar_select %p331, %s332, %s333
      %p337 = pneg %p331
      %p338 = scmp.eq.s32.totalorder %s35, 1
      %p339 = por %p337, %p338
      %p340 = scmp.ne.s32.totalorder %s332, %s335
      %p341 = scmp.eq.s32.totalorder %s35, 0
      %p342 = por %p340, %p341
      %p343 = scmp.ne.s32.totalorder %s332, %s335
      %p344 = scmp.eq.s32.totalorder %s40, 1
      %p345 = por %p343, %p344
      %p346 = scmp.ne.s32.totalorder %s335, %s336
      %p347 = scmp.eq.s32.totalorder %s40, 0
      %p348 = por %p346, %p347
      %p349 = scmp.ne.s32.totalorder %s335, %s336
      %p350 = scmp.eq.s32.totalorder %s41, 1
      %p351 = por %p349, %p350
      %p353 = scmp.ne.s32.totalorder %s336, %s352
      %p354 = scmp.eq.s32.totalorder %s41, 0
      %p355 = por %p353, %p354
      %s356 = ssub.s32 %s35, %s42
      %p357 = scmp.eq.s32.totalorder %s356, 0
      %s359 = sadd.s32 %s358, 1
      %s360 = scalar_select %p357, %s358, %s359
      %p363 = pneg %p357
      %p364 = scmp.eq.s32.totalorder %s35, 1
      %p365 = por %p363, %p364
      %p366 = scmp.ne.s32.totalorder %s358, %s361
      %p367 = scmp.eq.s32.totalorder %s35, 0
      %p368 = por %p366, %p367
      %p369 = scmp.ne.s32.totalorder %s358, %s361
      %p370 = scmp.eq.s32.totalorder %s40, 1
      %p371 = por %p369, %p370
      %p372 = scmp.ne.s32.totalorder %s361, %s362
      %p373 = scmp.eq.s32.totalorder %s40, 0
      %p374 = por %p372, %p373
      %p375 = scmp.ne.s32.totalorder %s361, %s362
      %p376 = scmp.eq.s32.totalorder %s41, 1
      %p377 = por %p375, %p376
      %p379 = scmp.ne.s32.totalorder %s362, %s378
      %p380 = scmp.eq.s32.totalorder %s41, 0
      %p381 = por %p379, %p380
      %s382 = ssub.s32 %s35, %s42
      %p383 = scmp.eq.s32.totalorder %s382, 0
      %s385 = sadd.s32 %s384, 1
      %s386 = scalar_select %p383, %s384, %s385
      %p389 = pneg %p383
      %p390 = scmp.eq.s32.totalorder %s35, 1
      %p391 = por %p389, %p390
      %p392 = scmp.ne.s32.totalorder %s384, %s387
      %p393 = scmp.eq.s32.totalorder %s35, 0
      %p394 = por %p392, %p393
      %p395 = scmp.ne.s32.totalorder %s384, %s387
      %p396 = scmp.eq.s32.totalorder %s40, 1
      %p397 = por %p395, %p396
      %p398 = scmp.ne.s32.totalorder %s387, %s388
      %p399 = scmp.eq.s32.totalorder %s40, 0
      %p400 = por %p398, %p399
      %p401 = scmp.ne.s32.totalorder %s387, %s388
      %p402 = scmp.eq.s32.totalorder %s41, 1
      %p403 = por %p401, %p402
      %p405 = scmp.ne.s32.totalorder %s388, %s404
      %p406 = scmp.eq.s32.totalorder %s41, 0
      %p407 = por %p405, %p406
      %s408 = ssub.s32 %s35, %s42
      %p409 = scmp.eq.s32.totalorder %s408, 0
      %s411 = sadd.s32 %s410, 1
      %s412 = scalar_select %p409, %s410, %s411
      %p415 = pneg %p409
      %p416 = scmp.eq.s32.totalorder %s35, 1
      %p417 = por %p415, %p416
      %p418 = scmp.ne.s32.totalorder %s410, %s413
      %p419 = scmp.eq.s32.totalorder %s35, 0
      %p420 = por %p418, %p419
      %p421 = scmp.ne.s32.totalorder %s410, %s413
      %p422 = scmp.eq.s32.totalorder %s40, 1
      %p423 = por %p421, %p422
      %p424 = scmp.ne.s32.totalorder %s413, %s414
      %p425 = scmp.eq.s32.totalorder %s40, 0
      %p426 = por %p424, %p425
      %p427 = scmp.ne.s32.totalorder %s413, %s414
      %p428 = scmp.eq.s32.totalorder %s41, 1
      %p429 = por %p427, %p428
      %p431 = scmp.ne.s32.totalorder %s414, %s430
      %p432 = scmp.eq.s32.totalorder %s41, 0
      %p433 = por %p431, %p432
      %s434 = ssub.s32 %s35, %s42
      %p435 = scmp.eq.s32.totalorder %s434, 0
      %s437 = sadd.s32 %s436, 1
      %s438 = scalar_select %p435, %s436, %s437
      %p441 = pneg %p435
      %p442 = scmp.eq.s32.totalorder %s35, 1
      %p443 = por %p441, %p442
      %p444 = scmp.ne.s32.totalorder %s436, %s439
      %p445 = scmp.eq.s32.totalorder %s35, 0
      %p446 = por %p444, %p445
      %p447 = scmp.ne.s32.totalorder %s436, %s439
      %p448 = scmp.eq.s32.totalorder %s40, 1
      %p449 = por %p447, %p448
      %p450 = scmp.ne.s32.totalorder %s439, %s440
      %p451 = scmp.eq.s32.totalorder %s40, 0
      %p452 = por %p450, %p451
      %p453 = scmp.ne.s32.totalorder %s439, %s440
      %p454 = scmp.eq.s32.totalorder %s41, 1
      %p455 = por %p453, %p454
      %p457 = scmp.ne.s32.totalorder %s440, %s456
      %p458 = scmp.eq.s32.totalorder %s41, 0
      %p459 = por %p457, %p458
      %s461 = sadd.s32 %s460, 1
      %p464 = scmp.eq.s32.totalorder %s35, 1
      %p465 = scmp.ne.s32.totalorder %s460, %s462
      %p466 = scmp.eq.s32.totalorder %s35, 0
      %p467 = por %p465, %p466
      %p468 = scmp.ne.s32.totalorder %s460, %s462
      %p469 = scmp.eq.s32.totalorder %s40, 1
      %p470 = por %p468, %p469
      %p471 = scmp.ne.s32.totalorder %s462, %s463
      %p472 = scmp.eq.s32.totalorder %s40, 0
      %p473 = por %p471, %p472
      %p474 = scmp.ne.s32.totalorder %s462, %s463
      %p475 = scmp.eq.s32.totalorder %s41, 1
      %p476 = por %p474, %p475
      %p478 = scmp.ne.s32.totalorder %s463, %s477
      %p479 = scmp.eq.s32.totalorder %s41, 0
      %p480 = por %p478, %p479
      %s482 = sadd.s32 %s481, 1
      %p485 = scmp.eq.s32.totalorder %s35, 1
      %p486 = scmp.ne.s32.totalorder %s481, %s483
      %p487 = scmp.eq.s32.totalorder %s35, 0
      %p488 = por %p486, %p487
      %p489 = scmp.ne.s32.totalorder %s481, %s483
      %p490 = scmp.eq.s32.totalorder %s40, 1
      %p491 = por %p489, %p490
      %p492 = scmp.ne.s32.totalorder %s483, %s484
      %p493 = scmp.eq.s32.totalorder %s40, 0
      %p494 = por %p492, %p493
      %p495 = scmp.ne.s32.totalorder %s483, %s484
      %p496 = scmp.eq.s32.totalorder %s41, 1
      %p497 = por %p495, %p496
      %p499 = scmp.ne.s32.totalorder %s484, %s498
      %p500 = scmp.eq.s32.totalorder %s41, 0
      %p501 = por %p499, %p500
      %s503 = sadd.s32 %s502, 1
      %p506 = scmp.eq.s32.totalorder %s35, 1
      %p507 = scmp.ne.s32.totalorder %s502, %s504
      %p508 = scmp.eq.s32.totalorder %s35, 0
      %p509 = por %p507, %p508
      %p510 = scmp.ne.s32.totalorder %s502, %s504
      %p511 = scmp.eq.s32.totalorder %s40, 1
      %p512 = por %p510, %p511
      %p513 = scmp.ne.s32.totalorder %s504, %s505
      %p514 = scmp.eq.s32.totalorder %s40, 0
      %p515 = por %p513, %p514
      %p516 = scmp.ne.s32.totalorder %s504, %s505
      %p517 = scmp.eq.s32.totalorder %s41, 1
      %p518 = por %p516, %p517
      %p520 = scmp.ne.s32.totalorder %s505, %s519
      %p521 = scmp.eq.s32.totalorder %s41, 0
      %p522 = por %p520, %p521
      %p523 = scmp.le.s32.totalorder 1, %s35
      %p524 = scmp.lt.s32.totalorder %s35, 3
      %p525 = pnand %p523, %p524
      %p526 = pneg %p525
      // Predicated region
      $region9: #{transformer_encoder_forward.1} parent=5 // pred_check
        _
      $region10: #{transformer_encoder_forward.1} parent=5 // pred_check_branch
        %528 = sbr.rel (%p525) target = $region12
      $region11: #{transformer_encoder_forward.1} parent=5 // pred_region
        %s529 = ssub.s32 %s35, 1
        // Predicated region
        $region13: #{transformer_encoder_forward.1} parent=11 // pred_check
          %p530 = pneg %p56
        $region14: #{transformer_encoder_forward.1} parent=11 // pred_check_branch
          %532 = sbr.rel (%p530) target = $region16
        $region15: #{transformer_encoder_forward.1} parent=11 // pred_region
          _
        $region16: #{transformer_encoder_forward.1} parent=11 // pred_fallthru
          _
        // Predicated region
        $region17: #{transformer_encoder_forward.1} parent=11 // pred_check
          %p533 = pneg %p77
        $region18: #{transformer_encoder_forward.1} parent=11 // pred_check_branch
          %535 = sbr.rel (%p533) target = $region20
        $region19: #{transformer_encoder_forward.1} parent=11 // pred_region
          _
        $region20: #{transformer_encoder_forward.1} parent=11 // pred_fallthru
          _
        // Predicated region
        $region21: #{transformer_encoder_forward.1} parent=11 // pred_check
          %p536 = pneg %p98
        $region22: #{transformer_encoder_forward.1} parent=11 // pred_check_branch
          %538 = sbr.rel (%p536) target = $region24
        $region23: #{transformer_encoder_forward.1} parent=11 // pred_region
          %s540 = ssub.s32 256, 256
          %541 = vsyncadd [#allocation5], %s540
          %s542 = sshll.u32 [#allocation4], 4
          %s543 = int_to_ptr.vmem [resolvable:$true] %s542
          %548 = dma.hbm_to_vmem [thread:$0]  %s2, 256, %s543, [#allocation5], 128, 128, 8
        $region24: #{transformer_encoder_forward.1} parent=11 // pred_fallthru
          _
        // Predicated region
        $region25: #{transformer_encoder_forward.1} parent=11 // pred_check
          %p549 = pneg %p119
        $region26: #{transformer_encoder_forward.1} parent=11 // pred_check_branch
          %551 = sbr.rel (%p549) target = $region28
        $region27: #{transformer_encoder_forward.1} parent=11 // pred_region
          %s553 = ssub.s32 256, 256
          %554 = vsyncadd [#allocation7], %s553
          %s555 = sshll.u32 [#allocation6], 4
          %s556 = int_to_ptr.vmem [resolvable:$true] %s555
          %561 = dma.hbm_to_vmem [thread:$0]  %s3, 256, %s556, [#allocation7], 128, 128, 8
        $region28: #{transformer_encoder_forward.1} parent=11 // pred_fallthru
          _
        // Predicated region
        $region29: #{transformer_encoder_forward.1} parent=11 // pred_check
          %p562 = pneg %p140
        $region30: #{transformer_encoder_forward.1} parent=11 // pred_check_branch
          %564 = sbr.rel (%p562) target = $region32
        $region31: #{transformer_encoder_forward.1} parent=11 // pred_region
          %s566 = ssub.s32 32, 32
          %567 = vsyncadd [#allocation7], %s566
          %s569 = sshll.u32 [#allocation8], 4
          %s570 = int_to_ptr.vmem [resolvable:$true] %s569
          %572 = dma.hbm_to_vmem [thread:$0]  %s4, 32, %s570, [#allocation7]
        $region32: #{transformer_encoder_forward.1} parent=11 // pred_fallthru
          _
        // Predicated region
        $region33: #{transformer_encoder_forward.1} parent=11 // pred_check
          %p573 = pneg %p473
        $region34: #{transformer_encoder_forward.1} parent=11 // pred_check_branch
          %575 = sbr.rel (%p573) target = $region36
        $region35: #{transformer_encoder_forward.1} parent=11 // pred_region
          _
        $region36: #{transformer_encoder_forward.1} parent=11 // pred_fallthru
          _
        // Predicated region
        $region37: #{transformer_encoder_forward.1} parent=11 // pred_check
          %p576 = pneg %p494
        $region38: #{transformer_encoder_forward.1} parent=11 // pred_check_branch
          %578 = sbr.rel (%p576) target = $region40
        $region39: #{transformer_encoder_forward.1} parent=11 // pred_region
          _
        $region40: #{transformer_encoder_forward.1} parent=11 // pred_fallthru
          _
      $region12: #{transformer_encoder_forward.1} parent=5 // pred_fallthru
        _
      %p579 = scmp.lt.s32.totalorder %s35, 2
      // Predicated region
      $region41: #{transformer_encoder_forward.1} parent=5 // pred_check
        %p580 = pneg %p579
      $region42: #{transformer_encoder_forward.1} parent=5 // pred_check_branch
        %582 = sbr.rel (%p580) target = $region44
      $region43: #{transformer_encoder_forward.1} parent=5 // pred_region
        // Predicated region
        $region45: #{transformer_encoder_forward.1} parent=43 // pred_check
          %p583 = pneg %p160
        $region46: #{transformer_encoder_forward.1} parent=43 // pred_check_branch
          %585 = sbr.rel (%p583) target = $region48
        $region47: #{transformer_encoder_forward.1} parent=43 // pred_region
          %p586 = scmp.lt.s32.totalorder %s35, 1
          %s587 = scalar_select %p586, %s35, 1
          %s588 = smul.addr %s587, 12
          %s589 = smul.addr %s588, 4
          %s590 = scalar_lea.vmem %s5, %s589
        $region48: #{transformer_encoder_forward.1} parent=43 // pred_fallthru
          _
        // Predicated region
        $region49: #{transformer_encoder_forward.1} parent=43 // pred_check
          %p591 = pneg %p186
        $region50: #{transformer_encoder_forward.1} parent=43 // pred_check_branch
          %593 = sbr.rel (%p591) target = $region52
        $region51: #{transformer_encoder_forward.1} parent=43 // pred_region
          %s594 = sand.u32 %s35, 1
          %s595 = scalar_lea.sflag [#allocation10], %s594
          %s596 = sand.u32 %s176, 1
          %s597 = smul.addr %s596, 3
          %s598 = scalar_lea.vmem [#allocation9], %s597
          %s600 = ssub.s32 48, 48
          %601 = vsyncadd %s595, %s600
          %s602 = smul.addr %s35, 3
          %s603 = smul.addr %s602, 16
          %s604 = scalar_lea.hbm %s6, %s603
          %s605 = sshll.u32 %s598, 4
          %s606 = int_to_ptr.vmem [resolvable:$true] %s605
          %611 = dma.hbm_to_vmem [thread:$0]  %s604, 48, %s606, %s595, 16, 16, 1
        $region52: #{transformer_encoder_forward.1} parent=43 // pred_fallthru
          _
        // Predicated region
        $region53: #{transformer_encoder_forward.1} parent=43 // pred_check
          %p612 = pneg %p212
        $region54: #{transformer_encoder_forward.1} parent=43 // pred_check_branch
          %614 = sbr.rel (%p612) target = $region56
        $region55: #{transformer_encoder_forward.1} parent=43 // pred_region
          %p615 = scmp.lt.s32.totalorder %s35, 1
          %s616 = scalar_select %p615, %s35, 1
          %s617 = smul.addr %s616, 4
          %s618 = smul.addr %s617, 4
          %s619 = scalar_lea.vmem %s7, %s618
        $region56: #{transformer_encoder_forward.1} parent=43 // pred_fallthru
          _
        // Predicated region
        $region57: #{transformer_encoder_forward.1} parent=43 // pred_check
          %p620 = pneg %p238
        $region58: #{transformer_encoder_forward.1} parent=43 // pred_check_branch
          %622 = sbr.rel (%p620) target = $region60
        $region59: #{transformer_encoder_forward.1} parent=43 // pred_region
          %p623 = scmp.lt.s32.totalorder %s35, 1
          %s624 = scalar_select %p623, %s35, 1
          %s625 = scalar_lea.vmem %s8, %s624
        $region60: #{transformer_encoder_forward.1} parent=43 // pred_fallthru
          _
        // Predicated region
        $region61: #{transformer_encoder_forward.1} parent=43 // pred_check
          %p626 = pneg %p264
        $region62: #{transformer_encoder_forward.1} parent=43 // pred_check_branch
          %628 = sbr.rel (%p626) target = $region64
        $region63: #{transformer_encoder_forward.1} parent=43 // pred_region
          %s629 = sand.u32 %s35, 1
          %s630 = scalar_lea.sflag [#allocation10], %s629
          %s631 = sand.u32 %s254, 1
          %s632 = smul.addr %s631, 256
          %s633 = scalar_lea.vmem [#allocation11], %s632
          %s635 = ssub.s32 4096, 4096
          %636 = vsyncadd %s630, %s635
          %s637 = smul.addr %s35, 64
          %s638 = smul.addr %s637, 64
          %s639 = scalar_lea.hbm %s9, %s638
          %s640 = sshll.u32 %s633, 4
          %s641 = int_to_ptr.vmem [resolvable:$true] %s640
          %646 = dma.hbm_to_vmem [thread:$0]  %s639, 4096, %s641, %s630, 1024, 1024, 64
        $region64: #{transformer_encoder_forward.1} parent=43 // pred_fallthru
          _
        // Predicated region
        $region65: #{transformer_encoder_forward.1} parent=43 // pred_check
          %p647 = pneg %p290
        $region66: #{transformer_encoder_forward.1} parent=43 // pred_check_branch
          %649 = sbr.rel (%p647) target = $region68
        $region67: #{transformer_encoder_forward.1} parent=43 // pred_region
          %p650 = scmp.lt.s32.totalorder %s35, 1
          %s651 = scalar_select %p650, %s35, 1
          %s652 = smul.addr %s651, 16
          %s653 = scalar_lea.vmem %s10, %s652
        $region68: #{transformer_encoder_forward.1} parent=43 // pred_fallthru
          _
        // Predicated region
        $region69: #{transformer_encoder_forward.1} parent=43 // pred_check
          %p654 = pneg %p316
        $region70: #{transformer_encoder_forward.1} parent=43 // pred_check_branch
          %656 = sbr.rel (%p654) target = $region72
        $region71: #{transformer_encoder_forward.1} parent=43 // pred_region
          %s657 = sand.u32 %s306, 1
          %s658 = scalar_lea.sflag [#allocation13], %s657
          %s659 = sand.u32 %s306, 1
          %s660 = smul.addr %s659, 256
          %s661 = scalar_lea.vmem [#allocation12], %s660
          %s663 = ssub.s32 4096, 4096
          %664 = vsyncadd %s658, %s663
          %s665 = smul.addr %s35, 64
          %s666 = smul.addr %s665, 64
          %s667 = scalar_lea.hbm %s11, %s666
          %s668 = sshll.u32 %s661, 4
          %s669 = int_to_ptr.vmem [resolvable:$true] %s668
          %674 = dma.hbm_to_vmem [thread:$0]  %s667, 4096, %s669, %s658, 1024, 1024, 64
        $region72: #{transformer_encoder_forward.1} parent=43 // pred_fallthru
          _
        // Predicated region
        $region73: #{transformer_encoder_forward.1} parent=43 // pred_check
          %p675 = pneg %p342
        $region74: #{transformer_encoder_forward.1} parent=43 // pred_check_branch
          %677 = sbr.rel (%p675) target = $region76
        $region75: #{transformer_encoder_forward.1} parent=43 // pred_region
          %p678 = scmp.lt.s32.totalorder %s35, 1
          %s679 = scalar_select %p678, %s35, 1
          %s680 = scalar_lea.vmem %s12, %s679
        $region76: #{transformer_encoder_forward.1} parent=43 // pred_fallthru
          _
        // Predicated region
        $region77: #{transformer_encoder_forward.1} parent=43 // pred_check
          %p681 = pneg %p368
        $region78: #{transformer_encoder_forward.1} parent=43 // pred_check_branch
          %683 = sbr.rel (%p681) target = $region80
        $region79: #{transformer_encoder_forward.1} parent=43 // pred_region
          %p684 = scmp.lt.s32.totalorder %s35, 1
          %s685 = scalar_select %p684, %s35, 1
          %s686 = scalar_lea.vmem %s13, %s685
        $region80: #{transformer_encoder_forward.1} parent=43 // pred_fallthru
          _
        // Predicated region
        $region81: #{transformer_encoder_forward.1} parent=43 // pred_check
          %p687 = pneg %p394
        $region82: #{transformer_encoder_forward.1} parent=43 // pred_check_branch
          %689 = sbr.rel (%p687) target = $region84
        $region83: #{transformer_encoder_forward.1} parent=43 // pred_region
          %p690 = scmp.lt.s32.totalorder %s35, 1
          %s691 = scalar_select %p690, %s35, 1
          %s692 = scalar_lea.vmem %s14, %s691
        $region84: #{transformer_encoder_forward.1} parent=43 // pred_fallthru
          _
        // Predicated region
        $region85: #{transformer_encoder_forward.1} parent=43 // pred_check
          %p693 = pneg %p420
        $region86: #{transformer_encoder_forward.1} parent=43 // pred_check_branch
          %695 = sbr.rel (%p693) target = $region88
        $region87: #{transformer_encoder_forward.1} parent=43 // pred_region
          %p696 = scmp.lt.s32.totalorder %s35, 1
          %s697 = scalar_select %p696, %s35, 1
          %s698 = scalar_lea.vmem %s15, %s697
        $region88: #{transformer_encoder_forward.1} parent=43 // pred_fallthru
          _
        // Predicated region
        $region89: #{transformer_encoder_forward.1} parent=43 // pred_check
          %p699 = pneg %p446
        $region90: #{transformer_encoder_forward.1} parent=43 // pred_check_branch
          %701 = sbr.rel (%p699) target = $region92
        $region91: #{transformer_encoder_forward.1} parent=43 // pred_region
          %p702 = scmp.lt.s32.totalorder %s35, 1
          %s703 = scalar_select %p702, %s35, 1
          %s704 = scalar_lea.vmem %s16, %s703
        $region92: #{transformer_encoder_forward.1} parent=43 // pred_fallthru
          _
      $region44: #{transformer_encoder_forward.1} parent=5 // pred_fallthru
        _
      %p705 = scmp.le.s32.totalorder 1, %s35
      %p706 = scmp.lt.s32.totalorder %s35, 3
      %p707 = pnand %p705, %p706
      %p708 = pneg %p707
      // Predicated region
      $region93: #{transformer_encoder_forward.1} parent=5 // pred_check
        _
      $region94: #{transformer_encoder_forward.1} parent=5 // pred_check_branch
        %710 = sbr.rel (%p707) target = $region96
      $region95: #{transformer_encoder_forward.1} parent=5 // pred_region
        %s711 = ssub.s32 %s35, 1
        // Predicated region
        $region97: #{transformer_encoder_forward.1} parent=95 // pred_check
          %p712 = pneg %p98
        $region98: #{transformer_encoder_forward.1} parent=95 // pred_check_branch
          %714 = sbr.rel (%p712) target = $region100
        $region99: #{transformer_encoder_forward.1} parent=95 // pred_region
          %715 = dma.done [#allocation5], 256
        $region100: #{transformer_encoder_forward.1} parent=95 // pred_fallthru
          _
        // Predicated region
        $region101: #{transformer_encoder_forward.1} parent=95 // pred_check
          %p716 = pneg %p119
        $region102: #{transformer_encoder_forward.1} parent=95 // pred_check_branch
          %718 = sbr.rel (%p716) target = $region104
        $region103: #{transformer_encoder_forward.1} parent=95 // pred_region
          %719 = dma.done [#allocation7], 256
        $region104: #{transformer_encoder_forward.1} parent=95 // pred_fallthru
          _
        // Predicated region
        $region105: #{transformer_encoder_forward.1} parent=95 // pred_check
          %p720 = pneg %p140
        $region106: #{transformer_encoder_forward.1} parent=95 // pred_check_branch
          %722 = sbr.rel (%p720) target = $region108
        $region107: #{transformer_encoder_forward.1} parent=95 // pred_region
          %723 = dma.done [#allocation7], 32
        $region108: #{transformer_encoder_forward.1} parent=95 // pred_fallthru
          _
        %s724 = sand.u32 %s40, 1
        %s725 = scalar_lea.sflag [#allocation10], %s724
        %s726 = sand.u32 %s179, 1
        %s727 = smul.addr %s726, 3
        %s728 = scalar_lea.vmem [#allocation9], %s727
        // Predicated region
        $region109: #{transformer_encoder_forward.1} parent=95 // pred_check
          %p729 = pneg %p192
        $region110: #{transformer_encoder_forward.1} parent=95 // pred_check_branch
          %731 = sbr.rel (%p729) target = $region112
        $region111: #{transformer_encoder_forward.1} parent=95 // pred_region
          %732 = dma.done %s725, 48
        $region112: #{transformer_encoder_forward.1} parent=95 // pred_fallthru
          _
        %s733 = sand.u32 %s40, 1
        %s734 = scalar_lea.sflag [#allocation10], %s733
        %s735 = sand.u32 %s257, 1
        %s736 = smul.addr %s735, 256
        %s737 = scalar_lea.vmem [#allocation11], %s736
        // Predicated region
        $region113: #{transformer_encoder_forward.1} parent=95 // pred_check
          %p738 = pneg %p270
        $region114: #{transformer_encoder_forward.1} parent=95 // pred_check_branch
          %740 = sbr.rel (%p738) target = $region116
        $region115: #{transformer_encoder_forward.1} parent=95 // pred_region
          %741 = dma.done %s734, 4096
        $region116: #{transformer_encoder_forward.1} parent=95 // pred_fallthru
          _
        %s742 = sand.u32 %s309, 1
        %s743 = scalar_lea.sflag [#allocation13], %s742
        %s744 = sand.u32 %s309, 1
        %s745 = smul.addr %s744, 256
        %s746 = scalar_lea.vmem [#allocation12], %s745
        // Predicated region
        $region117: #{transformer_encoder_forward.1} parent=95 // pred_check
          %p747 = pneg %p322
        $region118: #{transformer_encoder_forward.1} parent=95 // pred_check_branch
          %749 = sbr.rel (%p747) target = $region120
        $region119: #{transformer_encoder_forward.1} parent=95 // pred_region
          %750 = dma.done %s743, 4096
        $region120: #{transformer_encoder_forward.1} parent=95 // pred_fallthru
          _
        %p751 = pneg %p56
        %p752 = pneg %p53
        %p753 = pneg %p77
        %p754 = pneg %p74
        %p755 = pneg %p98
        %p756 = pneg %p95
        %p757 = pneg %p119
        %p758 = pneg %p116
        %p759 = pneg %p140
        %p760 = pneg %p137
        %p761 = scmp.lt.s32.totalorder %s40, 1
        %s762 = scalar_select %p761, %s40, 1
        %s763 = smul.addr %s762, 12
        %s764 = smul.addr %s763, 4
        %s765 = scalar_lea.vmem %s5, %s764
        %p766 = pneg %p166
        %p767 = pneg %p163
        %s768 = sand.u32 %s40, 1
        %s769 = scalar_lea.sflag [#allocation10], %s768
        %s770 = sand.u32 %s179, 1
        %s771 = smul.addr %s770, 3
        %s772 = scalar_lea.vmem [#allocation9], %s771
        %p773 = pneg %p192
        %p774 = pneg %p189
        %p775 = scmp.lt.s32.totalorder %s40, 1
        %s776 = scalar_select %p775, %s40, 1
        %s777 = smul.addr %s776, 4
        %s778 = smul.addr %s777, 4
        %s779 = scalar_lea.vmem %s7, %s778
        %p780 = pneg %p218
        %p781 = pneg %p215
        %p782 = scmp.lt.s32.totalorder %s40, 1
        %s783 = scalar_select %p782, %s40, 1
        %s784 = scalar_lea.vmem %s8, %s783
        %p785 = pneg %p244
        %p786 = pneg %p241
        %s787 = sand.u32 %s40, 1
        %s788 = scalar_lea.sflag [#allocation10], %s787
        %s789 = sand.u32 %s257, 1
        %s790 = smul.addr %s789, 256
        %s791 = scalar_lea.vmem [#allocation11], %s790
        %p792 = pneg %p270
        %p793 = pneg %p267
        %p794 = scmp.lt.s32.totalorder %s40, 1
        %s795 = scalar_select %p794, %s40, 1
        %s796 = smul.addr %s795, 16
        %s797 = scalar_lea.vmem %s10, %s796
        %p798 = pneg %p296
        %p799 = pneg %p293
        %s800 = sand.u32 %s309, 1
        %s801 = scalar_lea.sflag [#allocation13], %s800
        %s802 = sand.u32 %s309, 1
        %s803 = smul.addr %s802, 256
        %s804 = scalar_lea.vmem [#allocation12], %s803
        %p805 = pneg %p322
        %p806 = pneg %p319
        %p807 = scmp.lt.s32.totalorder %s40, 1
        %s808 = scalar_select %p807, %s40, 1
        %s809 = scalar_lea.vmem %s12, %s808
        %p810 = pneg %p348
        %p811 = pneg %p345
        %p812 = scmp.lt.s32.totalorder %s40, 1
        %s813 = scalar_select %p812, %s40, 1
        %s814 = scalar_lea.vmem %s13, %s813
        %p815 = pneg %p374
        %p816 = pneg %p371
        %p817 = scmp.lt.s32.totalorder %s40, 1
        %s818 = scalar_select %p817, %s40, 1
        %s819 = scalar_lea.vmem %s14, %s818
        %p820 = pneg %p400
        %p821 = pneg %p397
        %p822 = scmp.lt.s32.totalorder %s40, 1
        %s823 = scalar_select %p822, %s40, 1
        %s824 = scalar_lea.vmem %s15, %s823
        %p825 = pneg %p426
        %p826 = pneg %p423
        %p827 = scmp.lt.s32.totalorder %s40, 1
        %s828 = scalar_select %p827, %s40, 1
        %s829 = scalar_lea.vmem %s16, %s828
        %p830 = pneg %p452
        %p831 = pneg %p449
        %p832 = pneg %p473
        %p833 = pneg %p470
        %p834 = pneg %p494
        %p835 = pneg %p491
        %p836 = pneg %p515
        %p837 = pneg %p512
        %p838 = scmp.lt.s32.totalorder %s40, 1
        %s839 = scalar_select %p838, %s40, 1
        %s840 = smul.addr %s839, 12
        %s841 = smul.addr %s840, 4
        %s842 = scalar_lea.vmem %s5, %s841
        %p843 = scmp.lt.s32.totalorder %s40, 1
        %s844 = scalar_select %p843, %s40, 1
        %s845 = smul.addr %s844, 4
        %s846 = smul.addr %s845, 4
        %s847 = scalar_lea.vmem %s7, %s846
        %p848 = scmp.lt.s32.totalorder %s40, 1
        %s849 = scalar_select %p848, %s40, 1
        %s850 = scalar_lea.vmem %s8, %s849
        %p851 = scmp.lt.s32.totalorder %s40, 1
        %s852 = scalar_select %p851, %s40, 1
        %s853 = smul.addr %s852, 16
        %s854 = scalar_lea.vmem %s10, %s853
        %p855 = scmp.lt.s32.totalorder %s40, 1
        %s856 = scalar_select %p855, %s40, 1
        %s857 = scalar_lea.vmem %s12, %s856
        %p858 = scmp.lt.s32.totalorder %s40, 1
        %s859 = scalar_select %p858, %s40, 1
        %s860 = scalar_lea.vmem %s13, %s859
        %p861 = scmp.lt.s32.totalorder %s40, 1
        %s862 = scalar_select %p861, %s40, 1
        %s863 = scalar_lea.vmem %s14, %s862
        %p864 = scmp.lt.s32.totalorder %s40, 1
        %s865 = scalar_select %p864, %s40, 1
        %s866 = scalar_lea.vmem %s15, %s865
        %p867 = scmp.lt.s32.totalorder %s40, 1
        %s868 = scalar_select %p867, %s40, 1
        %s869 = scalar_lea.vmem %s16, %s868
        %p871 = scmp.eq.s32.totalorder %s40, 0
        // Predicated region
        $region121: #{transformer_encoder_forward.1} parent=95 // pred_check
          %p872 = pneg %p871
        $region122: #{transformer_encoder_forward.1} parent=95 // pred_check_branch
          %874 = sbr.rel (%p872) target = $region124
        $region123: #{transformer_encoder_forward.1} parent=95 // pred_region
          %v875 = vlaneseq
          %v876 = vand.u32 %v875, 127
          %v877 = vld [vmem:[%s0] sm:$0xff]
          %v878 = vld [vmem:[%s0 + $0x8] sm:$0xff]
          %879 = vset.pattern.permute.xlu0 0
          %880 = vperm.xlu0 %879, %v877
          %v881 = vpop.permute.xlu0 %880
          %882 = vset.pattern.permute.xlu0 0
          %883 = vperm.xlu0 %882, %v878
          %v884 = vpop.permute.xlu0 %883
          %vm885 = vcmp.eq.s32.totalorder %v876, %v881
          %vm886 = vcmp.eq.s32.totalorder %v876, %v884
          %v887 = vsel %vm885, 1, 0
          %v888 = vsel %vm886, 1, 0
          %v889 = vcvt.s32.f32 %v887
          %v890 = vcvt.s32.f32 %v888
          %v891 = vld [vmem:[%s1] sm:$0xff]
          %v892 = vld [vmem:[%s1 + $0x8] sm:$0xff]
          %v893 = vld [vmem:[%s1 + $0x10] sm:$0xff]
          %v894 = vld [vmem:[%s1 + $0x18] sm:$0xff]
          %v895 = vld [vmem:[%s1 + $0x20] sm:$0xff]
          %v896 = vld [vmem:[%s1 + $0x28] sm:$0xff]
          %v897 = vld [vmem:[%s1 + $0x30] sm:$0xff]
          %v898 = vld [vmem:[%s1 + $0x38] sm:$0xff]
          %vm899 = vcmask 523264
          %v901 = vsel %vm899, %v889, 0
          %v904 = vsel %vm899, %v890, 0
          %906 = vmatprep.subr.mxu0 0.0
          %907 = vmatpush1.msra.mxu0 0.0
          %908 = vmatprep.subr.mxu0 0.0
          %909 = vmatpush1.msra.mxu0 0.0
          %910 = vmatprep.subr.mxu0 0.0
          %911 = vmatpush1.msra.mxu0 0.0
          %912 = vmatprep.subr.mxu0 0.0
          %913 = vmatpush1.msra.mxu0 0.0
          %914 = vmatprep.subr.mxu0 0.0
          %915 = vmatpush1.msra.mxu0 0.0
          %916 = vmatprep.subr.mxu0 0.0
          %917 = vmatpush1.msra.mxu0 0.0
          %918 = vmatprep.subr.mxu0 0.0
          %919 = vmatpush1.msra.mxu0 0.0
          %920 = vmatprep.subr.mxu0 0.0
          %921 = vmatpush1.msra.mxu0 0.0
          %922 = vmatprep.subr.mxu0 0.0
          %923 = vmatpush1.msra.mxu0 %v898
          %924 = vmatprep.subr.mxu0 0.0
          %925 = vmatpush1.msra.mxu0 %v897
          %926 = vmatprep.subr.mxu0 0.0
          %927 = vmatpush1.msra.mxu0 %v896
          %928 = vmatprep.subr.mxu0 0.0
          %929 = vmatpush1.msra.mxu0 %v895
          %930 = vmatprep.subr.mxu0 0.0
          %931 = vmatpush1.msra.mxu0 %v894
          %932 = vmatprep.subr.mxu0 0.0
          %933 = vmatpush1.msra.mxu0 %v893
          %934 = vmatprep.subr.mxu0 0.0
          %935 = vmatpush1.msra.mxu0 %v892
          %936 = vmatprep.subr.mxu0 0.0
          %937 = vmatpush1.msra.mxu0 %v891
          %938 = vmatprep.subr.mxu0 0.0
          %939 = vmatpush2.msra.mxu0 0.0
          %940 = vmatprep.subr.mxu0 0.0
          %941 = vmatpush2.msra.mxu0 0.0
          %942 = vmatprep.subr.mxu0 0.0
          %943 = vmatpush2.msra.mxu0 0.0
          %944 = vmatprep.subr.mxu0 0.0
          %945 = vmatpush2.msra.mxu0 0.0
          %946 = vmatprep.subr.mxu0 0.0
          %947 = vmatpush2.msra.mxu0 0.0
          %948 = vmatprep.subr.mxu0 0.0
          %949 = vmatpush2.msra.mxu0 0.0
          %950 = vmatprep.subr.mxu0 0.0
          %951 = vmatpush2.msra.mxu0 0.0
          %952 = vmatprep.subr.mxu0 0.0
          %953 = vmatpush2.msra.mxu0 0.0
          %954 = vmatprep.subr.mxu0 0.0
          %955 = vmatpush2.msra.mxu0 0.0
          %956 = vmatprep.subr.mxu0 0.0
          %957 = vmatpush2.msra.mxu0 0.0
          %958 = vmatprep.subr.mxu0 0.0
          %959 = vmatpush2.msra.mxu0 0.0
          %960 = vmatprep.subr.mxu0 0.0
          %961 = vmatpush2.msra.mxu0 0.0
          %962 = vmatprep.subr.mxu0 0.0
          %963 = vmatpush2.msra.mxu0 0.0
          %964 = vmatprep.subr.mxu0 0.0
          %965 = vmatpush2.msra.mxu0 0.0
          %966 = vmatprep.subr.mxu0 0.0
          %967 = vmatpush2.msra.mxu0 0.0
          %968 = vmatprep.subr.mxu0 0.0
          %969 = vmatpush2.msra.mxu0 0.0
          %970 = vmatprep.mubr.f32.mxu0 0.0
          %971 = vmatmul.mubr.f32.gmra.mxu0 %v901
          %v972 = vpop.f32.mrf.mxu0
          %v973 = vadd.f32 0.0, %v972
          %v974 = vpop.f32.mrf.mxu0
          %975 = vmatprep.mubr.f32.mxu0 0.0
          %976 = vmatmul.mubr.f32.gmra.mxu0 %v904
          %v977 = vpop.f32.mrf.mxu0
          %v978 = vadd.f32 0.0, %v977
          %v979 = vpop.f32.mrf.mxu0
          %980 = vdwg.mxu0
          %v981 = vmul.f32 %v973, 5.656854
          %v982 = vmul.f32 %v978, 5.656854
          %v983 = vld [vmem:[#allocation4] sm:$0xff]
          %v984 = vld [vmem:[#allocation4 + $0x8] sm:$0xff]
          %v985 = vadd.f32 %v981, %v983
          %v986 = vadd.f32 %v982, %v984
          %vm987 = vcmask 261120
          %988 = vst.msk [vmem:[#allocation2] sm:$0xff] %vm987, %v985
          %989 = vst.msk [vmem:[#allocation2 + $0x8] sm:$0xff] %vm987, %v986
        $region124: #{transformer_encoder_forward.1} parent=95 // pred_fallthru
          _
        %v990 = vld [vmem:[#allocation2] sm:$0xff]
        %v991 = vld [vmem:[#allocation2 + $0x8] sm:$0xff]
        %v992 = vld [vmem:[#allocation6] sm:$0xff]
        %v993 = vld [vmem:[#allocation6 + $0x8] sm:$0xff]
        %v994 = vpack.c.bf16 %v991, %v990
        %v995 = vld [vmem:[%s842] sm:$0xf]
        %v996 = vld [vmem:[%s842 + $0x4] sm:$0xf]
        %v997 = vld [vmem:[%s842 + $0x8] sm:$0xf]
        %v998 = vld [vmem:[%s842 + $0xc] sm:$0xf]
        %v999 = vld [vmem:[%s728] sm:$0x1]
        %v1001 = vlaneseq
        %v1002 = vshrl.u32 %v1001, 7
        %v1003 = vsub.s32 0, %v1002
        %v1004 = vrot.slane %v999, %v1003
        %v1010 = vunpack.c.l.b16 %v995
        %v1011 = vunpack.c.l.b16 %v996
        %v1012 = vunpack.c.l.b16 %v997
        %v1013 = vunpack.c.l.b16 %v998
        %v1014 = vpack.c.b16 %v1011, %v1010
        %v1015 = vpack.c.b16 %v1013, %v1012
        %vm1018 = vcmask 261120
        %v1020 = vsel %vm1018, %v994, 0
        %1022 = vmatprep.subr.bf16.mxu0 0
        %1023 = vmatpush1.bf16.msra.mxu0 0
        %1024 = vmatprep.subr.bf16.mxu0 0
        %1025 = vmatpush1.bf16.msra.mxu0 0
        %1026 = vmatprep.subr.bf16.mxu0 0
        %1027 = vmatpush1.bf16.msra.mxu0 0
        %1028 = vmatprep.subr.bf16.mxu0 0
        %1029 = vmatpush1.bf16.msra.mxu0 0
        %1030 = vmatprep.subr.bf16.mxu0 0
        %1031 = vmatpush1.bf16.msra.mxu0 0
        %1032 = vmatprep.subr.bf16.mxu0 0
        %1033 = vmatpush1.bf16.msra.mxu0 0
        %1034 = vmatprep.subr.bf16.mxu0 0
        %1035 = vmatpush1.bf16.msra.mxu0 %v1015
        %1036 = vmatprep.subr.bf16.mxu0 0
        %1037 = vmatpush1.bf16.msra.mxu0 %v1014
        %1038 = vmatprep.subr.bf16.mxu0 0
        %1039 = vmatpush2.bf16.msra.mxu0 0
        %1040 = vmatprep.subr.bf16.mxu0 0
        %1041 = vmatpush2.bf16.msra.mxu0 0
        %1042 = vmatprep.subr.bf16.mxu0 0
        %1043 = vmatpush2.bf16.msra.mxu0 0
        %1044 = vmatprep.subr.bf16.mxu0 0
        %1045 = vmatpush2.bf16.msra.mxu0 0
        %1046 = vmatprep.subr.bf16.mxu0 0
        %1047 = vmatpush2.bf16.msra.mxu0 0
        %1048 = vmatprep.subr.bf16.mxu0 0
        %1049 = vmatpush2.bf16.msra.mxu0 0
        %1050 = vmatprep.subr.bf16.mxu0 0
        %1051 = vmatpush2.bf16.msra.mxu0 0
        %1052 = vmatprep.subr.bf16.mxu0 0
        %1053 = vmatpush2.bf16.msra.mxu0 0
        %1054 = vmatprep.mubr.bf16.mxu0 0
        %1055 = vmatmul.mubr.bf16.gmra.mxu0 %v1020
        %v1056 = vpop.f32.mrf.mxu0
        %v1057 = vadd.f32 %v1004, %v1056
        %v1058 = vpop.f32.mrf.mxu0
        %v1059 = vpop.f32.mrf.mxu0
        %v1060 = vadd.f32 %v1004, %v1059
        %v1061 = vpop.f32.mrf.mxu0
        %1062 = vdwg.mxu0
        %s1063 = scalar_lea.vmem %s842, 16
        %v1064 = vld [vmem:[%s1063] sm:$0xf]
        %v1065 = vld [vmem:[%s1063 + $0x4] sm:$0xf]
        %v1066 = vld [vmem:[%s1063 + $0x8] sm:$0xf]
        %v1067 = vld [vmem:[%s1063 + $0xc] sm:$0xf]
        %s1068 = scalar_lea.vmem %s728, 1 [#allocation9]
        %v1069 = vld [vmem:[%s1068] sm:$0x1]
        %v1071 = vlaneseq
        %v1072 = vshrl.u32 %v1071, 7
        %v1073 = vsub.s32 0, %v1072
        %v1074 = vrot.slane %v1069, %v1073
        %v1080 = vunpack.c.l.b16 %v1064
        %v1081 = vunpack.c.l.b16 %v1065
        %v1082 = vunpack.c.l.b16 %v1066
        %v1083 = vunpack.c.l.b16 %v1067
        %v1084 = vpack.c.b16 %v1081, %v1080
        %v1085 = vpack.c.b16 %v1083, %v1082
        %1088 = vmatprep.subr.bf16.mxu0 0
        %1089 = vmatpush1.bf16.msra.mxu0 0
        %1090 = vmatprep.subr.bf16.mxu0 0
        %1091 = vmatpush1.bf16.msra.mxu0 0
        %1092 = vmatprep.subr.bf16.mxu0 0
        %1093 = vmatpush1.bf16.msra.mxu0 0
        %1094 = vmatprep.subr.bf16.mxu0 0
        %1095 = vmatpush1.bf16.msra.mxu0 0
        %1096 = vmatprep.subr.bf16.mxu0 0
        %1097 = vmatpush1.bf16.msra.mxu0 0
        %1098 = vmatprep.subr.bf16.mxu0 0
        %1099 = vmatpush1.bf16.msra.mxu0 0
        %1100 = vmatprep.subr.bf16.mxu0 0
        %1101 = vmatpush1.bf16.msra.mxu0 %v1085
        %1102 = vmatprep.subr.bf16.mxu0 0
        %1103 = vmatpush1.bf16.msra.mxu0 %v1084
        %1104 = vmatprep.subr.bf16.mxu0 0
        %1105 = vmatpush2.bf16.msra.mxu0 0
        %1106 = vmatprep.subr.bf16.mxu0 0
        %1107 = vmatpush2.bf16.msra.mxu0 0
        %1108 = vmatprep.subr.bf16.mxu0 0
        %1109 = vmatpush2.bf16.msra.mxu0 0
        %1110 = vmatprep.subr.bf16.mxu0 0
        %1111 = vmatpush2.bf16.msra.mxu0 0
        %1112 = vmatprep.subr.bf16.mxu0 0
        %1113 = vmatpush2.bf16.msra.mxu0 0
        %1114 = vmatprep.subr.bf16.mxu0 0
        %1115 = vmatpush2.bf16.msra.mxu0 0
        %1116 = vmatprep.subr.bf16.mxu0 0
        %1117 = vmatpush2.bf16.msra.mxu0 0
        %1118 = vmatprep.subr.bf16.mxu0 0
        %1119 = vmatpush2.bf16.msra.mxu0 0
        %1120 = vmatprep.mubr.bf16.mxu0 0
        %1121 = vmatmul.mubr.bf16.gmra.mxu0 %v1020
        %v1122 = vpop.f32.mrf.mxu0
        %v1123 = vadd.f32 %v1074, %v1122
        %v1124 = vpop.f32.mrf.mxu0
        %v1125 = vpop.f32.mrf.mxu0
        %v1126 = vadd.f32 %v1074, %v1125
        %v1127 = vpop.f32.mrf.mxu0
        %1128 = vdwg.mxu0
        %s1129 = scalar_lea.vmem %s842, 32
        %v1130 = vld [vmem:[%s1129] sm:$0xf]
        %v1131 = vld [vmem:[%s1129 + $0x4] sm:$0xf]
        %v1132 = vld [vmem:[%s1129 + $0x8] sm:$0xf]
        %v1133 = vld [vmem:[%s1129 + $0xc] sm:$0xf]
        %s1134 = scalar_lea.vmem %s728, 2 [#allocation9]
        %v1135 = vld [vmem:[%s1134] sm:$0x1]
        %v1137 = vlaneseq
        %v1138 = vshrl.u32 %v1137, 7
        %v1139 = vsub.s32 0, %v1138
        %v1140 = vrot.slane %v1135, %v1139
        %v1146 = vunpack.c.l.b16 %v1130
        %v1147 = vunpack.c.l.b16 %v1131
        %v1148 = vunpack.c.l.b16 %v1132
        %v1149 = vunpack.c.l.b16 %v1133
        %v1150 = vpack.c.b16 %v1147, %v1146
        %v1151 = vpack.c.b16 %v1149, %v1148
        %1154 = vmatprep.subr.bf16.mxu0 0
        %1155 = vmatpush1.bf16.msra.mxu0 0
        %1156 = vmatprep.subr.bf16.mxu0 0
        %1157 = vmatpush1.bf16.msra.mxu0 0
        %1158 = vmatprep.subr.bf16.mxu0 0
        %1159 = vmatpush1.bf16.msra.mxu0 0
        %1160 = vmatprep.subr.bf16.mxu0 0
        %1161 = vmatpush1.bf16.msra.mxu0 0
        %1162 = vmatprep.subr.bf16.mxu0 0
        %1163 = vmatpush1.bf16.msra.mxu0 0
        %1164 = vmatprep.subr.bf16.mxu0 0
        %1165 = vmatpush1.bf16.msra.mxu0 0
        %1166 = vmatprep.subr.bf16.mxu0 0
        %1167 = vmatpush1.bf16.msra.mxu0 %v1151
        %1168 = vmatprep.subr.bf16.mxu0 0
        %1169 = vmatpush1.bf16.msra.mxu0 %v1150
        %1170 = vmatprep.subr.bf16.mxu0 0
        %1171 = vmatpush2.bf16.msra.mxu0 0
        %1172 = vmatprep.subr.bf16.mxu0 0
        %1173 = vmatpush2.bf16.msra.mxu0 0
        %1174 = vmatprep.subr.bf16.mxu0 0
        %1175 = vmatpush2.bf16.msra.mxu0 0
        %1176 = vmatprep.subr.bf16.mxu0 0
        %1177 = vmatpush2.bf16.msra.mxu0 0
        %1178 = vmatprep.subr.bf16.mxu0 0
        %1179 = vmatpush2.bf16.msra.mxu0 0
        %1180 = vmatprep.subr.bf16.mxu0 0
        %1181 = vmatpush2.bf16.msra.mxu0 0
        %1182 = vmatprep.subr.bf16.mxu0 0
        %1183 = vmatpush2.bf16.msra.mxu0 0
        %1184 = vmatprep.subr.bf16.mxu0 0
        %1185 = vmatpush2.bf16.msra.mxu0 0
        %1186 = vmatprep.mubr.bf16.mxu0 0
        %1187 = vmatmul.mubr.bf16.gmra.mxu0 %v1020
        %v1188 = vpop.f32.mrf.mxu0
        %v1189 = vadd.f32 %v1140, %v1188
        %v1190 = vpop.f32.mrf.mxu0
        %v1191 = vpop.f32.mrf.mxu0
        %v1192 = vadd.f32 %v1140, %v1191
        %v1193 = vpop.f32.mrf.mxu0
        %1194 = vdwg.mxu0
        %v1195 = vlaneseq
        %v1196 = vand.u32 %v1195, 127
        %vm1197 = vcmp.ge.s32.totalorder %v1196, 0
        %vm1198 = vcmp.lt.s32.totalorder %v1196, 8
        %vm1199 = vmand %vm1197, %vm1198
        %v1200 = vsel %vm1199, 1.0, 0.0
        %v1201 = vmul.f32 %v1057, %v1200
        %v1202 = vmul.f32 %v1060, %v1200
        %v1204 = vsel %vm1018, %v1201, 0
        %v1207 = vsel %vm1018, %v1202, 0
        %v1210 = vsel %vm1018, %v1123, 0
        %v1213 = vsel %vm1018, %v1126, 0
        %1215 = vmatprep.subr.mxu0 0.0
        %1216 = vmatpush1.xpose.msra.mxu0 0.0
        %1217 = vmatprep.subr.mxu0 0.0
        %1218 = vmatpush1.xpose.msra.mxu0 0.0
        %1219 = vmatprep.subr.mxu0 0.0
        %1220 = vmatpush1.xpose.msra.mxu0 0.0
        %1221 = vmatprep.subr.mxu0 0.0
        %1222 = vmatpush1.xpose.msra.mxu0 0.0
        %1223 = vmatprep.subr.mxu0 0.0
        %1224 = vmatpush1.xpose.msra.mxu0 0.0
        %1225 = vmatprep.subr.mxu0 0.0
        %1226 = vmatpush1.xpose.msra.mxu0 0.0
        %1227 = vmatprep.subr.mxu0 0.0
        %1228 = vmatpush1.xpose.msra.mxu0 0.0
        %1229 = vmatprep.subr.mxu0 0.0
        %1230 = vmatpush1.xpose.msra.mxu0 0.0
        %1231 = vmatprep.subr.mxu0 0.0
        %1232 = vmatpush1.xpose.msra.mxu0 0.0
        %1233 = vmatprep.subr.mxu0 0.0
        %1234 = vmatpush1.xpose.msra.mxu0 0.0
        %1235 = vmatprep.subr.mxu0 0.0
        %1236 = vmatpush1.xpose.msra.mxu0 0.0
        %1237 = vmatprep.subr.mxu0 0.0
        %1238 = vmatpush1.xpose.msra.mxu0 0.0
        %1239 = vmatprep.subr.mxu0 0.0
        %1240 = vmatpush1.xpose.msra.mxu0 0.0
        %1241 = vmatprep.subr.mxu0 0.0
        %1242 = vmatpush1.xpose.msra.mxu0 0.0
        %1243 = vmatprep.subr.mxu0 0.0
        %1244 = vmatpush1.xpose.msra.mxu0 %v1213
        %1245 = vmatprep.subr.mxu0 0.0
        %1246 = vmatpush1.xpose.msra.mxu0 %v1210
        %1247 = vmatprep.subr.mxu0 0.0
        %1248 = vmatpush2.xpose.msra.mxu0 0.0
        %1249 = vmatprep.subr.mxu0 0.0
        %1250 = vmatpush2.xpose.msra.mxu0 0.0
        %1251 = vmatprep.subr.mxu0 0.0
        %1252 = vmatpush2.xpose.msra.mxu0 0.0
        %1253 = vmatprep.subr.mxu0 0.0
        %1254 = vmatpush2.xpose.msra.mxu0 0.0
        %1255 = vmatprep.subr.mxu0 0.0
        %1256 = vmatpush2.xpose.msra.mxu0 0.0
        %1257 = vmatprep.subr.mxu0 0.0
        %1258 = vmatpush2.xpose.msra.mxu0 0.0
        %1259 = vmatprep.subr.mxu0 0.0
        %1260 = vmatpush2.xpose.msra.mxu0 0.0
        %1261 = vmatprep.subr.mxu0 0.0
        %1262 = vmatpush2.xpose.msra.mxu0 0.0
        %1263 = vmatprep.subr.mxu0 0.0
        %1264 = vmatpush2.xpose.msra.mxu0 0.0
        %1265 = vmatprep.subr.mxu0 0.0
        %1266 = vmatpush2.xpose.msra.mxu0 0.0
        %1267 = vmatprep.subr.mxu0 0.0
        %1268 = vmatpush2.xpose.msra.mxu0 0.0
        %1269 = vmatprep.subr.mxu0 0.0
        %1270 = vmatpush2.xpose.msra.mxu0 0.0
        %1271 = vmatprep.subr.mxu0 0.0
        %1272 = vmatpush2.xpose.msra.mxu0 0.0
        %1273 = vmatprep.subr.mxu0 0.0
        %1274 = vmatpush2.xpose.msra.mxu0 0.0
        %1275 = vmatprep.subr.mxu0 0.0
        %1276 = vmatpush2.xpose.msra.mxu0 0.0
        %1277 = vmatprep.subr.mxu0 0.0
        %1278 = vmatpush2.xpose.msra.mxu0 0.0
        %1279 = vmatprep.mubr.f32.mxu0 0.0
        %1280 = vmatmul.mubr.f32.gmra.mxu0 %v1204
        %v1281 = vpop.f32.mrf.mxu0
        %v1282 = vadd.f32 0.0, %v1281
        %v1283 = vpop.f32.mrf.mxu0
        %1284 = vmatprep.mubr.f32.mxu0 0.0
        %1285 = vmatmul.mubr.f32.gmra.mxu0 %v1207
        %v1286 = vpop.f32.mrf.mxu0
        %v1287 = vadd.f32 0.0, %v1286
        %v1288 = vpop.f32.mrf.mxu0
        %1289 = vdwg.mxu0
        %v1290 = vmul.f32 %v1282, 0.35355338
        %v1291 = vmul.f32 %v1287, 0.35355338
        %v1292 = vadd.f32 %v1290, %v992
        %v1293 = vadd.f32 %v1291, %v993
        %vm1294 = vcmask 130048
        %v1295 = vsel %vm1294, %v1292, -inf
        %1296 = vmax.xlane.f32.xlu0 %v1295
        %v1297 = vpop.xlane.xlu0 %1296
        %v1298 = vsel %vm1294, %v1293, -inf
        %1299 = vmax.xlane.f32.xlu0 %v1298
        %v1300 = vpop.xlane.xlu0 %1299
        %v1301 = vsub.f32 %v1292, %v1297
        %v1302 = vsub.f32 %v1293, %v1300
        %v1303 = vmul.f32 %v1301, 1.442695
        %v1304 = vpow.pop %v1303
        %v1305 = vmul.f32 %v1302, 1.442695
        %v1306 = vpow.pop %v1305
        %v1307 = vsel %vm1294, %v1304, 0.0
        %1308 = vadd.xlane.f32.xlu0 %v1307
        %v1309 = vpop.xlane.xlu0 %1308
        %v1310 = vsel %vm1294, %v1306, 0.0
        %1311 = vadd.xlane.f32.xlu0 %v1310
        %v1312 = vpop.xlane.xlu0 %1311
        %v1313 = vrcp.pop %v1309
        %v1314 = vmul.f32 %v1304, %v1313
        %v1315 = vrcp.pop %v1312
        %v1316 = vmul.f32 %v1306, %v1315
        %v1317 = vmul.f32 %v1189, %v1200
        %v1318 = vmul.f32 %v1192, %v1200
        %vm1319 = vcmp.ge.s32.totalorder %v1196, 8
        %vm1320 = vcmp.lt.s32.totalorder %v1196, 16
        %vm1321 = vmand %vm1319, %vm1320
        %v1322 = vsel %vm1321, 1.0, 0.0
        %v1323 = vmul.f32 %v1057, %v1322
        %v1324 = vmul.f32 %v1060, %v1322
        %v1326 = vsel %vm1018, %v1323, 0
        %v1329 = vsel %vm1018, %v1324, 0
        %1331 = vmatprep.subr.mxu0 0.0
        %1332 = vmatpush1.xpose.msra.mxu0 0.0
        %1333 = vmatprep.subr.mxu0 0.0
        %1334 = vmatpush1.xpose.msra.mxu0 0.0
        %1335 = vmatprep.subr.mxu0 0.0
        %1336 = vmatpush1.xpose.msra.mxu0 0.0
        %1337 = vmatprep.subr.mxu0 0.0
        %1338 = vmatpush1.xpose.msra.mxu0 0.0
        %1339 = vmatprep.subr.mxu0 0.0
        %1340 = vmatpush1.xpose.msra.mxu0 0.0
        %1341 = vmatprep.subr.mxu0 0.0
        %1342 = vmatpush1.xpose.msra.mxu0 0.0
        %1343 = vmatprep.subr.mxu0 0.0
        %1344 = vmatpush1.xpose.msra.mxu0 0.0
        %1345 = vmatprep.subr.mxu0 0.0
        %1346 = vmatpush1.xpose.msra.mxu0 0.0
        %1347 = vmatprep.subr.mxu0 0.0
        %1348 = vmatpush1.xpose.msra.mxu0 0.0
        %1349 = vmatprep.subr.mxu0 0.0
        %1350 = vmatpush1.xpose.msra.mxu0 0.0
        %1351 = vmatprep.subr.mxu0 0.0
        %1352 = vmatpush1.xpose.msra.mxu0 0.0
        %1353 = vmatprep.subr.mxu0 0.0
        %1354 = vmatpush1.xpose.msra.mxu0 0.0
        %1355 = vmatprep.subr.mxu0 0.0
        %1356 = vmatpush1.xpose.msra.mxu0 0.0
        %1357 = vmatprep.subr.mxu0 0.0
        %1358 = vmatpush1.xpose.msra.mxu0 0.0
        %1359 = vmatprep.subr.mxu0 0.0
        %1360 = vmatpush1.xpose.msra.mxu0 %v1213
        %1361 = vmatprep.subr.mxu0 0.0
        %1362 = vmatpush1.xpose.msra.mxu0 %v1210
        %1363 = vmatprep.subr.mxu0 0.0
        %1364 = vmatpush2.xpose.msra.mxu0 0.0
        %1365 = vmatprep.subr.mxu0 0.0
        %1366 = vmatpush2.xpose.msra.mxu0 0.0
        %1367 = vmatprep.subr.mxu0 0.0
        %1368 = vmatpush2.xpose.msra.mxu0 0.0
        %1369 = vmatprep.subr.mxu0 0.0
        %1370 = vmatpush2.xpose.msra.mxu0 0.0
        %1371 = vmatprep.subr.mxu0 0.0
        %1372 = vmatpush2.xpose.msra.mxu0 0.0
        %1373 = vmatprep.subr.mxu0 0.0
        %1374 = vmatpush2.xpose.msra.mxu0 0.0
        %1375 = vmatprep.subr.mxu0 0.0
        %1376 = vmatpush2.xpose.msra.mxu0 0.0
        %1377 = vmatprep.subr.mxu0 0.0
        %1378 = vmatpush2.xpose.msra.mxu0 0.0
        %1379 = vmatprep.subr.mxu0 0.0
        %1380 = vmatpush2.xpose.msra.mxu0 0.0
        %1381 = vmatprep.subr.mxu0 0.0
        %1382 = vmatpush2.xpose.msra.mxu0 0.0
        %1383 = vmatprep.subr.mxu0 0.0
        %1384 = vmatpush2.xpose.msra.mxu0 0.0
        %1385 = vmatprep.subr.mxu0 0.0
        %1386 = vmatpush2.xpose.msra.mxu0 0.0
        %1387 = vmatprep.subr.mxu0 0.0
        %1388 = vmatpush2.xpose.msra.mxu0 0.0
        %1389 = vmatprep.subr.mxu0 0.0
        %1390 = vmatpush2.xpose.msra.mxu0 0.0
        %1391 = vmatprep.subr.mxu0 0.0
        %1392 = vmatpush2.xpose.msra.mxu0 0.0
        %1393 = vmatprep.subr.mxu0 0.0
        %1394 = vmatpush2.xpose.msra.mxu0 0.0
        %1395 = vmatprep.mubr.f32.mxu0 0.0
        %1396 = vmatmul.mubr.f32.gmra.mxu0 %v1326
        %v1397 = vpop.f32.mrf.mxu0
        %v1398 = vadd.f32 0.0, %v1397
        %v1399 = vpop.f32.mrf.mxu0
        %1400 = vmatprep.mubr.f32.mxu0 0.0
        %1401 = vmatmul.mubr.f32.gmra.mxu0 %v1329
        %v1402 = vpop.f32.mrf.mxu0
        %v1403 = vadd.f32 0.0, %v1402
        %v1404 = vpop.f32.mrf.mxu0
        %1405 = vdwg.mxu0
        %v1406 = vmul.f32 %v1398, 0.35355338
        %v1407 = vmul.f32 %v1403, 0.35355338
        %v1408 = vadd.f32 %v1406, %v992
        %v1409 = vadd.f32 %v1407, %v993
        %v1410 = vsel %vm1294, %v1408, -inf
        %1411 = vmax.xlane.f32.xlu0 %v1410
        %v1412 = vpop.xlane.xlu0 %1411
        %v1413 = vsel %vm1294, %v1409, -inf
        %1414 = vmax.xlane.f32.xlu0 %v1413
        %v1415 = vpop.xlane.xlu0 %1414
        %v1416 = vsub.f32 %v1408, %v1412
        %v1417 = vsub.f32 %v1409, %v1415
        %v1418 = vmul.f32 %v1416, 1.442695
        %v1419 = vpow.pop %v1418
        %v1420 = vmul.f32 %v1417, 1.442695
        %v1421 = vpow.pop %v1420
        %v1422 = vsel %vm1294, %v1419, 0.0
        %1423 = vadd.xlane.f32.xlu0 %v1422
        %v1424 = vpop.xlane.xlu0 %1423
        %v1425 = vsel %vm1294, %v1421, 0.0
        %1426 = vadd.xlane.f32.xlu0 %v1425
        %v1427 = vpop.xlane.xlu0 %1426
        %v1428 = vrcp.pop %v1424
        %v1429 = vmul.f32 %v1419, %v1428
        %v1430 = vrcp.pop %v1427
        %v1431 = vmul.f32 %v1421, %v1430
        %v1432 = vmul.f32 %v1189, %v1322
        %v1433 = vmul.f32 %v1192, %v1322
        %v1435 = vsel %vm1294, %v1429, 0
        %v1438 = vsel %vm1294, %v1431, 0
        %1440 = vmatprep.subr.mxu0 0.0
        %1441 = vmatpush1.msra.mxu0 0.0
        %1442 = vmatprep.subr.mxu0 0.0
        %1443 = vmatpush1.msra.mxu0 0.0
        %1444 = vmatprep.subr.mxu0 0.0
        %1445 = vmatpush1.msra.mxu0 0.0
        %1446 = vmatprep.subr.mxu0 0.0
        %1447 = vmatpush1.msra.mxu0 0.0
        %1448 = vmatprep.subr.mxu0 0.0
        %1449 = vmatpush1.msra.mxu0 0.0
        %1450 = vmatprep.subr.mxu0 0.0
        %1451 = vmatpush1.msra.mxu0 0.0
        %1452 = vmatprep.subr.mxu0 0.0
        %1453 = vmatpush1.msra.mxu0 0.0
        %1454 = vmatprep.subr.mxu0 0.0
        %1455 = vmatpush1.msra.mxu0 0.0
        %1456 = vmatprep.subr.mxu0 0.0
        %1457 = vmatpush1.msra.mxu0 0.0
        %1458 = vmatprep.subr.mxu0 0.0
        %1459 = vmatpush1.msra.mxu0 0.0
        %1460 = vmatprep.subr.mxu0 0.0
        %1461 = vmatpush1.msra.mxu0 0.0
        %1462 = vmatprep.subr.mxu0 0.0
        %1463 = vmatpush1.msra.mxu0 0.0
        %1464 = vmatprep.subr.mxu0 0.0
        %1465 = vmatpush1.msra.mxu0 0.0
        %1466 = vmatprep.subr.mxu0 0.0
        %1467 = vmatpush1.msra.mxu0 0.0
        %1468 = vmatprep.subr.mxu0 0.0
        %1469 = vmatpush1.msra.mxu0 %v1433
        %1470 = vmatprep.subr.mxu0 0.0
        %1471 = vmatpush1.msra.mxu0 %v1432
        %1472 = vmatprep.subr.mxu0 0.0
        %1473 = vmatpush2.msra.mxu0 0.0
        %1474 = vmatprep.subr.mxu0 0.0
        %1475 = vmatpush2.msra.mxu0 0.0
        %1476 = vmatprep.subr.mxu0 0.0
        %1477 = vmatpush2.msra.mxu0 0.0
        %1478 = vmatprep.subr.mxu0 0.0
        %1479 = vmatpush2.msra.mxu0 0.0
        %1480 = vmatprep.subr.mxu0 0.0
        %1481 = vmatpush2.msra.mxu0 0.0
        %1482 = vmatprep.subr.mxu0 0.0
        %1483 = vmatpush2.msra.mxu0 0.0
        %1484 = vmatprep.subr.mxu0 0.0
        %1485 = vmatpush2.msra.mxu0 0.0
        %1486 = vmatprep.subr.mxu0 0.0
        %1487 = vmatpush2.msra.mxu0 0.0
        %1488 = vmatprep.subr.mxu0 0.0
        %1489 = vmatpush2.msra.mxu0 0.0
        %1490 = vmatprep.subr.mxu0 0.0
        %1491 = vmatpush2.msra.mxu0 0.0
        %1492 = vmatprep.subr.mxu0 0.0
        %1493 = vmatpush2.msra.mxu0 0.0
        %1494 = vmatprep.subr.mxu0 0.0
        %1495 = vmatpush2.msra.mxu0 0.0
        %1496 = vmatprep.subr.mxu0 0.0
        %1497 = vmatpush2.msra.mxu0 0.0
        %1498 = vmatprep.subr.mxu0 0.0
        %1499 = vmatpush2.msra.mxu0 0.0
        %1500 = vmatprep.subr.mxu0 0.0
        %1501 = vmatpush2.msra.mxu0 0.0
        %1502 = vmatprep.subr.mxu0 0.0
        %1503 = vmatpush2.msra.mxu0 0.0
        %1504 = vmatprep.mubr.f32.mxu0 0.0
        %1505 = vmatmul.mubr.f32.gmra.mxu0 %v1435
        %v1506 = vpop.f32.mrf.mxu0
        %v1507 = vadd.f32 0.0, %v1506
        %v1508 = vpop.f32.mrf.mxu0
        %1509 = vmatprep.mubr.f32.mxu0 0.0
        %1510 = vmatmul.mubr.f32.gmra.mxu0 %v1438
        %v1511 = vpop.f32.mrf.mxu0
        %v1512 = vadd.f32 0.0, %v1511
        %v1513 = vpop.f32.mrf.mxu0
        %1514 = vdwg.mxu0
        %v1516 = vsel %vm1294, %v1314, 0
        %v1519 = vsel %vm1294, %v1316, 0
        %1521 = vmatprep.subr.mxu0 0.0
        %1522 = vmatpush1.msra.mxu0 0.0
        %1523 = vmatprep.subr.mxu0 0.0
        %1524 = vmatpush1.msra.mxu0 0.0
        %1525 = vmatprep.subr.mxu0 0.0
        %1526 = vmatpush1.msra.mxu0 0.0
        %1527 = vmatprep.subr.mxu0 0.0
        %1528 = vmatpush1.msra.mxu0 0.0
        %1529 = vmatprep.subr.mxu0 0.0
        %1530 = vmatpush1.msra.mxu0 0.0
        %1531 = vmatprep.subr.mxu0 0.0
        %1532 = vmatpush1.msra.mxu0 0.0
        %1533 = vmatprep.subr.mxu0 0.0
        %1534 = vmatpush1.msra.mxu0 0.0
        %1535 = vmatprep.subr.mxu0 0.0
        %1536 = vmatpush1.msra.mxu0 0.0
        %1537 = vmatprep.subr.mxu0 0.0
        %1538 = vmatpush1.msra.mxu0 0.0
        %1539 = vmatprep.subr.mxu0 0.0
        %1540 = vmatpush1.msra.mxu0 0.0
        %1541 = vmatprep.subr.mxu0 0.0
        %1542 = vmatpush1.msra.mxu0 0.0
        %1543 = vmatprep.subr.mxu0 0.0
        %1544 = vmatpush1.msra.mxu0 0.0
        %1545 = vmatprep.subr.mxu0 0.0
        %1546 = vmatpush1.msra.mxu0 0.0
        %1547 = vmatprep.subr.mxu0 0.0
        %1548 = vmatpush1.msra.mxu0 0.0
        %1549 = vmatprep.subr.mxu0 0.0
        %1550 = vmatpush1.msra.mxu0 %v1318
        %1551 = vmatprep.subr.mxu0 0.0
        %1552 = vmatpush1.msra.mxu0 %v1317
        %1553 = vmatprep.subr.mxu0 0.0
        %1554 = vmatpush2.msra.mxu0 0.0
        %1555 = vmatprep.subr.mxu0 0.0
        %1556 = vmatpush2.msra.mxu0 0.0
        %1557 = vmatprep.subr.mxu0 0.0
        %1558 = vmatpush2.msra.mxu0 0.0
        %1559 = vmatprep.subr.mxu0 0.0
        %1560 = vmatpush2.msra.mxu0 0.0
        %1561 = vmatprep.subr.mxu0 0.0
        %1562 = vmatpush2.msra.mxu0 0.0
        %1563 = vmatprep.subr.mxu0 0.0
        %1564 = vmatpush2.msra.mxu0 0.0
        %1565 = vmatprep.subr.mxu0 0.0
        %1566 = vmatpush2.msra.mxu0 0.0
        %1567 = vmatprep.subr.mxu0 0.0
        %1568 = vmatpush2.msra.mxu0 0.0
        %1569 = vmatprep.subr.mxu0 0.0
        %1570 = vmatpush2.msra.mxu0 0.0
        %1571 = vmatprep.subr.mxu0 0.0
        %1572 = vmatpush2.msra.mxu0 0.0
        %1573 = vmatprep.subr.mxu0 0.0
        %1574 = vmatpush2.msra.mxu0 0.0
        %1575 = vmatprep.subr.mxu0 0.0
        %1576 = vmatpush2.msra.mxu0 0.0
        %1577 = vmatprep.subr.mxu0 0.0
        %1578 = vmatpush2.msra.mxu0 0.0
        %1579 = vmatprep.subr.mxu0 0.0
        %1580 = vmatpush2.msra.mxu0 0.0
        %1581 = vmatprep.subr.mxu0 0.0
        %1582 = vmatpush2.msra.mxu0 0.0
        %1583 = vmatprep.subr.mxu0 0.0
        %1584 = vmatpush2.msra.mxu0 0.0
        %1585 = vmatprep.mubr.f32.mxu0 0.0
        %1586 = vmatmul.mubr.f32.gmra.mxu0 %v1516
        %v1587 = vpop.f32.mrf.mxu0
        %v1588 = vadd.f32 %v1507, %v1587
        %v1589 = vpop.f32.mrf.mxu0
        %1590 = vmatprep.mubr.f32.mxu0 0.0
        %1591 = vmatmul.mubr.f32.gmra.mxu0 %v1519
        %v1592 = vpop.f32.mrf.mxu0
        %v1593 = vadd.f32 %v1512, %v1592
        %v1594 = vpop.f32.mrf.mxu0
        %1595 = vdwg.mxu0
        %vm1596 = vcmp.ge.s32.totalorder %v1196, 16
        %vm1597 = vcmp.lt.s32.totalorder %v1196, 24
        %vm1598 = vmand %vm1596, %vm1597
        %v1599 = vsel %vm1598, 1.0, 0.0
        %v1600 = vmul.f32 %v1057, %v1599
        %v1601 = vmul.f32 %v1060, %v1599
        %v1603 = vsel %vm1018, %v1600, 0
        %v1606 = vsel %vm1018, %v1601, 0
        %1608 = vmatprep.subr.mxu0 0.0
        %1609 = vmatpush1.xpose.msra.mxu0 0.0
        %1610 = vmatprep.subr.mxu0 0.0
        %1611 = vmatpush1.xpose.msra.mxu0 0.0
        %1612 = vmatprep.subr.mxu0 0.0
        %1613 = vmatpush1.xpose.msra.mxu0 0.0
        %1614 = vmatprep.subr.mxu0 0.0
        %1615 = vmatpush1.xpose.msra.mxu0 0.0
        %1616 = vmatprep.subr.mxu0 0.0
        %1617 = vmatpush1.xpose.msra.mxu0 0.0
        %1618 = vmatprep.subr.mxu0 0.0
        %1619 = vmatpush1.xpose.msra.mxu0 0.0
        %1620 = vmatprep.subr.mxu0 0.0
        %1621 = vmatpush1.xpose.msra.mxu0 0.0
        %1622 = vmatprep.subr.mxu0 0.0
        %1623 = vmatpush1.xpose.msra.mxu0 0.0
        %1624 = vmatprep.subr.mxu0 0.0
        %1625 = vmatpush1.xpose.msra.mxu0 0.0
        %1626 = vmatprep.subr.mxu0 0.0
        %1627 = vmatpush1.xpose.msra.mxu0 0.0
        %1628 = vmatprep.subr.mxu0 0.0
        %1629 = vmatpush1.xpose.msra.mxu0 0.0
        %1630 = vmatprep.subr.mxu0 0.0
        %1631 = vmatpush1.xpose.msra.mxu0 0.0
        %1632 = vmatprep.subr.mxu0 0.0
        %1633 = vmatpush1.xpose.msra.mxu0 0.0
        %1634 = vmatprep.subr.mxu0 0.0
        %1635 = vmatpush1.xpose.msra.mxu0 0.0
        %1636 = vmatprep.subr.mxu0 0.0
        %1637 = vmatpush1.xpose.msra.mxu0 %v1213
        %1638 = vmatprep.subr.mxu0 0.0
        %1639 = vmatpush1.xpose.msra.mxu0 %v1210
        %1640 = vmatprep.subr.mxu0 0.0
        %1641 = vmatpush2.xpose.msra.mxu0 0.0
        %1642 = vmatprep.subr.mxu0 0.0
        %1643 = vmatpush2.xpose.msra.mxu0 0.0
        %1644 = vmatprep.subr.mxu0 0.0
        %1645 = vmatpush2.xpose.msra.mxu0 0.0
        %1646 = vmatprep.subr.mxu0 0.0
        %1647 = vmatpush2.xpose.msra.mxu0 0.0
        %1648 = vmatprep.subr.mxu0 0.0
        %1649 = vmatpush2.xpose.msra.mxu0 0.0
        %1650 = vmatprep.subr.mxu0 0.0
        %1651 = vmatpush2.xpose.msra.mxu0 0.0
        %1652 = vmatprep.subr.mxu0 0.0
        %1653 = vmatpush2.xpose.msra.mxu0 0.0
        %1654 = vmatprep.subr.mxu0 0.0
        %1655 = vmatpush2.xpose.msra.mxu0 0.0
        %1656 = vmatprep.subr.mxu0 0.0
        %1657 = vmatpush2.xpose.msra.mxu0 0.0
        %1658 = vmatprep.subr.mxu0 0.0
        %1659 = vmatpush2.xpose.msra.mxu0 0.0
        %1660 = vmatprep.subr.mxu0 0.0
        %1661 = vmatpush2.xpose.msra.mxu0 0.0
        %1662 = vmatprep.subr.mxu0 0.0
        %1663 = vmatpush2.xpose.msra.mxu0 0.0
        %1664 = vmatprep.subr.mxu0 0.0
        %1665 = vmatpush2.xpose.msra.mxu0 0.0
        %1666 = vmatprep.subr.mxu0 0.0
        %1667 = vmatpush2.xpose.msra.mxu0 0.0
        %1668 = vmatprep.subr.mxu0 0.0
        %1669 = vmatpush2.xpose.msra.mxu0 0.0
        %1670 = vmatprep.subr.mxu0 0.0
        %1671 = vmatpush2.xpose.msra.mxu0 0.0
        %1672 = vmatprep.mubr.f32.mxu0 0.0
        %1673 = vmatmul.mubr.f32.gmra.mxu0 %v1603
        %v1674 = vpop.f32.mrf.mxu0
        %v1675 = vadd.f32 0.0, %v1674
        %v1676 = vpop.f32.mrf.mxu0
        %1677 = vmatprep.mubr.f32.mxu0 0.0
        %1678 = vmatmul.mubr.f32.gmra.mxu0 %v1606
        %v1679 = vpop.f32.mrf.mxu0
        %v1680 = vadd.f32 0.0, %v1679
        %v1681 = vpop.f32.mrf.mxu0
        %1682 = vdwg.mxu0
        %v1683 = vmul.f32 %v1675, 0.35355338
        %v1684 = vmul.f32 %v1680, 0.35355338
        %v1685 = vadd.f32 %v1683, %v992
        %v1686 = vadd.f32 %v1684, %v993
        %v1687 = vsel %vm1294, %v1685, -inf
        %1688 = vmax.xlane.f32.xlu0 %v1687
        %v1689 = vpop.xlane.xlu0 %1688
        %v1690 = vsel %vm1294, %v1686, -inf
        %1691 = vmax.xlane.f32.xlu0 %v1690
        %v1692 = vpop.xlane.xlu0 %1691
        %v1693 = vsub.f32 %v1685, %v1689
        %v1694 = vsub.f32 %v1686, %v1692
        %v1695 = vmul.f32 %v1693, 1.442695
        %v1696 = vpow.pop %v1695
        %v1697 = vmul.f32 %v1694, 1.442695
        %v1698 = vpow.pop %v1697
        %v1699 = vsel %vm1294, %v1696, 0.0
        %1700 = vadd.xlane.f32.xlu0 %v1699
        %v1701 = vpop.xlane.xlu0 %1700
        %v1702 = vsel %vm1294, %v1698, 0.0
        %1703 = vadd.xlane.f32.xlu0 %v1702
        %v1704 = vpop.xlane.xlu0 %1703
        %v1705 = vrcp.pop %v1701
        %v1706 = vmul.f32 %v1696, %v1705
        %v1707 = vrcp.pop %v1704
        %v1708 = vmul.f32 %v1698, %v1707
        %v1709 = vmul.f32 %v1189, %v1599
        %v1710 = vmul.f32 %v1192, %v1599
        %v1712 = vsel %vm1294, %v1706, 0
        %v1715 = vsel %vm1294, %v1708, 0
        %1717 = vmatprep.subr.mxu0 0.0
        %1718 = vmatpush1.msra.mxu0 0.0
        %1719 = vmatprep.subr.mxu0 0.0
        %1720 = vmatpush1.msra.mxu0 0.0
        %1721 = vmatprep.subr.mxu0 0.0
        %1722 = vmatpush1.msra.mxu0 0.0
        %1723 = vmatprep.subr.mxu0 0.0
        %1724 = vmatpush1.msra.mxu0 0.0
        %1725 = vmatprep.subr.mxu0 0.0
        %1726 = vmatpush1.msra.mxu0 0.0
        %1727 = vmatprep.subr.mxu0 0.0
        %1728 = vmatpush1.msra.mxu0 0.0
        %1729 = vmatprep.subr.mxu0 0.0
        %1730 = vmatpush1.msra.mxu0 0.0
        %1731 = vmatprep.subr.mxu0 0.0
        %1732 = vmatpush1.msra.mxu0 0.0
        %1733 = vmatprep.subr.mxu0 0.0
        %1734 = vmatpush1.msra.mxu0 0.0
        %1735 = vmatprep.subr.mxu0 0.0
        %1736 = vmatpush1.msra.mxu0 0.0
        %1737 = vmatprep.subr.mxu0 0.0
        %1738 = vmatpush1.msra.mxu0 0.0
        %1739 = vmatprep.subr.mxu0 0.0
        %1740 = vmatpush1.msra.mxu0 0.0
        %1741 = vmatprep.subr.mxu0 0.0
        %1742 = vmatpush1.msra.mxu0 0.0
        %1743 = vmatprep.subr.mxu0 0.0
        %1744 = vmatpush1.msra.mxu0 0.0
        %1745 = vmatprep.subr.mxu0 0.0
        %1746 = vmatpush1.msra.mxu0 %v1710
        %1747 = vmatprep.subr.mxu0 0.0
        %1748 = vmatpush1.msra.mxu0 %v1709
        %1749 = vmatprep.subr.mxu0 0.0
        %1750 = vmatpush2.msra.mxu0 0.0
        %1751 = vmatprep.subr.mxu0 0.0
        %1752 = vmatpush2.msra.mxu0 0.0
        %1753 = vmatprep.subr.mxu0 0.0
        %1754 = vmatpush2.msra.mxu0 0.0
        %1755 = vmatprep.subr.mxu0 0.0
        %1756 = vmatpush2.msra.mxu0 0.0
        %1757 = vmatprep.subr.mxu0 0.0
        %1758 = vmatpush2.msra.mxu0 0.0
        %1759 = vmatprep.subr.mxu0 0.0
        %1760 = vmatpush2.msra.mxu0 0.0
        %1761 = vmatprep.subr.mxu0 0.0
        %1762 = vmatpush2.msra.mxu0 0.0
        %1763 = vmatprep.subr.mxu0 0.0
        %1764 = vmatpush2.msra.mxu0 0.0
        %1765 = vmatprep.subr.mxu0 0.0
        %1766 = vmatpush2.msra.mxu0 0.0
        %1767 = vmatprep.subr.mxu0 0.0
        %1768 = vmatpush2.msra.mxu0 0.0
        %1769 = vmatprep.subr.mxu0 0.0
        %1770 = vmatpush2.msra.mxu0 0.0
        %1771 = vmatprep.subr.mxu0 0.0
        %1772 = vmatpush2.msra.mxu0 0.0
        %1773 = vmatprep.subr.mxu0 0.0
        %1774 = vmatpush2.msra.mxu0 0.0
        %1775 = vmatprep.subr.mxu0 0.0
        %1776 = vmatpush2.msra.mxu0 0.0
        %1777 = vmatprep.subr.mxu0 0.0
        %1778 = vmatpush2.msra.mxu0 0.0
        %1779 = vmatprep.subr.mxu0 0.0
        %1780 = vmatpush2.msra.mxu0 0.0
        %1781 = vmatprep.mubr.f32.mxu0 0.0
        %1782 = vmatmul.mubr.f32.gmra.mxu0 %v1712
        %v1783 = vpop.f32.mrf.mxu0
        %v1784 = vadd.f32 0.0, %v1783
        %v1785 = vpop.f32.mrf.mxu0
        %1786 = vmatprep.mubr.f32.mxu0 0.0
        %1787 = vmatmul.mubr.f32.gmra.mxu0 %v1715
        %v1788 = vpop.f32.mrf.mxu0
        %v1789 = vadd.f32 0.0, %v1788
        %v1790 = vpop.f32.mrf.mxu0
        %1791 = vdwg.mxu0
        %v1792 = vadd.f32 %v1588, %v1784
        %v1793 = vadd.f32 %v1593, %v1789
        %vm1794 = vcmp.ge.s32.totalorder %v1196, 24
        %vm1795 = vcmp.lt.s32.totalorder %v1196, 32
        %vm1796 = vmand %vm1794, %vm1795
        %v1797 = vsel %vm1796, 1.0, 0.0
        %v1798 = vmul.f32 %v1057, %v1797
        %v1799 = vmul.f32 %v1060, %v1797
        %v1801 = vsel %vm1018, %v1798, 0
        %v1804 = vsel %vm1018, %v1799, 0
        %1806 = vmatprep.subr.mxu0 0.0
        %1807 = vmatpush1.xpose.msra.mxu0 0.0
        %1808 = vmatprep.subr.mxu0 0.0
        %1809 = vmatpush1.xpose.msra.mxu0 0.0
        %1810 = vmatprep.subr.mxu0 0.0
        %1811 = vmatpush1.xpose.msra.mxu0 0.0
        %1812 = vmatprep.subr.mxu0 0.0
        %1813 = vmatpush1.xpose.msra.mxu0 0.0
        %1814 = vmatprep.subr.mxu0 0.0
        %1815 = vmatpush1.xpose.msra.mxu0 0.0
        %1816 = vmatprep.subr.mxu0 0.0
        %1817 = vmatpush1.xpose.msra.mxu0 0.0
        %1818 = vmatprep.subr.mxu0 0.0
        %1819 = vmatpush1.xpose.msra.mxu0 0.0
        %1820 = vmatprep.subr.mxu0 0.0
        %1821 = vmatpush1.xpose.msra.mxu0 0.0
        %1822 = vmatprep.subr.mxu0 0.0
        %1823 = vmatpush1.xpose.msra.mxu0 0.0
        %1824 = vmatprep.subr.mxu0 0.0
        %1825 = vmatpush1.xpose.msra.mxu0 0.0
        %1826 = vmatprep.subr.mxu0 0.0
        %1827 = vmatpush1.xpose.msra.mxu0 0.0
        %1828 = vmatprep.subr.mxu0 0.0
        %1829 = vmatpush1.xpose.msra.mxu0 0.0
        %1830 = vmatprep.subr.mxu0 0.0
        %1831 = vmatpush1.xpose.msra.mxu0 0.0
        %1832 = vmatprep.subr.mxu0 0.0
        %1833 = vmatpush1.xpose.msra.mxu0 0.0
        %1834 = vmatprep.subr.mxu0 0.0
        %1835 = vmatpush1.xpose.msra.mxu0 %v1213
        %1836 = vmatprep.subr.mxu0 0.0
        %1837 = vmatpush1.xpose.msra.mxu0 %v1210
        %1838 = vmatprep.subr.mxu0 0.0
        %1839 = vmatpush2.xpose.msra.mxu0 0.0
        %1840 = vmatprep.subr.mxu0 0.0
        %1841 = vmatpush2.xpose.msra.mxu0 0.0
        %1842 = vmatprep.subr.mxu0 0.0
        %1843 = vmatpush2.xpose.msra.mxu0 0.0
        %1844 = vmatprep.subr.mxu0 0.0
        %1845 = vmatpush2.xpose.msra.mxu0 0.0
        %1846 = vmatprep.subr.mxu0 0.0
        %1847 = vmatpush2.xpose.msra.mxu0 0.0
        %1848 = vmatprep.subr.mxu0 0.0
        %1849 = vmatpush2.xpose.msra.mxu0 0.0
        %1850 = vmatprep.subr.mxu0 0.0
        %1851 = vmatpush2.xpose.msra.mxu0 0.0
        %1852 = vmatprep.subr.mxu0 0.0
        %1853 = vmatpush2.xpose.msra.mxu0 0.0
        %1854 = vmatprep.subr.mxu0 0.0
        %1855 = vmatpush2.xpose.msra.mxu0 0.0
        %1856 = vmatprep.subr.mxu0 0.0
        %1857 = vmatpush2.xpose.msra.mxu0 0.0
        %1858 = vmatprep.subr.mxu0 0.0
        %1859 = vmatpush2.xpose.msra.mxu0 0.0
        %1860 = vmatprep.subr.mxu0 0.0
        %1861 = vmatpush2.xpose.msra.mxu0 0.0
        %1862 = vmatprep.subr.mxu0 0.0
        %1863 = vmatpush2.xpose.msra.mxu0 0.0
        %1864 = vmatprep.subr.mxu0 0.0
        %1865 = vmatpush2.xpose.msra.mxu0 0.0
        %1866 = vmatprep.subr.mxu0 0.0
        %1867 = vmatpush2.xpose.msra.mxu0 0.0
        %1868 = vmatprep.subr.mxu0 0.0
        %1869 = vmatpush2.xpose.msra.mxu0 0.0
        %1870 = vmatprep.mubr.f32.mxu0 0.0
        %1871 = vmatmul.mubr.f32.gmra.mxu0 %v1801
        %v1872 = vpop.f32.mrf.mxu0
        %v1873 = vadd.f32 0.0, %v1872
        %v1874 = vpop.f32.mrf.mxu0
        %1875 = vmatprep.mubr.f32.mxu0 0.0
        %1876 = vmatmul.mubr.f32.gmra.mxu0 %v1804
        %v1877 = vpop.f32.mrf.mxu0
        %v1878 = vadd.f32 0.0, %v1877
        %v1879 = vpop.f32.mrf.mxu0
        %1880 = vdwg.mxu0
        %v1881 = vmul.f32 %v1873, 0.35355338
        %v1882 = vmul.f32 %v1878, 0.35355338
        %v1883 = vadd.f32 %v1881, %v992
        %v1884 = vadd.f32 %v1882, %v993
        %v1885 = vsel %vm1294, %v1883, -inf
        %1886 = vmax.xlane.f32.xlu0 %v1885
        %v1887 = vpop.xlane.xlu0 %1886
        %v1888 = vsel %vm1294, %v1884, -inf
        %1889 = vmax.xlane.f32.xlu0 %v1888
        %v1890 = vpop.xlane.xlu0 %1889
        %v1891 = vsub.f32 %v1883, %v1887
        %v1892 = vsub.f32 %v1884, %v1890
        %v1893 = vmul.f32 %v1891, 1.442695
        %v1894 = vpow.pop %v1893
        %v1895 = vmul.f32 %v1892, 1.442695
        %v1896 = vpow.pop %v1895
        %v1897 = vsel %vm1294, %v1894, 0.0
        %1898 = vadd.xlane.f32.xlu0 %v1897
        %v1899 = vpop.xlane.xlu0 %1898
        %v1900 = vsel %vm1294, %v1896, 0.0
        %1901 = vadd.xlane.f32.xlu0 %v1900
        %v1902 = vpop.xlane.xlu0 %1901
        %v1903 = vrcp.pop %v1899
        %v1904 = vmul.f32 %v1894, %v1903
        %v1905 = vrcp.pop %v1902
        %v1906 = vmul.f32 %v1896, %v1905
        %v1907 = vmul.f32 %v1189, %v1797
        %v1908 = vmul.f32 %v1192, %v1797
        %v1910 = vsel %vm1294, %v1904, 0
        %v1913 = vsel %vm1294, %v1906, 0
        %1915 = vmatprep.subr.mxu0 0.0
        %1916 = vmatpush1.msra.mxu0 0.0
        %1917 = vmatprep.subr.mxu0 0.0
        %1918 = vmatpush1.msra.mxu0 0.0
        %1919 = vmatprep.subr.mxu0 0.0
        %1920 = vmatpush1.msra.mxu0 0.0
        %1921 = vmatprep.subr.mxu0 0.0
        %1922 = vmatpush1.msra.mxu0 0.0
        %1923 = vmatprep.subr.mxu0 0.0
        %1924 = vmatpush1.msra.mxu0 0.0
        %1925 = vmatprep.subr.mxu0 0.0
        %1926 = vmatpush1.msra.mxu0 0.0
        %1927 = vmatprep.subr.mxu0 0.0
        %1928 = vmatpush1.msra.mxu0 0.0
        %1929 = vmatprep.subr.mxu0 0.0
        %1930 = vmatpush1.msra.mxu0 0.0
        %1931 = vmatprep.subr.mxu0 0.0
        %1932 = vmatpush1.msra.mxu0 0.0
        %1933 = vmatprep.subr.mxu0 0.0
        %1934 = vmatpush1.msra.mxu0 0.0
        %1935 = vmatprep.subr.mxu0 0.0
        %1936 = vmatpush1.msra.mxu0 0.0
        %1937 = vmatprep.subr.mxu0 0.0
        %1938 = vmatpush1.msra.mxu0 0.0
        %1939 = vmatprep.subr.mxu0 0.0
        %1940 = vmatpush1.msra.mxu0 0.0
        %1941 = vmatprep.subr.mxu0 0.0
        %1942 = vmatpush1.msra.mxu0 0.0
        %1943 = vmatprep.subr.mxu0 0.0
        %1944 = vmatpush1.msra.mxu0 %v1908
        %1945 = vmatprep.subr.mxu0 0.0
        %1946 = vmatpush1.msra.mxu0 %v1907
        %1947 = vmatprep.subr.mxu0 0.0
        %1948 = vmatpush2.msra.mxu0 0.0
        %1949 = vmatprep.subr.mxu0 0.0
        %1950 = vmatpush2.msra.mxu0 0.0
        %1951 = vmatprep.subr.mxu0 0.0
        %1952 = vmatpush2.msra.mxu0 0.0
        %1953 = vmatprep.subr.mxu0 0.0
        %1954 = vmatpush2.msra.mxu0 0.0
        %1955 = vmatprep.subr.mxu0 0.0
        %1956 = vmatpush2.msra.mxu0 0.0
        %1957 = vmatprep.subr.mxu0 0.0
        %1958 = vmatpush2.msra.mxu0 0.0
        %1959 = vmatprep.subr.mxu0 0.0
        %1960 = vmatpush2.msra.mxu0 0.0
        %1961 = vmatprep.subr.mxu0 0.0
        %1962 = vmatpush2.msra.mxu0 0.0
        %1963 = vmatprep.subr.mxu0 0.0
        %1964 = vmatpush2.msra.mxu0 0.0
        %1965 = vmatprep.subr.mxu0 0.0
        %1966 = vmatpush2.msra.mxu0 0.0
        %1967 = vmatprep.subr.mxu0 0.0
        %1968 = vmatpush2.msra.mxu0 0.0
        %1969 = vmatprep.subr.mxu0 0.0
        %1970 = vmatpush2.msra.mxu0 0.0
        %1971 = vmatprep.subr.mxu0 0.0
        %1972 = vmatpush2.msra.mxu0 0.0
        %1973 = vmatprep.subr.mxu0 0.0
        %1974 = vmatpush2.msra.mxu0 0.0
        %1975 = vmatprep.subr.mxu0 0.0
        %1976 = vmatpush2.msra.mxu0 0.0
        %1977 = vmatprep.subr.mxu0 0.0
        %1978 = vmatpush2.msra.mxu0 0.0
        %1979 = vmatprep.mubr.f32.mxu0 0.0
        %1980 = vmatmul.mubr.f32.gmra.mxu0 %v1910
        %v1981 = vpop.f32.mrf.mxu0
        %v1982 = vadd.f32 0.0, %v1981
        %v1983 = vpop.f32.mrf.mxu0
        %1984 = vmatprep.mubr.f32.mxu0 0.0
        %1985 = vmatmul.mubr.f32.gmra.mxu0 %v1913
        %v1986 = vpop.f32.mrf.mxu0
        %v1987 = vadd.f32 0.0, %v1986
        %v1988 = vpop.f32.mrf.mxu0
        %1989 = vdwg.mxu0
        %v1990 = vadd.f32 %v1792, %v1982
        %v1991 = vadd.f32 %v1793, %v1987
        %v1992 = vpack.c.bf16 %v1991, %v1990
        %v1993 = vld [vmem:[%s847] sm:$0xf]
        %v1994 = vld [vmem:[%s847 + $0x4] sm:$0xf]
        %v1995 = vld [vmem:[%s847 + $0x8] sm:$0xf]
        %v1996 = vld [vmem:[%s847 + $0xc] sm:$0xf]
        %v1997 = vld [vmem:[%s850] sm:$0x1]
        %v1999 = vlaneseq
        %v2000 = vshrl.u32 %v1999, 7
        %v2001 = vsub.s32 0, %v2000
        %v2002 = vrot.slane %v1997, %v2001
        %v2008 = vunpack.c.l.b16 %v1993
        %v2009 = vunpack.c.l.b16 %v1994
        %v2010 = vunpack.c.l.b16 %v1995
        %v2011 = vunpack.c.l.b16 %v1996
        %v2012 = vpack.c.b16 %v2009, %v2008
        %v2013 = vpack.c.b16 %v2011, %v2010
        %v2017 = vsel %vm1018, %v1992, 0
        %2019 = vmatprep.subr.bf16.mxu0 0
        %2020 = vmatpush1.bf16.msra.mxu0 0
        %2021 = vmatprep.subr.bf16.mxu0 0
        %2022 = vmatpush1.bf16.msra.mxu0 0
        %2023 = vmatprep.subr.bf16.mxu0 0
        %2024 = vmatpush1.bf16.msra.mxu0 0
        %2025 = vmatprep.subr.bf16.mxu0 0
        %2026 = vmatpush1.bf16.msra.mxu0 0
        %2027 = vmatprep.subr.bf16.mxu0 0
        %2028 = vmatpush1.bf16.msra.mxu0 0
        %2029 = vmatprep.subr.bf16.mxu0 0
        %2030 = vmatpush1.bf16.msra.mxu0 0
        %2031 = vmatprep.subr.bf16.mxu0 0
        %2032 = vmatpush1.bf16.msra.mxu0 %v2013
        %2033 = vmatprep.subr.bf16.mxu0 0
        %2034 = vmatpush1.bf16.msra.mxu0 %v2012
        %2035 = vmatprep.subr.bf16.mxu0 0
        %2036 = vmatpush2.bf16.msra.mxu0 0
        %2037 = vmatprep.subr.bf16.mxu0 0
        %2038 = vmatpush2.bf16.msra.mxu0 0
        %2039 = vmatprep.subr.bf16.mxu0 0
        %2040 = vmatpush2.bf16.msra.mxu0 0
        %2041 = vmatprep.subr.bf16.mxu0 0
        %2042 = vmatpush2.bf16.msra.mxu0 0
        %2043 = vmatprep.subr.bf16.mxu0 0
        %2044 = vmatpush2.bf16.msra.mxu0 0
        %2045 = vmatprep.subr.bf16.mxu0 0
        %2046 = vmatpush2.bf16.msra.mxu0 0
        %2047 = vmatprep.subr.bf16.mxu0 0
        %2048 = vmatpush2.bf16.msra.mxu0 0
        %2049 = vmatprep.subr.bf16.mxu0 0
        %2050 = vmatpush2.bf16.msra.mxu0 0
        %2051 = vmatprep.mubr.bf16.mxu0 0
        %2052 = vmatmul.mubr.bf16.gmra.mxu0 %v2017
        %v2053 = vpop.f32.mrf.mxu0
        %v2054 = vadd.f32 %v2002, %v2053
        %v2055 = vpop.f32.mrf.mxu0
        %v2056 = vpop.f32.mrf.mxu0
        %v2057 = vadd.f32 %v2002, %v2056
        %v2058 = vpop.f32.mrf.mxu0
        %2059 = vdwg.mxu0
        %v2060 = vadd.f32 %v990, %v2054
        %v2061 = vadd.f32 %v991, %v2057
        %v2062 = vsel %vm1018, %v2060, 0.0
        %2063 = vadd.xlane.f32.xlu0 %v2062
        %v2064 = vpop.xlane.xlu0 %2063
        %v2065 = vsel %vm1018, %v2061, 0.0
        %2066 = vadd.xlane.f32.xlu0 %v2065
        %v2067 = vpop.xlane.xlu0 %2066
        %v2068 = vrcp.pop 32.0
        %v2069 = vmul.f32 %v2064, %v2068
        %v2070 = vmul.f32 %v2067, %v2068
        %v2071 = vsub.f32 %v2060, %v2069
        %v2072 = vsub.f32 %v2061, %v2070
        %v2073 = vmul.f32 %v2071, %v2071
        %v2074 = vmul.f32 %v2072, %v2072
        %v2075 = vsel %vm1018, %v2073, 0.0
        %2076 = vadd.xlane.f32.xlu0 %v2075
        %v2077 = vpop.xlane.xlu0 %2076
        %v2078 = vsel %vm1018, %v2074, 0.0
        %2079 = vadd.xlane.f32.xlu0 %v2078
        %v2080 = vpop.xlane.xlu0 %2079
        %v2081 = vmul.f32 %v2077, %v2068
        %v2082 = vmul.f32 %v2080, %v2068
        %v2083 = vadd.f32 %v2081, 1e-05
        %v2084 = vadd.f32 %v2082, 1e-05
        %v2085 = vrsqrt.pop %v2083
        %v2086 = vrsqrt.pop %v2084
        %v2087 = vmul.f32 %v2071, %v2085
        %v2088 = vmul.f32 %v2072, %v2086
        %v2089 = vld [vmem:[%s860] sm:$0x1]
        %v2091 = vlaneseq
        %v2092 = vshrl.u32 %v2091, 7
        %v2093 = vsub.s32 0, %v2092
        %v2094 = vrot.slane %v2089, %v2093
        %v2096 = vmul.f32 %v2087, %v2094
        %v2097 = vmul.f32 %v2088, %v2094
        %v2098 = vld [vmem:[%s863] sm:$0x1]
        %v2100 = vlaneseq
        %v2101 = vshrl.u32 %v2100, 7
        %v2102 = vsub.s32 0, %v2101
        %v2103 = vrot.slane %v2098, %v2102
        %v2105 = vadd.f32 %v2096, %v2103
        %v2106 = vadd.f32 %v2097, %v2103
        %v2107 = vpack.c.bf16 %v2106, %v2105
        %v2108 = vld [vmem:[%s737] sm:$0xff]
        %v2109 = vld [vmem:[%s737 + $0x8] sm:$0xff]
        %v2110 = vld [vmem:[%s737 + $0x40] sm:$0xff]
        %v2111 = vld [vmem:[%s737 + $0x48] sm:$0xff]
        %v2112 = vld [vmem:[%s737 + $0x80] sm:$0xff]
        %v2113 = vld [vmem:[%s737 + $0x88] sm:$0xff]
        %v2114 = vld [vmem:[%s737 + $0xc0] sm:$0xff]
        %v2115 = vld [vmem:[%s737 + $0xc8] sm:$0xff]
        %v2116 = vld [vmem:[%s854] sm:$0xf]
        %v2118 = vlaneseq
        %v2119 = vshrl.u32 %v2118, 7
        %v2120 = vsub.s32 0, %v2119
        %v2121 = vrot.slane %v2116, %v2120
        %v2122 = vlaneseq
        %v2123 = vshrl.u32 %v2122, 7
        %v2124 = vsub.s32 1, %v2123
        %v2125 = vrot.slane %v2116, %v2124
        %v2126 = vlaneseq
        %v2127 = vshrl.u32 %v2126, 7
        %v2128 = vsub.s32 2, %v2127
        %v2129 = vrot.slane %v2116, %v2128
        %v2130 = vlaneseq
        %v2131 = vshrl.u32 %v2130, 7
        %v2132 = vsub.s32 3, %v2131
        %v2133 = vrot.slane %v2116, %v2132
        %v2146 = vunpack.c.l.b16 %v2108
        %v2147 = vunpack.c.h.b16 %v2108
        %v2148 = vunpack.c.l.b16 %v2109
        %v2149 = vunpack.c.h.b16 %v2109
        %v2150 = vunpack.c.l.b16 %v2110
        %v2151 = vunpack.c.h.b16 %v2110
        %v2152 = vunpack.c.l.b16 %v2111
        %v2153 = vunpack.c.h.b16 %v2111
        %v2154 = vunpack.c.l.b16 %v2112
        %v2155 = vunpack.c.h.b16 %v2112
        %v2156 = vunpack.c.l.b16 %v2113
        %v2157 = vunpack.c.h.b16 %v2113
        %v2158 = vunpack.c.l.b16 %v2114
        %v2159 = vunpack.c.h.b16 %v2114
        %v2160 = vunpack.c.l.b16 %v2115
        %v2161 = vunpack.c.h.b16 %v2115
        %v2162 = vpack.c.b16 %v2150, %v2146
        %v2163 = vpack.c.b16 %v2151, %v2147
        %v2164 = vpack.c.b16 %v2152, %v2148
        %v2165 = vpack.c.b16 %v2153, %v2149
        %v2166 = vpack.c.b16 %v2158, %v2154
        %v2167 = vpack.c.b16 %v2159, %v2155
        %v2168 = vpack.c.b16 %v2160, %v2156
        %v2169 = vpack.c.b16 %v2161, %v2157
        %v2179 = vsel %vm1018, %v2107, 0
        %2181 = vmatprep.subr.bf16.mxu0 0
        %2182 = vmatpush1.bf16.msra.mxu0 0
        %2183 = vmatprep.subr.bf16.mxu0 0
        %2184 = vmatpush1.bf16.msra.mxu0 0
        %2185 = vmatprep.subr.bf16.mxu0 0
        %2186 = vmatpush1.bf16.msra.mxu0 0
        %2187 = vmatprep.subr.bf16.mxu0 0
        %2188 = vmatpush1.bf16.msra.mxu0 0
        %2189 = vmatprep.subr.bf16.mxu0 0
        %2190 = vmatpush1.bf16.msra.mxu0 0
        %2191 = vmatprep.subr.bf16.mxu0 0
        %2192 = vmatpush1.bf16.msra.mxu0 0
        %2193 = vmatprep.subr.bf16.mxu0 %v2167
        %2194 = vmatpush1.bf16.msra.mxu0 %v2166
        %2195 = vmatprep.subr.bf16.mxu0 %v2163
        %2196 = vmatpush1.bf16.msra.mxu0 %v2162
        %2197 = vmatprep.subr.bf16.mxu0 0
        %2198 = vmatpush2.bf16.msra.mxu0 0
        %2199 = vmatprep.subr.bf16.mxu0 0
        %2200 = vmatpush2.bf16.msra.mxu0 0
        %2201 = vmatprep.subr.bf16.mxu0 0
        %2202 = vmatpush2.bf16.msra.mxu0 0
        %2203 = vmatprep.subr.bf16.mxu0 0
        %2204 = vmatpush2.bf16.msra.mxu0 0
        %2205 = vmatprep.subr.bf16.mxu0 0
        %2206 = vmatpush2.bf16.msra.mxu0 0
        %2207 = vmatprep.subr.bf16.mxu0 0
        %2208 = vmatpush2.bf16.msra.mxu0 0
        %2209 = vmatprep.subr.bf16.mxu0 0
        %2210 = vmatpush2.bf16.msra.mxu0 0
        %2211 = vmatprep.subr.bf16.mxu0 0
        %2212 = vmatpush2.bf16.msra.mxu0 0
        %2213 = vmatprep.mubr.bf16.mxu0 0
        %2214 = vmatmul.mubr.bf16.gmra.mxu0 %v2179
        %v2215 = vpop.f32.mrf.mxu0
        %v2216 = vadd.f32 %v2121, %v2215
        %v2217 = vpop.f32.mrf.mxu0
        %v2218 = vadd.f32 %v2125, %v2217
        %v2219 = vpop.f32.mrf.mxu0
        %v2220 = vadd.f32 %v2121, %v2219
        %v2221 = vpop.f32.mrf.mxu0
        %v2222 = vadd.f32 %v2125, %v2221
        %2223 = vdwg.mxu0
        %2224 = vmatprep.subr.bf16.mxu0 0
        %2225 = vmatpush1.bf16.msra.mxu0 0
        %2226 = vmatprep.subr.bf16.mxu0 0
        %2227 = vmatpush1.bf16.msra.mxu0 0
        %2228 = vmatprep.subr.bf16.mxu0 0
        %2229 = vmatpush1.bf16.msra.mxu0 0
        %2230 = vmatprep.subr.bf16.mxu0 0
        %2231 = vmatpush1.bf16.msra.mxu0 0
        %2232 = vmatprep.subr.bf16.mxu0 0
        %2233 = vmatpush1.bf16.msra.mxu0 0
        %2234 = vmatprep.subr.bf16.mxu0 0
        %2235 = vmatpush1.bf16.msra.mxu0 0
        %2236 = vmatprep.subr.bf16.mxu0 %v2169
        %2237 = vmatpush1.bf16.msra.mxu0 %v2168
        %2238 = vmatprep.subr.bf16.mxu0 %v2165
        %2239 = vmatpush1.bf16.msra.mxu0 %v2164
        %2240 = vmatprep.subr.bf16.mxu0 0
        %2241 = vmatpush2.bf16.msra.mxu0 0
        %2242 = vmatprep.subr.bf16.mxu0 0
        %2243 = vmatpush2.bf16.msra.mxu0 0
        %2244 = vmatprep.subr.bf16.mxu0 0
        %2245 = vmatpush2.bf16.msra.mxu0 0
        %2246 = vmatprep.subr.bf16.mxu0 0
        %2247 = vmatpush2.bf16.msra.mxu0 0
        %2248 = vmatprep.subr.bf16.mxu0 0
        %2249 = vmatpush2.bf16.msra.mxu0 0
        %2250 = vmatprep.subr.bf16.mxu0 0
        %2251 = vmatpush2.bf16.msra.mxu0 0
        %2252 = vmatprep.subr.bf16.mxu0 0
        %2253 = vmatpush2.bf16.msra.mxu0 0
        %2254 = vmatprep.subr.bf16.mxu0 0
        %2255 = vmatpush2.bf16.msra.mxu0 0
        %2256 = vmatprep.mubr.bf16.mxu0 0
        %2257 = vmatmul.mubr.bf16.gmra.mxu0 %v2179
        %v2258 = vpop.f32.mrf.mxu0
        %v2259 = vadd.f32 %v2129, %v2258
        %v2260 = vpop.f32.mrf.mxu0
        %v2261 = vadd.f32 %v2133, %v2260
        %v2262 = vpop.f32.mrf.mxu0
        %v2263 = vadd.f32 %v2129, %v2262
        %v2264 = vpop.f32.mrf.mxu0
        %v2265 = vadd.f32 %v2133, %v2264
        %2266 = vdwg.mxu0
        %v2267 = vmax.f32 %v2216, 0.0
        %v2268 = vmax.f32 %v2218, 0.0
        %v2269 = vmax.f32 %v2259, 0.0
        %v2270 = vmax.f32 %v2261, 0.0
        %v2271 = vmax.f32 %v2220, 0.0
        %v2272 = vmax.f32 %v2222, 0.0
        %v2273 = vmax.f32 %v2263, 0.0
        %v2274 = vmax.f32 %v2265, 0.0
        %v2275 = vpack.c.bf16 %v2271, %v2267
        %v2276 = vpack.c.bf16 %v2272, %v2268
        %v2277 = vpack.c.bf16 %v2273, %v2269
        %v2278 = vpack.c.bf16 %v2274, %v2270
        %v2279 = vld [vmem:[%s746] sm:$0xff]
        %v2280 = vld [vmem:[%s746 + $0x8] sm:$0xff]
        %v2281 = vld [vmem:[%s746 + $0x40] sm:$0xff]
        %v2282 = vld [vmem:[%s746 + $0x48] sm:$0xff]
        %v2283 = vld [vmem:[%s746 + $0x80] sm:$0xff]
        %v2284 = vld [vmem:[%s746 + $0x88] sm:$0xff]
        %v2285 = vld [vmem:[%s746 + $0xc0] sm:$0xff]
        %v2286 = vld [vmem:[%s746 + $0xc8] sm:$0xff]
        %v2287 = vld [vmem:[%s737 + $0x10] sm:$0xff]
        %v2288 = vld [vmem:[%s737 + $0x18] sm:$0xff]
        %v2289 = vld [vmem:[%s737 + $0x50] sm:$0xff]
        %v2290 = vld [vmem:[%s737 + $0x58] sm:$0xff]
        %v2291 = vld [vmem:[%s737 + $0x90] sm:$0xff]
        %v2292 = vld [vmem:[%s737 + $0x98] sm:$0xff]
        %v2293 = vld [vmem:[%s737 + $0xd0] sm:$0xff]
        %v2294 = vld [vmem:[%s737 + $0xd8] sm:$0xff]
        %v2295 = vld [vmem:[%s854 + $0x4] sm:$0xf]
        %v2297 = vlaneseq
        %v2298 = vshrl.u32 %v2297, 7
        %v2299 = vsub.s32 0, %v2298
        %v2300 = vrot.slane %v2295, %v2299
        %v2301 = vlaneseq
        %v2302 = vshrl.u32 %v2301, 7
        %v2303 = vsub.s32 1, %v2302
        %v2304 = vrot.slane %v2295, %v2303
        %v2305 = vlaneseq
        %v2306 = vshrl.u32 %v2305, 7
        %v2307 = vsub.s32 2, %v2306
        %v2308 = vrot.slane %v2295, %v2307
        %v2309 = vlaneseq
        %v2310 = vshrl.u32 %v2309, 7
        %v2311 = vsub.s32 3, %v2310
        %v2312 = vrot.slane %v2295, %v2311
        %v2325 = vunpack.c.l.b16 %v2287
        %v2326 = vunpack.c.h.b16 %v2287
        %v2327 = vunpack.c.l.b16 %v2288
        %v2328 = vunpack.c.h.b16 %v2288
        %v2329 = vunpack.c.l.b16 %v2289
        %v2330 = vunpack.c.h.b16 %v2289
        %v2331 = vunpack.c.l.b16 %v2290
        %v2332 = vunpack.c.h.b16 %v2290
        %v2333 = vunpack.c.l.b16 %v2291
        %v2334 = vunpack.c.h.b16 %v2291
        %v2335 = vunpack.c.l.b16 %v2292
        %v2336 = vunpack.c.h.b16 %v2292
        %v2337 = vunpack.c.l.b16 %v2293
        %v2338 = vunpack.c.h.b16 %v2293
        %v2339 = vunpack.c.l.b16 %v2294
        %v2340 = vunpack.c.h.b16 %v2294
        %v2341 = vpack.c.b16 %v2329, %v2325
        %v2342 = vpack.c.b16 %v2330, %v2326
        %v2343 = vpack.c.b16 %v2331, %v2327
        %v2344 = vpack.c.b16 %v2332, %v2328
        %v2345 = vpack.c.b16 %v2337, %v2333
        %v2346 = vpack.c.b16 %v2338, %v2334
        %v2347 = vpack.c.b16 %v2339, %v2335
        %v2348 = vpack.c.b16 %v2340, %v2336
        %2357 = vmatprep.subr.bf16.mxu0 0
        %2358 = vmatpush1.bf16.msra.mxu0 0
        %2359 = vmatprep.subr.bf16.mxu0 0
        %2360 = vmatpush1.bf16.msra.mxu0 0
        %2361 = vmatprep.subr.bf16.mxu0 0
        %2362 = vmatpush1.bf16.msra.mxu0 0
        %2363 = vmatprep.subr.bf16.mxu0 0
        %2364 = vmatpush1.bf16.msra.mxu0 0
        %2365 = vmatprep.subr.bf16.mxu0 0
        %2366 = vmatpush1.bf16.msra.mxu0 0
        %2367 = vmatprep.subr.bf16.mxu0 0
        %2368 = vmatpush1.bf16.msra.mxu0 0
        %2369 = vmatprep.subr.bf16.mxu0 %v2346
        %2370 = vmatpush1.bf16.msra.mxu0 %v2345
        %2371 = vmatprep.subr.bf16.mxu0 %v2342
        %2372 = vmatpush1.bf16.msra.mxu0 %v2341
        %2373 = vmatprep.subr.bf16.mxu0 0
        %2374 = vmatpush2.bf16.msra.mxu0 0
        %2375 = vmatprep.subr.bf16.mxu0 0
        %2376 = vmatpush2.bf16.msra.mxu0 0
        %2377 = vmatprep.subr.bf16.mxu0 0
        %2378 = vmatpush2.bf16.msra.mxu0 0
        %2379 = vmatprep.subr.bf16.mxu0 0
        %2380 = vmatpush2.bf16.msra.mxu0 0
        %2381 = vmatprep.subr.bf16.mxu0 0
        %2382 = vmatpush2.bf16.msra.mxu0 0
        %2383 = vmatprep.subr.bf16.mxu0 0
        %2384 = vmatpush2.bf16.msra.mxu0 0
        %2385 = vmatprep.subr.bf16.mxu0 0
        %2386 = vmatpush2.bf16.msra.mxu0 0
        %2387 = vmatprep.subr.bf16.mxu0 0
        %2388 = vmatpush2.bf16.msra.mxu0 0
        %2389 = vmatprep.mubr.bf16.mxu0 0
        %2390 = vmatmul.mubr.bf16.gmra.mxu0 %v2179
        %v2391 = vpop.f32.mrf.mxu0
        %v2392 = vadd.f32 %v2300, %v2391
        %v2393 = vpop.f32.mrf.mxu0
        %v2394 = vadd.f32 %v2304, %v2393
        %v2395 = vpop.f32.mrf.mxu0
        %v2396 = vadd.f32 %v2300, %v2395
        %v2397 = vpop.f32.mrf.mxu0
        %v2398 = vadd.f32 %v2304, %v2397
        %2399 = vdwg.mxu0
        %2400 = vmatprep.subr.bf16.mxu0 0
        %2401 = vmatpush1.bf16.msra.mxu0 0
        %2402 = vmatprep.subr.bf16.mxu0 0
        %2403 = vmatpush1.bf16.msra.mxu0 0
        %2404 = vmatprep.subr.bf16.mxu0 0
        %2405 = vmatpush1.bf16.msra.mxu0 0
        %2406 = vmatprep.subr.bf16.mxu0 0
        %2407 = vmatpush1.bf16.msra.mxu0 0
        %2408 = vmatprep.subr.bf16.mxu0 0
        %2409 = vmatpush1.bf16.msra.mxu0 0
        %2410 = vmatprep.subr.bf16.mxu0 0
        %2411 = vmatpush1.bf16.msra.mxu0 0
        %2412 = vmatprep.subr.bf16.mxu0 %v2348
        %2413 = vmatpush1.bf16.msra.mxu0 %v2347
        %2414 = vmatprep.subr.bf16.mxu0 %v2344
        %2415 = vmatpush1.bf16.msra.mxu0 %v2343
        %2416 = vmatprep.subr.bf16.mxu0 0
        %2417 = vmatpush2.bf16.msra.mxu0 0
        %2418 = vmatprep.subr.bf16.mxu0 0
        %2419 = vmatpush2.bf16.msra.mxu0 0
        %2420 = vmatprep.subr.bf16.mxu0 0
        %2421 = vmatpush2.bf16.msra.mxu0 0
        %2422 = vmatprep.subr.bf16.mxu0 0
        %2423 = vmatpush2.bf16.msra.mxu0 0
        %2424 = vmatprep.subr.bf16.mxu0 0
        %2425 = vmatpush2.bf16.msra.mxu0 0
        %2426 = vmatprep.subr.bf16.mxu0 0
        %2427 = vmatpush2.bf16.msra.mxu0 0
        %2428 = vmatprep.subr.bf16.mxu0 0
        %2429 = vmatpush2.bf16.msra.mxu0 0
        %2430 = vmatprep.subr.bf16.mxu0 0
        %2431 = vmatpush2.bf16.msra.mxu0 0
        %2432 = vmatprep.mubr.bf16.mxu0 0
        %2433 = vmatmul.mubr.bf16.gmra.mxu0 %v2179
        %v2434 = vpop.f32.mrf.mxu0
        %v2435 = vadd.f32 %v2308, %v2434
        %v2436 = vpop.f32.mrf.mxu0
        %v2437 = vadd.f32 %v2312, %v2436
        %v2438 = vpop.f32.mrf.mxu0
        %v2439 = vadd.f32 %v2308, %v2438
        %v2440 = vpop.f32.mrf.mxu0
        %v2441 = vadd.f32 %v2312, %v2440
        %2442 = vdwg.mxu0
        %v2443 = vmax.f32 %v2392, 0.0
        %v2444 = vmax.f32 %v2394, 0.0
        %v2445 = vmax.f32 %v2435, 0.0
        %v2446 = vmax.f32 %v2437, 0.0
        %v2447 = vmax.f32 %v2396, 0.0
        %v2448 = vmax.f32 %v2398, 0.0
        %v2449 = vmax.f32 %v2439, 0.0
        %v2450 = vmax.f32 %v2441, 0.0
        %v2451 = vpack.c.bf16 %v2447, %v2443
        %v2452 = vpack.c.bf16 %v2448, %v2444
        %v2453 = vpack.c.bf16 %v2449, %v2445
        %v2454 = vpack.c.bf16 %v2450, %v2446
        %v2455 = vld [vmem:[%s746 + $0x10] sm:$0xff]
        %v2456 = vld [vmem:[%s746 + $0x18] sm:$0xff]
        %v2457 = vld [vmem:[%s746 + $0x50] sm:$0xff]
        %v2458 = vld [vmem:[%s746 + $0x58] sm:$0xff]
        %v2459 = vld [vmem:[%s746 + $0x90] sm:$0xff]
        %v2460 = vld [vmem:[%s746 + $0x98] sm:$0xff]
        %v2461 = vld [vmem:[%s746 + $0xd0] sm:$0xff]
        %v2462 = vld [vmem:[%s746 + $0xd8] sm:$0xff]
        %v2471 = vunpack.c.l.b16 %v2455
        %v2472 = vunpack.c.h.b16 %v2455
        %v2473 = vunpack.c.l.b16 %v2456
        %v2474 = vunpack.c.h.b16 %v2456
        %v2475 = vunpack.c.l.b16 %v2457
        %v2476 = vunpack.c.h.b16 %v2457
        %v2477 = vunpack.c.l.b16 %v2458
        %v2478 = vunpack.c.h.b16 %v2458
        %v2479 = vunpack.c.l.b16 %v2459
        %v2480 = vunpack.c.h.b16 %v2459
        %v2481 = vunpack.c.l.b16 %v2460
        %v2482 = vunpack.c.h.b16 %v2460
        %v2483 = vunpack.c.l.b16 %v2461
        %v2484 = vunpack.c.h.b16 %v2461
        %v2485 = vunpack.c.l.b16 %v2462
        %v2486 = vunpack.c.h.b16 %v2462
        %v2487 = vpack.c.b16 %v2475, %v2471
        %v2488 = vpack.c.b16 %v2476, %v2472
        %v2489 = vpack.c.b16 %v2477, %v2473
        %v2490 = vpack.c.b16 %v2478, %v2474
        %v2491 = vpack.c.b16 %v2483, %v2479
        %v2492 = vpack.c.b16 %v2484, %v2480
        %v2493 = vpack.c.b16 %v2485, %v2481
        %v2494 = vpack.c.b16 %v2486, %v2482
        %2503 = vmatprep.subr.bf16.mxu0 0
        %2504 = vmatpush1.bf16.xpose.msra.mxu0 0
        %2505 = vmatprep.subr.bf16.mxu0 0
        %2506 = vmatpush1.bf16.xpose.msra.mxu0 0
        %2507 = vmatprep.subr.bf16.mxu0 0
        %2508 = vmatpush1.bf16.xpose.msra.mxu0 0
        %2509 = vmatprep.subr.bf16.mxu0 0
        %2510 = vmatpush1.bf16.xpose.msra.mxu0 0
        %2511 = vmatprep.subr.bf16.mxu0 0
        %2512 = vmatpush1.bf16.xpose.msra.mxu0 0
        %2513 = vmatprep.subr.bf16.mxu0 0
        %2514 = vmatpush1.bf16.xpose.msra.mxu0 0
        %2515 = vmatprep.subr.bf16.mxu0 %v2492
        %2516 = vmatpush1.bf16.xpose.msra.mxu0 %v2491
        %2517 = vmatprep.subr.bf16.mxu0 %v2488
        %2518 = vmatpush1.bf16.xpose.msra.mxu0 %v2487
        %2519 = vmatprep.subr.bf16.mxu0 0
        %2520 = vmatpush2.bf16.xpose.msra.mxu0 0
        %2521 = vmatprep.subr.bf16.mxu0 0
        %2522 = vmatpush2.bf16.xpose.msra.mxu0 0
        %2523 = vmatprep.subr.bf16.mxu0 0
        %2524 = vmatpush2.bf16.xpose.msra.mxu0 0
        %2525 = vmatprep.subr.bf16.mxu0 0
        %2526 = vmatpush2.bf16.xpose.msra.mxu0 0
        %2527 = vmatprep.subr.bf16.mxu0 0
        %2528 = vmatpush2.bf16.xpose.msra.mxu0 0
        %2529 = vmatprep.subr.bf16.mxu0 0
        %2530 = vmatpush2.bf16.xpose.msra.mxu0 0
        %2531 = vmatprep.subr.bf16.mxu0 0
        %2532 = vmatpush2.bf16.xpose.msra.mxu0 0
        %2533 = vmatprep.subr.bf16.mxu0 0
        %2534 = vmatpush2.bf16.xpose.msra.mxu0 0
        %2535 = vmatprep.mubr.bf16.mxu0 %v2452
        %2536 = vmatmul.mubr.bf16.gmra.mxu0 %v2451
        %v2537 = vpop.f32.mrf.mxu0
        %v2538 = vadd.f32 0.0, %v2537
        %v2539 = vpop.f32.mrf.mxu0
        %v2540 = vpop.f32.mrf.mxu0
        %v2541 = vadd.f32 0.0, %v2540
        %v2542 = vpop.f32.mrf.mxu0
        %2543 = vdwg.mxu0
        %2544 = vmatprep.subr.bf16.mxu0 0
        %2545 = vmatpush1.bf16.xpose.msra.mxu0 0
        %2546 = vmatprep.subr.bf16.mxu0 0
        %2547 = vmatpush1.bf16.xpose.msra.mxu0 0
        %2548 = vmatprep.subr.bf16.mxu0 0
        %2549 = vmatpush1.bf16.xpose.msra.mxu0 0
        %2550 = vmatprep.subr.bf16.mxu0 0
        %2551 = vmatpush1.bf16.xpose.msra.mxu0 0
        %2552 = vmatprep.subr.bf16.mxu0 0
        %2553 = vmatpush1.bf16.xpose.msra.mxu0 0
        %2554 = vmatprep.subr.bf16.mxu0 0
        %2555 = vmatpush1.bf16.xpose.msra.mxu0 0
        %2556 = vmatprep.subr.bf16.mxu0 %v2494
        %2557 = vmatpush1.bf16.xpose.msra.mxu0 %v2493
        %2558 = vmatprep.subr.bf16.mxu0 %v2490
        %2559 = vmatpush1.bf16.xpose.msra.mxu0 %v2489
        %2560 = vmatprep.subr.bf16.mxu0 0
        %2561 = vmatpush2.bf16.xpose.msra.mxu0 0
        %2562 = vmatprep.subr.bf16.mxu0 0
        %2563 = vmatpush2.bf16.xpose.msra.mxu0 0
        %2564 = vmatprep.subr.bf16.mxu0 0
        %2565 = vmatpush2.bf16.xpose.msra.mxu0 0
        %2566 = vmatprep.subr.bf16.mxu0 0
        %2567 = vmatpush2.bf16.xpose.msra.mxu0 0
        %2568 = vmatprep.subr.bf16.mxu0 0
        %2569 = vmatpush2.bf16.xpose.msra.mxu0 0
        %2570 = vmatprep.subr.bf16.mxu0 0
        %2571 = vmatpush2.bf16.xpose.msra.mxu0 0
        %2572 = vmatprep.subr.bf16.mxu0 0
        %2573 = vmatpush2.bf16.xpose.msra.mxu0 0
        %2574 = vmatprep.subr.bf16.mxu0 0
        %2575 = vmatpush2.bf16.xpose.msra.mxu0 0
        %2576 = vmatprep.mubr.bf16.mxu0 %v2454
        %2577 = vmatmul.mubr.bf16.gmra.mxu0 %v2453
        %v2578 = vpop.f32.mrf.mxu0
        %v2579 = vadd.f32 %v2538, %v2578
        %v2580 = vpop.f32.mrf.mxu0
        %v2581 = vpop.f32.mrf.mxu0
        %v2582 = vadd.f32 %v2541, %v2581
        %v2583 = vpop.f32.mrf.mxu0
        %2584 = vdwg.mxu0
        %v2593 = vunpack.c.l.b16 %v2279
        %v2594 = vunpack.c.h.b16 %v2279
        %v2595 = vunpack.c.l.b16 %v2280
        %v2596 = vunpack.c.h.b16 %v2280
        %v2597 = vunpack.c.l.b16 %v2281
        %v2598 = vunpack.c.h.b16 %v2281
        %v2599 = vunpack.c.l.b16 %v2282
        %v2600 = vunpack.c.h.b16 %v2282
        %v2601 = vunpack.c.l.b16 %v2283
        %v2602 = vunpack.c.h.b16 %v2283
        %v2603 = vunpack.c.l.b16 %v2284
        %v2604 = vunpack.c.h.b16 %v2284
        %v2605 = vunpack.c.l.b16 %v2285
        %v2606 = vunpack.c.h.b16 %v2285
        %v2607 = vunpack.c.l.b16 %v2286
        %v2608 = vunpack.c.h.b16 %v2286
        %v2609 = vpack.c.b16 %v2597, %v2593
        %v2610 = vpack.c.b16 %v2598, %v2594
        %v2611 = vpack.c.b16 %v2599, %v2595
        %v2612 = vpack.c.b16 %v2600, %v2596
        %v2613 = vpack.c.b16 %v2605, %v2601
        %v2614 = vpack.c.b16 %v2606, %v2602
        %v2615 = vpack.c.b16 %v2607, %v2603
        %v2616 = vpack.c.b16 %v2608, %v2604
        %2625 = vmatprep.subr.bf16.mxu0 0
        %2626 = vmatpush1.bf16.xpose.msra.mxu0 0
        %2627 = vmatprep.subr.bf16.mxu0 0
        %2628 = vmatpush1.bf16.xpose.msra.mxu0 0
        %2629 = vmatprep.subr.bf16.mxu0 0
        %2630 = vmatpush1.bf16.xpose.msra.mxu0 0
        %2631 = vmatprep.subr.bf16.mxu0 0
        %2632 = vmatpush1.bf16.xpose.msra.mxu0 0
        %2633 = vmatprep.subr.bf16.mxu0 0
        %2634 = vmatpush1.bf16.xpose.msra.mxu0 0
        %2635 = vmatprep.subr.bf16.mxu0 0
        %2636 = vmatpush1.bf16.xpose.msra.mxu0 0
        %2637 = vmatprep.subr.bf16.mxu0 %v2614
        %2638 = vmatpush1.bf16.xpose.msra.mxu0 %v2613
        %2639 = vmatprep.subr.bf16.mxu0 %v2610
        %2640 = vmatpush1.bf16.xpose.msra.mxu0 %v2609
        %2641 = vmatprep.subr.bf16.mxu0 0
        %2642 = vmatpush2.bf16.xpose.msra.mxu0 0
        %2643 = vmatprep.subr.bf16.mxu0 0
        %2644 = vmatpush2.bf16.xpose.msra.mxu0 0
        %2645 = vmatprep.subr.bf16.mxu0 0
        %2646 = vmatpush2.bf16.xpose.msra.mxu0 0
        %2647 = vmatprep.subr.bf16.mxu0 0
        %2648 = vmatpush2.bf16.xpose.msra.mxu0 0
        %2649 = vmatprep.subr.bf16.mxu0 0
        %2650 = vmatpush2.bf16.xpose.msra.mxu0 0
        %2651 = vmatprep.subr.bf16.mxu0 0
        %2652 = vmatpush2.bf16.xpose.msra.mxu0 0
        %2653 = vmatprep.subr.bf16.mxu0 0
        %2654 = vmatpush2.bf16.xpose.msra.mxu0 0
        %2655 = vmatprep.subr.bf16.mxu0 0
        %2656 = vmatpush2.bf16.xpose.msra.mxu0 0
        %2657 = vmatprep.mubr.bf16.mxu0 %v2276
        %2658 = vmatmul.mubr.bf16.gmra.mxu0 %v2275
        %v2659 = vpop.f32.mrf.mxu0
        %v2660 = vadd.f32 %v2579, %v2659
        %v2661 = vpop.f32.mrf.mxu0
        %v2662 = vpop.f32.mrf.mxu0
        %v2663 = vadd.f32 %v2582, %v2662
        %v2664 = vpop.f32.mrf.mxu0
        %2665 = vdwg.mxu0
        %2666 = vmatprep.subr.bf16.mxu0 0
        %2667 = vmatpush1.bf16.xpose.msra.mxu0 0
        %2668 = vmatprep.subr.bf16.mxu0 0
        %2669 = vmatpush1.bf16.xpose.msra.mxu0 0
        %2670 = vmatprep.subr.bf16.mxu0 0
        %2671 = vmatpush1.bf16.xpose.msra.mxu0 0
        %2672 = vmatprep.subr.bf16.mxu0 0
        %2673 = vmatpush1.bf16.xpose.msra.mxu0 0
        %2674 = vmatprep.subr.bf16.mxu0 0
        %2675 = vmatpush1.bf16.xpose.msra.mxu0 0
        %2676 = vmatprep.subr.bf16.mxu0 0
        %2677 = vmatpush1.bf16.xpose.msra.mxu0 0
        %2678 = vmatprep.subr.bf16.mxu0 %v2616
        %2679 = vmatpush1.bf16.xpose.msra.mxu0 %v2615
        %2680 = vmatprep.subr.bf16.mxu0 %v2612
        %2681 = vmatpush1.bf16.xpose.msra.mxu0 %v2611
        %2682 = vmatprep.subr.bf16.mxu0 0
        %2683 = vmatpush2.bf16.xpose.msra.mxu0 0
        %2684 = vmatprep.subr.bf16.mxu0 0
        %2685 = vmatpush2.bf16.xpose.msra.mxu0 0
        %2686 = vmatprep.subr.bf16.mxu0 0
        %2687 = vmatpush2.bf16.xpose.msra.mxu0 0
        %2688 = vmatprep.subr.bf16.mxu0 0
        %2689 = vmatpush2.bf16.xpose.msra.mxu0 0
        %2690 = vmatprep.subr.bf16.mxu0 0
        %2691 = vmatpush2.bf16.xpose.msra.mxu0 0
        %2692 = vmatprep.subr.bf16.mxu0 0
        %2693 = vmatpush2.bf16.xpose.msra.mxu0 0
        %2694 = vmatprep.subr.bf16.mxu0 0
        %2695 = vmatpush2.bf16.xpose.msra.mxu0 0
        %2696 = vmatprep.subr.bf16.mxu0 0
        %2697 = vmatpush2.bf16.xpose.msra.mxu0 0
        %2698 = vmatprep.mubr.bf16.mxu0 %v2278
        %2699 = vmatmul.mubr.bf16.gmra.mxu0 %v2277
        %v2700 = vpop.f32.mrf.mxu0
        %v2701 = vadd.f32 %v2660, %v2700
        %v2702 = vpop.f32.mrf.mxu0
        %v2703 = vpop.f32.mrf.mxu0
        %v2704 = vadd.f32 %v2663, %v2703
        %v2705 = vpop.f32.mrf.mxu0
        %2706 = vdwg.mxu0
        %v2707 = vld [vmem:[%s737 + $0x20] sm:$0xff]
        %v2708 = vld [vmem:[%s737 + $0x28] sm:$0xff]
        %v2709 = vld [vmem:[%s737 + $0x60] sm:$0xff]
        %v2710 = vld [vmem:[%s737 + $0x68] sm:$0xff]
        %v2711 = vld [vmem:[%s737 + $0xa0] sm:$0xff]
        %v2712 = vld [vmem:[%s737 + $0xa8] sm:$0xff]
        %v2713 = vld [vmem:[%s737 + $0xe0] sm:$0xff]
        %v2714 = vld [vmem:[%s737 + $0xe8] sm:$0xff]
        %v2715 = vld [vmem:[%s854 + $0x8] sm:$0xf]
        %v2717 = vlaneseq
        %v2718 = vshrl.u32 %v2717, 7
        %v2719 = vsub.s32 0, %v2718
        %v2720 = vrot.slane %v2715, %v2719
        %v2721 = vlaneseq
        %v2722 = vshrl.u32 %v2721, 7
        %v2723 = vsub.s32 1, %v2722
        %v2724 = vrot.slane %v2715, %v2723
        %v2725 = vlaneseq
        %v2726 = vshrl.u32 %v2725, 7
        %v2727 = vsub.s32 2, %v2726
        %v2728 = vrot.slane %v2715, %v2727
        %v2729 = vlaneseq
        %v2730 = vshrl.u32 %v2729, 7
        %v2731 = vsub.s32 3, %v2730
        %v2732 = vrot.slane %v2715, %v2731
        %v2745 = vunpack.c.l.b16 %v2707
        %v2746 = vunpack.c.h.b16 %v2707
        %v2747 = vunpack.c.l.b16 %v2708
        %v2748 = vunpack.c.h.b16 %v2708
        %v2749 = vunpack.c.l.b16 %v2709
        %v2750 = vunpack.c.h.b16 %v2709
        %v2751 = vunpack.c.l.b16 %v2710
        %v2752 = vunpack.c.h.b16 %v2710
        %v2753 = vunpack.c.l.b16 %v2711
        %v2754 = vunpack.c.h.b16 %v2711
        %v2755 = vunpack.c.l.b16 %v2712
        %v2756 = vunpack.c.h.b16 %v2712
        %v2757 = vunpack.c.l.b16 %v2713
        %v2758 = vunpack.c.h.b16 %v2713
        %v2759 = vunpack.c.l.b16 %v2714
        %v2760 = vunpack.c.h.b16 %v2714
        %v2761 = vpack.c.b16 %v2749, %v2745
        %v2762 = vpack.c.b16 %v2750, %v2746
        %v2763 = vpack.c.b16 %v2751, %v2747
        %v2764 = vpack.c.b16 %v2752, %v2748
        %v2765 = vpack.c.b16 %v2757, %v2753
        %v2766 = vpack.c.b16 %v2758, %v2754
        %v2767 = vpack.c.b16 %v2759, %v2755
        %v2768 = vpack.c.b16 %v2760, %v2756
        %2777 = vmatprep.subr.bf16.mxu0 0
        %2778 = vmatpush1.bf16.msra.mxu0 0
        %2779 = vmatprep.subr.bf16.mxu0 0
        %2780 = vmatpush1.bf16.msra.mxu0 0
        %2781 = vmatprep.subr.bf16.mxu0 0
        %2782 = vmatpush1.bf16.msra.mxu0 0
        %2783 = vmatprep.subr.bf16.mxu0 0
        %2784 = vmatpush1.bf16.msra.mxu0 0
        %2785 = vmatprep.subr.bf16.mxu0 0
        %2786 = vmatpush1.bf16.msra.mxu0 0
        %2787 = vmatprep.subr.bf16.mxu0 0
        %2788 = vmatpush1.bf16.msra.mxu0 0
        %2789 = vmatprep.subr.bf16.mxu0 %v2766
        %2790 = vmatpush1.bf16.msra.mxu0 %v2765
        %2791 = vmatprep.subr.bf16.mxu0 %v2762
        %2792 = vmatpush1.bf16.msra.mxu0 %v2761
        %2793 = vmatprep.subr.bf16.mxu0 0
        %2794 = vmatpush2.bf16.msra.mxu0 0
        %2795 = vmatprep.subr.bf16.mxu0 0
        %2796 = vmatpush2.bf16.msra.mxu0 0
        %2797 = vmatprep.subr.bf16.mxu0 0
        %2798 = vmatpush2.bf16.msra.mxu0 0
        %2799 = vmatprep.subr.bf16.mxu0 0
        %2800 = vmatpush2.bf16.msra.mxu0 0
        %2801 = vmatprep.subr.bf16.mxu0 0
        %2802 = vmatpush2.bf16.msra.mxu0 0
        %2803 = vmatprep.subr.bf16.mxu0 0
        %2804 = vmatpush2.bf16.msra.mxu0 0
        %2805 = vmatprep.subr.bf16.mxu0 0
        %2806 = vmatpush2.bf16.msra.mxu0 0
        %2807 = vmatprep.subr.bf16.mxu0 0
        %2808 = vmatpush2.bf16.msra.mxu0 0
        %2809 = vmatprep.mubr.bf16.mxu0 0
        %2810 = vmatmul.mubr.bf16.gmra.mxu0 %v2179
        %v2811 = vpop.f32.mrf.mxu0
        %v2812 = vadd.f32 %v2720, %v2811
        %v2813 = vpop.f32.mrf.mxu0
        %v2814 = vadd.f32 %v2724, %v2813
        %v2815 = vpop.f32.mrf.mxu0
        %v2816 = vadd.f32 %v2720, %v2815
        %v2817 = vpop.f32.mrf.mxu0
        %v2818 = vadd.f32 %v2724, %v2817
        %2819 = vdwg.mxu0
        %2820 = vmatprep.subr.bf16.mxu0 0
        %2821 = vmatpush1.bf16.msra.mxu0 0
        %2822 = vmatprep.subr.bf16.mxu0 0
        %2823 = vmatpush1.bf16.msra.mxu0 0
        %2824 = vmatprep.subr.bf16.mxu0 0
        %2825 = vmatpush1.bf16.msra.mxu0 0
        %2826 = vmatprep.subr.bf16.mxu0 0
        %2827 = vmatpush1.bf16.msra.mxu0 0
        %2828 = vmatprep.subr.bf16.mxu0 0
        %2829 = vmatpush1.bf16.msra.mxu0 0
        %2830 = vmatprep.subr.bf16.mxu0 0
        %2831 = vmatpush1.bf16.msra.mxu0 0
        %2832 = vmatprep.subr.bf16.mxu0 %v2768
        %2833 = vmatpush1.bf16.msra.mxu0 %v2767
        %2834 = vmatprep.subr.bf16.mxu0 %v2764
        %2835 = vmatpush1.bf16.msra.mxu0 %v2763
        %2836 = vmatprep.subr.bf16.mxu0 0
        %2837 = vmatpush2.bf16.msra.mxu0 0
        %2838 = vmatprep.subr.bf16.mxu0 0
        %2839 = vmatpush2.bf16.msra.mxu0 0
        %2840 = vmatprep.subr.bf16.mxu0 0
        %2841 = vmatpush2.bf16.msra.mxu0 0
        %2842 = vmatprep.subr.bf16.mxu0 0
        %2843 = vmatpush2.bf16.msra.mxu0 0
        %2844 = vmatprep.subr.bf16.mxu0 0
        %2845 = vmatpush2.bf16.msra.mxu0 0
        %2846 = vmatprep.subr.bf16.mxu0 0
        %2847 = vmatpush2.bf16.msra.mxu0 0
        %2848 = vmatprep.subr.bf16.mxu0 0
        %2849 = vmatpush2.bf16.msra.mxu0 0
        %2850 = vmatprep.subr.bf16.mxu0 0
        %2851 = vmatpush2.bf16.msra.mxu0 0
        %2852 = vmatprep.mubr.bf16.mxu0 0
        %2853 = vmatmul.mubr.bf16.gmra.mxu0 %v2179
        %v2854 = vpop.f32.mrf.mxu0
        %v2855 = vadd.f32 %v2728, %v2854
        %v2856 = vpop.f32.mrf.mxu0
        %v2857 = vadd.f32 %v2732, %v2856
        %v2858 = vpop.f32.mrf.mxu0
        %v2859 = vadd.f32 %v2728, %v2858
        %v2860 = vpop.f32.mrf.mxu0
        %v2861 = vadd.f32 %v2732, %v2860
        %2862 = vdwg.mxu0
        %v2863 = vmax.f32 %v2812, 0.0
        %v2864 = vmax.f32 %v2814, 0.0
        %v2865 = vmax.f32 %v2855, 0.0
        %v2866 = vmax.f32 %v2857, 0.0
        %v2867 = vmax.f32 %v2816, 0.0
        %v2868 = vmax.f32 %v2818, 0.0
        %v2869 = vmax.f32 %v2859, 0.0
        %v2870 = vmax.f32 %v2861, 0.0
        %v2871 = vpack.c.bf16 %v2867, %v2863
        %v2872 = vpack.c.bf16 %v2868, %v2864
        %v2873 = vpack.c.bf16 %v2869, %v2865
        %v2874 = vpack.c.bf16 %v2870, %v2866
        %v2875 = vld [vmem:[%s746 + $0x20] sm:$0xff]
        %v2876 = vld [vmem:[%s746 + $0x28] sm:$0xff]
        %v2877 = vld [vmem:[%s746 + $0x60] sm:$0xff]
        %v2878 = vld [vmem:[%s746 + $0x68] sm:$0xff]
        %v2879 = vld [vmem:[%s746 + $0xa0] sm:$0xff]
        %v2880 = vld [vmem:[%s746 + $0xa8] sm:$0xff]
        %v2881 = vld [vmem:[%s746 + $0xe0] sm:$0xff]
        %v2882 = vld [vmem:[%s746 + $0xe8] sm:$0xff]
        %v2891 = vunpack.c.l.b16 %v2875
        %v2892 = vunpack.c.h.b16 %v2875
        %v2893 = vunpack.c.l.b16 %v2876
        %v2894 = vunpack.c.h.b16 %v2876
        %v2895 = vunpack.c.l.b16 %v2877
        %v2896 = vunpack.c.h.b16 %v2877
        %v2897 = vunpack.c.l.b16 %v2878
        %v2898 = vunpack.c.h.b16 %v2878
        %v2899 = vunpack.c.l.b16 %v2879
        %v2900 = vunpack.c.h.b16 %v2879
        %v2901 = vunpack.c.l.b16 %v2880
        %v2902 = vunpack.c.h.b16 %v2880
        %v2903 = vunpack.c.l.b16 %v2881
        %v2904 = vunpack.c.h.b16 %v2881
        %v2905 = vunpack.c.l.b16 %v2882
        %v2906 = vunpack.c.h.b16 %v2882
        %v2907 = vpack.c.b16 %v2895, %v2891
        %v2908 = vpack.c.b16 %v2896, %v2892
        %v2909 = vpack.c.b16 %v2897, %v2893
        %v2910 = vpack.c.b16 %v2898, %v2894
        %v2911 = vpack.c.b16 %v2903, %v2899
        %v2912 = vpack.c.b16 %v2904, %v2900
        %v2913 = vpack.c.b16 %v2905, %v2901
        %v2914 = vpack.c.b16 %v2906, %v2902
        %2923 = vmatprep.subr.bf16.mxu0 0
        %2924 = vmatpush1.bf16.xpose.msra.mxu0 0
        %2925 = vmatprep.subr.bf16.mxu0 0
        %2926 = vmatpush1.bf16.xpose.msra.mxu0 0
        %2927 = vmatprep.subr.bf16.mxu0 0
        %2928 = vmatpush1.bf16.xpose.msra.mxu0 0
        %2929 = vmatprep.subr.bf16.mxu0 0
        %2930 = vmatpush1.bf16.xpose.msra.mxu0 0
        %2931 = vmatprep.subr.bf16.mxu0 0
        %2932 = vmatpush1.bf16.xpose.msra.mxu0 0
        %2933 = vmatprep.subr.bf16.mxu0 0
        %2934 = vmatpush1.bf16.xpose.msra.mxu0 0
        %2935 = vmatprep.subr.bf16.mxu0 %v2912
        %2936 = vmatpush1.bf16.xpose.msra.mxu0 %v2911
        %2937 = vmatprep.subr.bf16.mxu0 %v2908
        %2938 = vmatpush1.bf16.xpose.msra.mxu0 %v2907
        %2939 = vmatprep.subr.bf16.mxu0 0
        %2940 = vmatpush2.bf16.xpose.msra.mxu0 0
        %2941 = vmatprep.subr.bf16.mxu0 0
        %2942 = vmatpush2.bf16.xpose.msra.mxu0 0
        %2943 = vmatprep.subr.bf16.mxu0 0
        %2944 = vmatpush2.bf16.xpose.msra.mxu0 0
        %2945 = vmatprep.subr.bf16.mxu0 0
        %2946 = vmatpush2.bf16.xpose.msra.mxu0 0
        %2947 = vmatprep.subr.bf16.mxu0 0
        %2948 = vmatpush2.bf16.xpose.msra.mxu0 0
        %2949 = vmatprep.subr.bf16.mxu0 0
        %2950 = vmatpush2.bf16.xpose.msra.mxu0 0
        %2951 = vmatprep.subr.bf16.mxu0 0
        %2952 = vmatpush2.bf16.xpose.msra.mxu0 0
        %2953 = vmatprep.subr.bf16.mxu0 0
        %2954 = vmatpush2.bf16.xpose.msra.mxu0 0
        %2955 = vmatprep.mubr.bf16.mxu0 %v2872
        %2956 = vmatmul.mubr.bf16.gmra.mxu0 %v2871
        %v2957 = vpop.f32.mrf.mxu0
        %v2958 = vadd.f32 0.0, %v2957
        %v2959 = vpop.f32.mrf.mxu0
        %v2960 = vpop.f32.mrf.mxu0
        %v2961 = vadd.f32 0.0, %v2960
        %v2962 = vpop.f32.mrf.mxu0
        %2963 = vdwg.mxu0
        %2964 = vmatprep.subr.bf16.mxu0 0
        %2965 = vmatpush1.bf16.xpose.msra.mxu0 0
        %2966 = vmatprep.subr.bf16.mxu0 0
        %2967 = vmatpush1.bf16.xpose.msra.mxu0 0
        %2968 = vmatprep.subr.bf16.mxu0 0
        %2969 = vmatpush1.bf16.xpose.msra.mxu0 0
        %2970 = vmatprep.subr.bf16.mxu0 0
        %2971 = vmatpush1.bf16.xpose.msra.mxu0 0
        %2972 = vmatprep.subr.bf16.mxu0 0
        %2973 = vmatpush1.bf16.xpose.msra.mxu0 0
        %2974 = vmatprep.subr.bf16.mxu0 0
        %2975 = vmatpush1.bf16.xpose.msra.mxu0 0
        %2976 = vmatprep.subr.bf16.mxu0 %v2914
        %2977 = vmatpush1.bf16.xpose.msra.mxu0 %v2913
        %2978 = vmatprep.subr.bf16.mxu0 %v2910
        %2979 = vmatpush1.bf16.xpose.msra.mxu0 %v2909
        %2980 = vmatprep.subr.bf16.mxu0 0
        %2981 = vmatpush2.bf16.xpose.msra.mxu0 0
        %2982 = vmatprep.subr.bf16.mxu0 0
        %2983 = vmatpush2.bf16.xpose.msra.mxu0 0
        %2984 = vmatprep.subr.bf16.mxu0 0
        %2985 = vmatpush2.bf16.xpose.msra.mxu0 0
        %2986 = vmatprep.subr.bf16.mxu0 0
        %2987 = vmatpush2.bf16.xpose.msra.mxu0 0
        %2988 = vmatprep.subr.bf16.mxu0 0
        %2989 = vmatpush2.bf16.xpose.msra.mxu0 0
        %2990 = vmatprep.subr.bf16.mxu0 0
        %2991 = vmatpush2.bf16.xpose.msra.mxu0 0
        %2992 = vmatprep.subr.bf16.mxu0 0
        %2993 = vmatpush2.bf16.xpose.msra.mxu0 0
        %2994 = vmatprep.subr.bf16.mxu0 0
        %2995 = vmatpush2.bf16.xpose.msra.mxu0 0
        %2996 = vmatprep.mubr.bf16.mxu0 %v2874
        %2997 = vmatmul.mubr.bf16.gmra.mxu0 %v2873
        %v2998 = vpop.f32.mrf.mxu0
        %v2999 = vadd.f32 %v2958, %v2998
        %v3000 = vpop.f32.mrf.mxu0
        %v3001 = vpop.f32.mrf.mxu0
        %v3002 = vadd.f32 %v2961, %v3001
        %v3003 = vpop.f32.mrf.mxu0
        %3004 = vdwg.mxu0
        %v3005 = vadd.f32 %v2701, %v2999
        %v3006 = vadd.f32 %v2704, %v3002
        %v3007 = vld [vmem:[%s737 + $0x30] sm:$0xff]
        %v3008 = vld [vmem:[%s737 + $0x38] sm:$0xff]
        %v3009 = vld [vmem:[%s737 + $0x70] sm:$0xff]
        %v3010 = vld [vmem:[%s737 + $0x78] sm:$0xff]
        %v3011 = vld [vmem:[%s737 + $0xb0] sm:$0xff]
        %v3012 = vld [vmem:[%s737 + $0xb8] sm:$0xff]
        %v3013 = vld [vmem:[%s737 + $0xf0] sm:$0xff]
        %v3014 = vld [vmem:[%s737 + $0xf8] sm:$0xff]
        %v3015 = vld [vmem:[%s854 + $0xc] sm:$0xf]
        %v3017 = vlaneseq
        %v3018 = vshrl.u32 %v3017, 7
        %v3019 = vsub.s32 0, %v3018
        %v3020 = vrot.slane %v3015, %v3019
        %v3021 = vlaneseq
        %v3022 = vshrl.u32 %v3021, 7
        %v3023 = vsub.s32 1, %v3022
        %v3024 = vrot.slane %v3015, %v3023
        %v3025 = vlaneseq
        %v3026 = vshrl.u32 %v3025, 7
        %v3027 = vsub.s32 2, %v3026
        %v3028 = vrot.slane %v3015, %v3027
        %v3029 = vlaneseq
        %v3030 = vshrl.u32 %v3029, 7
        %v3031 = vsub.s32 3, %v3030
        %v3032 = vrot.slane %v3015, %v3031
        %v3045 = vunpack.c.l.b16 %v3007
        %v3046 = vunpack.c.h.b16 %v3007
        %v3047 = vunpack.c.l.b16 %v3008
        %v3048 = vunpack.c.h.b16 %v3008
        %v3049 = vunpack.c.l.b16 %v3009
        %v3050 = vunpack.c.h.b16 %v3009
        %v3051 = vunpack.c.l.b16 %v3010
        %v3052 = vunpack.c.h.b16 %v3010
        %v3053 = vunpack.c.l.b16 %v3011
        %v3054 = vunpack.c.h.b16 %v3011
        %v3055 = vunpack.c.l.b16 %v3012
        %v3056 = vunpack.c.h.b16 %v3012
        %v3057 = vunpack.c.l.b16 %v3013
        %v3058 = vunpack.c.h.b16 %v3013
        %v3059 = vunpack.c.l.b16 %v3014
        %v3060 = vunpack.c.h.b16 %v3014
        %v3061 = vpack.c.b16 %v3049, %v3045
        %v3062 = vpack.c.b16 %v3050, %v3046
        %v3063 = vpack.c.b16 %v3051, %v3047
        %v3064 = vpack.c.b16 %v3052, %v3048
        %v3065 = vpack.c.b16 %v3057, %v3053
        %v3066 = vpack.c.b16 %v3058, %v3054
        %v3067 = vpack.c.b16 %v3059, %v3055
        %v3068 = vpack.c.b16 %v3060, %v3056
        %3077 = vmatprep.subr.bf16.mxu0 0
        %3078 = vmatpush1.bf16.msra.mxu0 0
        %3079 = vmatprep.subr.bf16.mxu0 0
        %3080 = vmatpush1.bf16.msra.mxu0 0
        %3081 = vmatprep.subr.bf16.mxu0 0
        %3082 = vmatpush1.bf16.msra.mxu0 0
        %3083 = vmatprep.subr.bf16.mxu0 0
        %3084 = vmatpush1.bf16.msra.mxu0 0
        %3085 = vmatprep.subr.bf16.mxu0 0
        %3086 = vmatpush1.bf16.msra.mxu0 0
        %3087 = vmatprep.subr.bf16.mxu0 0
        %3088 = vmatpush1.bf16.msra.mxu0 0
        %3089 = vmatprep.subr.bf16.mxu0 %v3066
        %3090 = vmatpush1.bf16.msra.mxu0 %v3065
        %3091 = vmatprep.subr.bf16.mxu0 %v3062
        %3092 = vmatpush1.bf16.msra.mxu0 %v3061
        %3093 = vmatprep.subr.bf16.mxu0 0
        %3094 = vmatpush2.bf16.msra.mxu0 0
        %3095 = vmatprep.subr.bf16.mxu0 0
        %3096 = vmatpush2.bf16.msra.mxu0 0
        %3097 = vmatprep.subr.bf16.mxu0 0
        %3098 = vmatpush2.bf16.msra.mxu0 0
        %3099 = vmatprep.subr.bf16.mxu0 0
        %3100 = vmatpush2.bf16.msra.mxu0 0
        %3101 = vmatprep.subr.bf16.mxu0 0
        %3102 = vmatpush2.bf16.msra.mxu0 0
        %3103 = vmatprep.subr.bf16.mxu0 0
        %3104 = vmatpush2.bf16.msra.mxu0 0
        %3105 = vmatprep.subr.bf16.mxu0 0
        %3106 = vmatpush2.bf16.msra.mxu0 0
        %3107 = vmatprep.subr.bf16.mxu0 0
        %3108 = vmatpush2.bf16.msra.mxu0 0
        %3109 = vmatprep.mubr.bf16.mxu0 0
        %3110 = vmatmul.mubr.bf16.gmra.mxu0 %v2179
        %v3111 = vpop.f32.mrf.mxu0
        %v3112 = vadd.f32 %v3020, %v3111
        %v3113 = vpop.f32.mrf.mxu0
        %v3114 = vadd.f32 %v3024, %v3113
        %v3115 = vpop.f32.mrf.mxu0
        %v3116 = vadd.f32 %v3020, %v3115
        %v3117 = vpop.f32.mrf.mxu0
        %v3118 = vadd.f32 %v3024, %v3117
        %3119 = vdwg.mxu0
        %3120 = vmatprep.subr.bf16.mxu0 0
        %3121 = vmatpush1.bf16.msra.mxu0 0
        %3122 = vmatprep.subr.bf16.mxu0 0
        %3123 = vmatpush1.bf16.msra.mxu0 0
        %3124 = vmatprep.subr.bf16.mxu0 0
        %3125 = vmatpush1.bf16.msra.mxu0 0
        %3126 = vmatprep.subr.bf16.mxu0 0
        %3127 = vmatpush1.bf16.msra.mxu0 0
        %3128 = vmatprep.subr.bf16.mxu0 0
        %3129 = vmatpush1.bf16.msra.mxu0 0
        %3130 = vmatprep.subr.bf16.mxu0 0
        %3131 = vmatpush1.bf16.msra.mxu0 0
        %3132 = vmatprep.subr.bf16.mxu0 %v3068
        %3133 = vmatpush1.bf16.msra.mxu0 %v3067
        %3134 = vmatprep.subr.bf16.mxu0 %v3064
        %3135 = vmatpush1.bf16.msra.mxu0 %v3063
        %3136 = vmatprep.subr.bf16.mxu0 0
        %3137 = vmatpush2.bf16.msra.mxu0 0
        %3138 = vmatprep.subr.bf16.mxu0 0
        %3139 = vmatpush2.bf16.msra.mxu0 0
        %3140 = vmatprep.subr.bf16.mxu0 0
        %3141 = vmatpush2.bf16.msra.mxu0 0
        %3142 = vmatprep.subr.bf16.mxu0 0
        %3143 = vmatpush2.bf16.msra.mxu0 0
        %3144 = vmatprep.subr.bf16.mxu0 0
        %3145 = vmatpush2.bf16.msra.mxu0 0
        %3146 = vmatprep.subr.bf16.mxu0 0
        %3147 = vmatpush2.bf16.msra.mxu0 0
        %3148 = vmatprep.subr.bf16.mxu0 0
        %3149 = vmatpush2.bf16.msra.mxu0 0
        %3150 = vmatprep.subr.bf16.mxu0 0
        %3151 = vmatpush2.bf16.msra.mxu0 0
        %3152 = vmatprep.mubr.bf16.mxu0 0
        %3153 = vmatmul.mubr.bf16.gmra.mxu0 %v2179
        %v3154 = vpop.f32.mrf.mxu0
        %v3155 = vadd.f32 %v3028, %v3154
        %v3156 = vpop.f32.mrf.mxu0
        %v3157 = vadd.f32 %v3032, %v3156
        %v3158 = vpop.f32.mrf.mxu0
        %v3159 = vadd.f32 %v3028, %v3158
        %v3160 = vpop.f32.mrf.mxu0
        %v3161 = vadd.f32 %v3032, %v3160
        %3162 = vdwg.mxu0
        %v3163 = vmax.f32 %v3112, 0.0
        %v3164 = vmax.f32 %v3114, 0.0
        %v3165 = vmax.f32 %v3155, 0.0
        %v3166 = vmax.f32 %v3157, 0.0
        %v3167 = vmax.f32 %v3116, 0.0
        %v3168 = vmax.f32 %v3118, 0.0
        %v3169 = vmax.f32 %v3159, 0.0
        %v3170 = vmax.f32 %v3161, 0.0
        %v3171 = vpack.c.bf16 %v3167, %v3163
        %v3172 = vpack.c.bf16 %v3168, %v3164
        %v3173 = vpack.c.bf16 %v3169, %v3165
        %v3174 = vpack.c.bf16 %v3170, %v3166
        %v3175 = vld [vmem:[%s746 + $0x30] sm:$0xff]
        %v3176 = vld [vmem:[%s746 + $0x38] sm:$0xff]
        %v3177 = vld [vmem:[%s746 + $0x70] sm:$0xff]
        %v3178 = vld [vmem:[%s746 + $0x78] sm:$0xff]
        %v3179 = vld [vmem:[%s746 + $0xb0] sm:$0xff]
        %v3180 = vld [vmem:[%s746 + $0xb8] sm:$0xff]
        %v3181 = vld [vmem:[%s746 + $0xf0] sm:$0xff]
        %v3182 = vld [vmem:[%s746 + $0xf8] sm:$0xff]
        %v3191 = vunpack.c.l.b16 %v3175
        %v3192 = vunpack.c.h.b16 %v3175
        %v3193 = vunpack.c.l.b16 %v3176
        %v3194 = vunpack.c.h.b16 %v3176
        %v3195 = vunpack.c.l.b16 %v3177
        %v3196 = vunpack.c.h.b16 %v3177
        %v3197 = vunpack.c.l.b16 %v3178
        %v3198 = vunpack.c.h.b16 %v3178
        %v3199 = vunpack.c.l.b16 %v3179
        %v3200 = vunpack.c.h.b16 %v3179
        %v3201 = vunpack.c.l.b16 %v3180
        %v3202 = vunpack.c.h.b16 %v3180
        %v3203 = vunpack.c.l.b16 %v3181
        %v3204 = vunpack.c.h.b16 %v3181
        %v3205 = vunpack.c.l.b16 %v3182
        %v3206 = vunpack.c.h.b16 %v3182
        %v3207 = vpack.c.b16 %v3195, %v3191
        %v3208 = vpack.c.b16 %v3196, %v3192
        %v3209 = vpack.c.b16 %v3197, %v3193
        %v3210 = vpack.c.b16 %v3198, %v3194
        %v3211 = vpack.c.b16 %v3203, %v3199
        %v3212 = vpack.c.b16 %v3204, %v3200
        %v3213 = vpack.c.b16 %v3205, %v3201
        %v3214 = vpack.c.b16 %v3206, %v3202
        %3223 = vmatprep.subr.bf16.mxu0 0
        %3224 = vmatpush1.bf16.xpose.msra.mxu0 0
        %3225 = vmatprep.subr.bf16.mxu0 0
        %3226 = vmatpush1.bf16.xpose.msra.mxu0 0
        %3227 = vmatprep.subr.bf16.mxu0 0
        %3228 = vmatpush1.bf16.xpose.msra.mxu0 0
        %3229 = vmatprep.subr.bf16.mxu0 0
        %3230 = vmatpush1.bf16.xpose.msra.mxu0 0
        %3231 = vmatprep.subr.bf16.mxu0 0
        %3232 = vmatpush1.bf16.xpose.msra.mxu0 0
        %3233 = vmatprep.subr.bf16.mxu0 0
        %3234 = vmatpush1.bf16.xpose.msra.mxu0 0
        %3235 = vmatprep.subr.bf16.mxu0 %v3212
        %3236 = vmatpush1.bf16.xpose.msra.mxu0 %v3211
        %3237 = vmatprep.subr.bf16.mxu0 %v3208
        %3238 = vmatpush1.bf16.xpose.msra.mxu0 %v3207
        %3239 = vmatprep.subr.bf16.mxu0 0
        %3240 = vmatpush2.bf16.xpose.msra.mxu0 0
        %3241 = vmatprep.subr.bf16.mxu0 0
        %3242 = vmatpush2.bf16.xpose.msra.mxu0 0
        %3243 = vmatprep.subr.bf16.mxu0 0
        %3244 = vmatpush2.bf16.xpose.msra.mxu0 0
        %3245 = vmatprep.subr.bf16.mxu0 0
        %3246 = vmatpush2.bf16.xpose.msra.mxu0 0
        %3247 = vmatprep.subr.bf16.mxu0 0
        %3248 = vmatpush2.bf16.xpose.msra.mxu0 0
        %3249 = vmatprep.subr.bf16.mxu0 0
        %3250 = vmatpush2.bf16.xpose.msra.mxu0 0
        %3251 = vmatprep.subr.bf16.mxu0 0
        %3252 = vmatpush2.bf16.xpose.msra.mxu0 0
        %3253 = vmatprep.subr.bf16.mxu0 0
        %3254 = vmatpush2.bf16.xpose.msra.mxu0 0
        %3255 = vmatprep.mubr.bf16.mxu0 %v3172
        %3256 = vmatmul.mubr.bf16.gmra.mxu0 %v3171
        %v3257 = vpop.f32.mrf.mxu0
        %v3258 = vadd.f32 0.0, %v3257
        %v3259 = vpop.f32.mrf.mxu0
        %v3260 = vpop.f32.mrf.mxu0
        %v3261 = vadd.f32 0.0, %v3260
        %v3262 = vpop.f32.mrf.mxu0
        %3263 = vdwg.mxu0
        %3264 = vmatprep.subr.bf16.mxu0 0
        %3265 = vmatpush1.bf16.xpose.msra.mxu0 0
        %3266 = vmatprep.subr.bf16.mxu0 0
        %3267 = vmatpush1.bf16.xpose.msra.mxu0 0
        %3268 = vmatprep.subr.bf16.mxu0 0
        %3269 = vmatpush1.bf16.xpose.msra.mxu0 0
        %3270 = vmatprep.subr.bf16.mxu0 0
        %3271 = vmatpush1.bf16.xpose.msra.mxu0 0
        %3272 = vmatprep.subr.bf16.mxu0 0
        %3273 = vmatpush1.bf16.xpose.msra.mxu0 0
        %3274 = vmatprep.subr.bf16.mxu0 0
        %3275 = vmatpush1.bf16.xpose.msra.mxu0 0
        %3276 = vmatprep.subr.bf16.mxu0 %v3214
        %3277 = vmatpush1.bf16.xpose.msra.mxu0 %v3213
        %3278 = vmatprep.subr.bf16.mxu0 %v3210
        %3279 = vmatpush1.bf16.xpose.msra.mxu0 %v3209
        %3280 = vmatprep.subr.bf16.mxu0 0
        %3281 = vmatpush2.bf16.xpose.msra.mxu0 0
        %3282 = vmatprep.subr.bf16.mxu0 0
        %3283 = vmatpush2.bf16.xpose.msra.mxu0 0
        %3284 = vmatprep.subr.bf16.mxu0 0
        %3285 = vmatpush2.bf16.xpose.msra.mxu0 0
        %3286 = vmatprep.subr.bf16.mxu0 0
        %3287 = vmatpush2.bf16.xpose.msra.mxu0 0
        %3288 = vmatprep.subr.bf16.mxu0 0
        %3289 = vmatpush2.bf16.xpose.msra.mxu0 0
        %3290 = vmatprep.subr.bf16.mxu0 0
        %3291 = vmatpush2.bf16.xpose.msra.mxu0 0
        %3292 = vmatprep.subr.bf16.mxu0 0
        %3293 = vmatpush2.bf16.xpose.msra.mxu0 0
        %3294 = vmatprep.subr.bf16.mxu0 0
        %3295 = vmatpush2.bf16.xpose.msra.mxu0 0
        %3296 = vmatprep.mubr.bf16.mxu0 %v3174
        %3297 = vmatmul.mubr.bf16.gmra.mxu0 %v3173
        %v3298 = vpop.f32.mrf.mxu0
        %v3299 = vadd.f32 %v3258, %v3298
        %v3300 = vpop.f32.mrf.mxu0
        %v3301 = vpop.f32.mrf.mxu0
        %v3302 = vadd.f32 %v3261, %v3301
        %v3303 = vpop.f32.mrf.mxu0
        %3304 = vdwg.mxu0
        %v3305 = vadd.f32 %v3005, %v3299
        %v3306 = vadd.f32 %v3006, %v3302
        %v3307 = vld [vmem:[%s857] sm:$0x1]
        %v3309 = vlaneseq
        %v3310 = vshrl.u32 %v3309, 7
        %v3311 = vsub.s32 0, %v3310
        %v3312 = vrot.slane %v3307, %v3311
        %v3314 = vadd.f32 %v3305, %v3312
        %v3315 = vadd.f32 %v3306, %v3312
        %v3316 = vadd.f32 %v2105, %v3314
        %v3317 = vadd.f32 %v2106, %v3315
        %v3318 = vsel %vm1018, %v3316, 0.0
        %3319 = vadd.xlane.f32.xlu0 %v3318
        %v3320 = vpop.xlane.xlu0 %3319
        %v3321 = vsel %vm1018, %v3317, 0.0
        %3322 = vadd.xlane.f32.xlu0 %v3321
        %v3323 = vpop.xlane.xlu0 %3322
        %v3324 = vmul.f32 %v3320, %v2068
        %v3325 = vmul.f32 %v3323, %v2068
        %v3326 = vsub.f32 %v3316, %v3324
        %v3327 = vsub.f32 %v3317, %v3325
        %v3328 = vmul.f32 %v3326, %v3326
        %v3329 = vmul.f32 %v3327, %v3327
        %v3330 = vsel %vm1018, %v3328, 0.0
        %3331 = vadd.xlane.f32.xlu0 %v3330
        %v3332 = vpop.xlane.xlu0 %3331
        %v3333 = vsel %vm1018, %v3329, 0.0
        %3334 = vadd.xlane.f32.xlu0 %v3333
        %v3335 = vpop.xlane.xlu0 %3334
        %v3336 = vmul.f32 %v3332, %v2068
        %v3337 = vmul.f32 %v3335, %v2068
        %v3338 = vadd.f32 %v3336, 1e-05
        %v3339 = vadd.f32 %v3337, 1e-05
        %v3340 = vrsqrt.pop %v3338
        %v3341 = vrsqrt.pop %v3339
        %v3342 = vmul.f32 %v3326, %v3340
        %v3343 = vmul.f32 %v3327, %v3341
        %v3344 = vld [vmem:[%s866] sm:$0x1]
        %v3346 = vlaneseq
        %v3347 = vshrl.u32 %v3346, 7
        %v3348 = vsub.s32 0, %v3347
        %v3349 = vrot.slane %v3344, %v3348
        %v3351 = vmul.f32 %v3342, %v3349
        %v3352 = vmul.f32 %v3343, %v3349
        %v3353 = vld [vmem:[%s869] sm:$0x1]
        %v3355 = vlaneseq
        %v3356 = vshrl.u32 %v3355, 7
        %v3357 = vsub.s32 0, %v3356
        %v3358 = vrot.slane %v3353, %v3357
        %v3360 = vadd.f32 %v3351, %v3358
        %v3361 = vadd.f32 %v3352, %v3358
        %3362 = vst.msk [vmem:[#allocation2] sm:$0xff] %vm1018, %v3360
        %3363 = vst.msk [vmem:[#allocation2 + $0x8] sm:$0xff] %vm1018, %v3361
        %p3364 = scmp.eq.s32.totalorder %s40, 1
        // Predicated region
        $region125: #{transformer_encoder_forward.1} parent=95 // pred_check
          %p3365 = pneg %p3364
        $region126: #{transformer_encoder_forward.1} parent=95 // pred_check_branch
          %3367 = sbr.rel (%p3365) target = $region128
        $region127: #{transformer_encoder_forward.1} parent=95 // pred_region
          %v3368 = vld [vmem:[#allocation8] sm:$0x3]
          %v3370 = vsel %vm1294, %v3368, 0
          %3372 = vmatprep.subr.mxu0 0.0
          %3373 = vmatpush1.msra.mxu0 0.0
          %3374 = vmatprep.subr.mxu0 0.0
          %3375 = vmatpush1.msra.mxu0 0.0
          %3376 = vmatprep.subr.mxu0 0.0
          %3377 = vmatpush1.msra.mxu0 0.0
          %3378 = vmatprep.subr.mxu0 0.0
          %3379 = vmatpush1.msra.mxu0 0.0
          %3380 = vmatprep.subr.mxu0 0.0
          %3381 = vmatpush1.msra.mxu0 0.0
          %3382 = vmatprep.subr.mxu0 0.0
          %3383 = vmatpush1.msra.mxu0 0.0
          %3384 = vmatprep.subr.mxu0 0.0
          %3385 = vmatpush1.msra.mxu0 0.0
          %3386 = vmatprep.subr.mxu0 0.0
          %3387 = vmatpush1.msra.mxu0 0.0
          %3388 = vmatprep.subr.mxu0 0.0
          %3389 = vmatpush1.msra.mxu0 0.0
          %3390 = vmatprep.subr.mxu0 0.0
          %3391 = vmatpush1.msra.mxu0 0.0
          %3392 = vmatprep.subr.mxu0 0.0
          %3393 = vmatpush1.msra.mxu0 0.0
          %3394 = vmatprep.subr.mxu0 0.0
          %3395 = vmatpush1.msra.mxu0 0.0
          %3396 = vmatprep.subr.mxu0 0.0
          %3397 = vmatpush1.msra.mxu0 0.0
          %3398 = vmatprep.subr.mxu0 0.0
          %3399 = vmatpush1.msra.mxu0 0.0
          %3400 = vmatprep.subr.mxu0 0.0
          %3401 = vmatpush1.msra.mxu0 %v3361
          %3402 = vmatprep.subr.mxu0 0.0
          %3403 = vmatpush1.msra.mxu0 %v3360
          %3404 = vmatprep.subr.mxu0 0.0
          %3405 = vmatpush2.msra.mxu0 0.0
          %3406 = vmatprep.subr.mxu0 0.0
          %3407 = vmatpush2.msra.mxu0 0.0
          %3408 = vmatprep.subr.mxu0 0.0
          %3409 = vmatpush2.msra.mxu0 0.0
          %3410 = vmatprep.subr.mxu0 0.0
          %3411 = vmatpush2.msra.mxu0 0.0
          %3412 = vmatprep.subr.mxu0 0.0
          %3413 = vmatpush2.msra.mxu0 0.0
          %3414 = vmatprep.subr.mxu0 0.0
          %3415 = vmatpush2.msra.mxu0 0.0
          %3416 = vmatprep.subr.mxu0 0.0
          %3417 = vmatpush2.msra.mxu0 0.0
          %3418 = vmatprep.subr.mxu0 0.0
          %3419 = vmatpush2.msra.mxu0 0.0
          %3420 = vmatprep.subr.mxu0 0.0
          %3421 = vmatpush2.msra.mxu0 0.0
          %3422 = vmatprep.subr.mxu0 0.0
          %3423 = vmatpush2.msra.mxu0 0.0
          %3424 = vmatprep.subr.mxu0 0.0
          %3425 = vmatpush2.msra.mxu0 0.0
          %3426 = vmatprep.subr.mxu0 0.0
          %3427 = vmatpush2.msra.mxu0 0.0
          %3428 = vmatprep.subr.mxu0 0.0
          %3429 = vmatpush2.msra.mxu0 0.0
          %3430 = vmatprep.subr.mxu0 0.0
          %3431 = vmatpush2.msra.mxu0 0.0
          %3432 = vmatprep.subr.mxu0 0.0
          %3433 = vmatpush2.msra.mxu0 0.0
          %3434 = vmatprep.subr.mxu0 0.0
          %3435 = vmatpush2.msra.mxu0 0.0
          %3436 = vmatprep.mubr.f32.mxu0 0.0
          %3437 = vmatmul.mubr.f32.gmra.mxu0 %v3370
          %v3438 = vpop.f32.mrf.mxu0
          %v3439 = vadd.f32 0.0, %v3438
          %v3440 = vpop.f32.mrf.mxu0
          %3441 = vdwg.mxu0
          %v3442 = vld [vmem:[%s17] sm:$0xff]
          %v3443 = vld [vmem:[%s17 + $0x8] sm:$0xff]
          %v3444 = vld [vmem:[%s17 + $0x10] sm:$0xff]
          %v3445 = vld [vmem:[%s17 + $0x18] sm:$0xff]
          %v3446 = vld [vmem:[#allocation3] sm:$0x1]
          %v3448 = vlaneseq
          %v3449 = vshrl.u32 %v3448, 7
          %v3450 = vsub.s32 0, %v3449
          %v3451 = vrot.slane %v3446, %v3450
          %v3454 = vsel %vm1018, %v3439, 0
          %3456 = vmatprep.subr.mxu0 0.0
          %3457 = vmatpush1.msra.mxu0 0.0
          %3458 = vmatprep.subr.mxu0 0.0
          %3459 = vmatpush1.msra.mxu0 0.0
          %3460 = vmatprep.subr.mxu0 0.0
          %3461 = vmatpush1.msra.mxu0 0.0
          %3462 = vmatprep.subr.mxu0 0.0
          %3463 = vmatpush1.msra.mxu0 0.0
          %3464 = vmatprep.subr.mxu0 0.0
          %3465 = vmatpush1.msra.mxu0 0.0
          %3466 = vmatprep.subr.mxu0 0.0
          %3467 = vmatpush1.msra.mxu0 0.0
          %3468 = vmatprep.subr.mxu0 0.0
          %3469 = vmatpush1.msra.mxu0 0.0
          %3470 = vmatprep.subr.mxu0 0.0
          %3471 = vmatpush1.msra.mxu0 0.0
          %3472 = vmatprep.subr.mxu0 0.0
          %3473 = vmatpush1.msra.mxu0 0.0
          %3474 = vmatprep.subr.mxu0 0.0
          %3475 = vmatpush1.msra.mxu0 0.0
          %3476 = vmatprep.subr.mxu0 0.0
          %3477 = vmatpush1.msra.mxu0 0.0
          %3478 = vmatprep.subr.mxu0 0.0
          %3479 = vmatpush1.msra.mxu0 0.0
          %3480 = vmatprep.subr.mxu0 0.0
          %3481 = vmatpush1.msra.mxu0 %v3445
          %3482 = vmatprep.subr.mxu0 0.0
          %3483 = vmatpush1.msra.mxu0 %v3444
          %3484 = vmatprep.subr.mxu0 0.0
          %3485 = vmatpush1.msra.mxu0 %v3443
          %3486 = vmatprep.subr.mxu0 0.0
          %3487 = vmatpush1.msra.mxu0 %v3442
          %3488 = vmatprep.subr.mxu0 0.0
          %3489 = vmatpush2.msra.mxu0 0.0
          %3490 = vmatprep.subr.mxu0 0.0
          %3491 = vmatpush2.msra.mxu0 0.0
          %3492 = vmatprep.subr.mxu0 0.0
          %3493 = vmatpush2.msra.mxu0 0.0
          %3494 = vmatprep.subr.mxu0 0.0
          %3495 = vmatpush2.msra.mxu0 0.0
          %3496 = vmatprep.subr.mxu0 0.0
          %3497 = vmatpush2.msra.mxu0 0.0
          %3498 = vmatprep.subr.mxu0 0.0
          %3499 = vmatpush2.msra.mxu0 0.0
          %3500 = vmatprep.subr.mxu0 0.0
          %3501 = vmatpush2.msra.mxu0 0.0
          %3502 = vmatprep.subr.mxu0 0.0
          %3503 = vmatpush2.msra.mxu0 0.0
          %3504 = vmatprep.subr.mxu0 0.0
          %3505 = vmatpush2.msra.mxu0 0.0
          %3506 = vmatprep.subr.mxu0 0.0
          %3507 = vmatpush2.msra.mxu0 0.0
          %3508 = vmatprep.subr.mxu0 0.0
          %3509 = vmatpush2.msra.mxu0 0.0
          %3510 = vmatprep.subr.mxu0 0.0
          %3511 = vmatpush2.msra.mxu0 0.0
          %3512 = vmatprep.subr.mxu0 0.0
          %3513 = vmatpush2.msra.mxu0 0.0
          %3514 = vmatprep.subr.mxu0 0.0
          %3515 = vmatpush2.msra.mxu0 0.0
          %3516 = vmatprep.subr.mxu0 0.0
          %3517 = vmatpush2.msra.mxu0 0.0
          %3518 = vmatprep.subr.mxu0 0.0
          %3519 = vmatpush2.msra.mxu0 0.0
          %3520 = vmatprep.mubr.f32.mxu0 0.0
          %3521 = vmatmul.mubr.f32.gmra.mxu0 %v3454
          %v3522 = vpop.f32.mrf.mxu0
          %v3523 = vadd.f32 %v3451, %v3522
          %v3524 = vpop.f32.mrf.mxu0
          %3525 = vdwg.mxu0
          %vm3526 = vcmask 1024
          %3527 = vst.msk [vmem:[%s19] sm:$0x3] %vm3526, %v3523
        $region128: #{transformer_encoder_forward.1} parent=95 // pred_fallthru
          _
        // Predicated region
        $region129: #{transformer_encoder_forward.1} parent=95 // pred_check
          %p3528 = pneg %p512
        $region130: #{transformer_encoder_forward.1} parent=95 // pred_check_branch
          %3530 = sbr.rel (%p3528) target = $region132
        $region131: #{transformer_encoder_forward.1} parent=95 // pred_region
          _
        $region132: #{transformer_encoder_forward.1} parent=95 // pred_fallthru
          _
        // Predicated region
        $region133: #{transformer_encoder_forward.1} parent=95 // pred_check
          %p3531 = pneg %p512
        $region134: #{transformer_encoder_forward.1} parent=95 // pred_check_branch
          %3533 = sbr.rel (%p3531) target = $region136
        $region135: #{transformer_encoder_forward.1} parent=95 // pred_region
          _
        $region136: #{transformer_encoder_forward.1} parent=95 // pred_fallthru
          _
      $region96: #{transformer_encoder_forward.1} parent=5 // pred_fallthru
        _
      %p3534 = scmp.le.s32.totalorder 2, %s35
      // Predicated region
      $region137: #{transformer_encoder_forward.1} parent=5 // pred_check
        %p3535 = pneg %p3534
      $region138: #{transformer_encoder_forward.1} parent=5 // pred_check_branch
        %3537 = sbr.rel (%p3535) target = $region140
      $region139: #{transformer_encoder_forward.1} parent=5 // pred_region
        %s3538 = ssub.s32 %s35, 2
      $region140: #{transformer_encoder_forward.1} parent=5 // pred_fallthru
        _
    $region6: #{transformer_encoder_forward.1} parent=1 // loop_footer
      %s39 = sadd.s32 1, %s35
    $region7: #{transformer_encoder_forward.1} parent=1 // loop_footer_branch
      %34 = sbr.rel target = $region3
    $region8: #{transformer_encoder_forward.1} parent=1 // loop_exit
      _
    %3539 = vsyncpa [#allocation5], 1
    %s3540 = scalar_lea.sflag [#allocation5], 1
    %3541 = vsyncpa %s3540, 1
    %3542 = vsyncpa [#allocation7], 1
    %3543 = vsyncpa [#allocation10], 1
    %s3544 = scalar_lea.sflag [#allocation10], 1
    %3545 = vsyncpa %s3544, 1
    %3546 = vsyncpa [#allocation13], 1
    %s3547 = scalar_lea.sflag [#allocation13], 1
    %3548 = vsyncpa %s3547, 1

</llo_original>
